<compile_context>
chip_gen: v6e
topology: v6e:2x2x1
jax: 0.10.0
libtpu: 0.0.40
codegen_flags: <defaults>
</compile_context>

<pallas_src>
import jax
import jax.numpy as jnp
from jax.experimental import pallas as pl
from jax.experimental.pallas import tpu as pltpu


def autopad(k, p=None):
    if p is None:
        p = k // 2 if isinstance(k, int) else [x // 2 for x in k]
    return p


def _round_up(a, b):
    return ((a + b - 1) // b) * b


def _silu(y, act):
    if act:
        # sigmoid(y) = 1 / (1 + exp(-y)); approx reciprocal stays on the EUP path.
        return y * pl.reciprocal(1.0 + jnp.exp(-y), approx=True)
    return y


def _tpu_generation():
    try:
        kind = jax.devices()[0].device_kind.lower()
    except Exception:
        return 6
    for g in (7, 6, 5, 4):
        if ("v%d" % g) in kind:
            return g
    return 6


def _vmem_limit_bytes(need, gen):
    cap = (48 << 20) if gen >= 7 else (96 << 20)
    return int(min(cap, max(32 << 20, 2 * need)))


def _pick_cout_tile(C1, C2p, k, gen):
    """Output-channel tile; collapse the jc axis when the whole weight slab is small."""
    if k * k * C1 * C2p * 2 <= (4 << 20):
        return C2p
    if gen <= 5 or C2p % 256 != 0:
        return 128
    return 256


_HALO = 8   # halo rows per tile; requires k - 1 <= _HALO (guarded by the k <= 9 dispatch)


def _conv_s1_implicit_gemm(xp, wmat, bias_pad, *, N, C1, k, th, HB, Wo_p, Wp_pad,
                           tn, n_jc, C2p, act, gen):
    """Stride-1 conv as implicit GEMM: grid (N, row-blocks, c2-blocks), jc innermost."""
    STEP = th // _HALO
    M = th * Wo_p

    def kernel(*refs):
        if k > 1:
            xa_ref, xb_ref, w_ref, b_ref, o_ref, acc_ref = refs
        else:
            xa_ref, w_ref, b_ref, o_ref, acc_ref = refs

        # k*k tap reduction; operands read straight out of their VMEM blocks, single
        # resident f32 accumulator (no window concatenate, no per-tap temporaries).
        for dh in range(k):
            rows_a = th - dh                       # output rows whose tap-dh input is in xa
            for dw in range(k):
                w_tap = w_ref[dh * k + dw]         # (C1, tn) bf16
                lhs = xa_ref[0, dh:dh + rows_a, dw:dw + Wo_p, :].reshape(rows_a * Wo_p, C1)
                t = jnp.dot(lhs, w_tap, preferred_element_type=jnp.float32)
                if dh == 0 and dw == 0:
                    acc_ref[pl.ds(0, rows_a * Wo_p), :] = t      # dh == 0 covers all rows
                else:
                    acc_ref[pl.ds(0, rows_a * Wo_p), :] += t
            if k > 1 and dh > 0:
                # bottom dh output rows take their tap-dh input rows from the halo view.
                for dw in range(k):
                    w_tap = w_ref[dh * k + dw]
                    lhs = xb_ref[0, 0:dh, dw:dw + Wo_p, :].reshape(dh * Wo_p, C1)
                    t = jnp.dot(lhs, w_tap, preferred_element_type=jnp.float32)
                    acc_ref[pl.ds(rows_a * Wo_p, dh * Wo_p), :] += t

        y = _silu(acc_ref[...] + b_ref[...], act)   # BN scale already folded into weights
        o_ref[0] = y.reshape(th, Wo_p, tn).astype(o_ref.dtype)

    # jc is innermost: activation block index is constant across it -> DMA'd once, not n_jc x.
    in_specs = [pl.BlockSpec((1, th, Wp_pad, C1), lambda n, hb, jc: (n, hb, 0, 0))]
    inputs = [xp]
    if k > 1:
        in_specs.append(pl.BlockSpec((1, _HALO, Wp_pad, C1),
                                     lambda n, hb, jc: (n, (hb + 1) * STEP, 0, 0)))
        inputs.append(xp)
    in_specs += [pl.BlockSpec((k * k, C1, tn), lambda n, hb, jc: (0, 0, jc)),
                 pl.BlockSpec((1, tn), lambda n, hb, jc: (0, jc))]
    inputs += [wmat, bias_pad]

    Hp_pad = xp.shape[1]
    Ho_p = HB * th
    flops = 2 * N * Ho_p * Wo_p * C1 * k * k * C2p
    w_bytes = k * k * C1 * C2p * 2
    bytes_accessed = (N * Hp_pad * Wp_pad * C1 * 2                     # activations, once
                      + w_bytes * (N * HB if n_jc > 1 else 1)          # weight re-reads
                      + N * Ho_p * Wo_p * C2p * 2 + C2p * 4)
    need = (2 * th * Wp_pad * C1 * 2
            + (2 * _HALO * Wp_pad * C1 * 2 if k > 1 else 0)
            + 2 * k * k * C1 * tn * 2 + 2 * tn * 4
            + 2 * M * tn * 2 + M * tn * 4)

    return pl.pallas_call(
        kernel,
        out_shape=jax.ShapeDtypeStruct((N, Ho_p, Wo_p, C2p), jnp.bfloat16),
        grid_spec=pltpu.PrefetchScalarGridSpec(
            num_scalar_prefetch=0,
            grid=(N, HB, n_jc),
            in_specs=in_specs,
            out_specs=pl.BlockSpec((1, th, Wo_p, tn),
                                   lambda n, hb, jc: (n, hb, 0, jc)),
            scratch_shapes=[pltpu.VMEM((M, tn), jnp.float32)]),
        compiler_params=pltpu.CompilerParams(
            dimension_semantics=("parallel", "parallel", "arbitrary"),
            vmem_limit_bytes=_vmem_limit_bytes(need, gen)),
        cost_estimate=pl.CostEstimate(flops=flops,
                                      transcendentals=N * Ho_p * Wo_p * C2p,
                                      bytes_accessed=bytes_accessed),
    )(*inputs)


def _im2col_gemm(patches, wmat, bias_pad, *, Mp, Kdim, tn, n_jc, tile_m, C2p, act, gen):
    """Fused GEMM + bias + SiLU over a pre-built im2col matrix (strided / stem convs)."""
    def kernel(p_ref, w_ref, b_ref, o_ref):
        y = jnp.dot(p_ref[...], w_ref[...], preferred_element_type=jnp.float32)
        o_ref[...] = _silu(y + b_ref[...], act).astype(o_ref.dtype)

    need = (2 * tile_m * Kdim * 2 + 2 * Kdim * tn * 2 + 2 * tn * 4
            + 2 * tile_m * tn * 2 + 2 * tile_m * tn * 4)
    return pl.pallas_call(
        kernel,
        out_shape=jax.ShapeDtypeStruct((Mp, C2p), jnp.bfloat16),
        grid_spec=pltpu.PrefetchScalarGridSpec(
            num_scalar_prefetch=0,
            # jc innermost: the k^2-amplified patches tile is read from HBM once per row block.
            grid=(Mp // tile_m, n_jc),
            in_specs=[pl.BlockSpec((tile_m, Kdim), lambda i, jc: (i, 0)),
                      pl.BlockSpec((Kdim, tn), lambda i, jc: (0, jc)),
                      pl.BlockSpec((1, tn), lambda i, jc: (0, jc))],
            out_specs=pl.BlockSpec((tile_m, tn), lambda i, jc: (i, jc))),
        compiler_params=pltpu.CompilerParams(
            dimension_semantics=("parallel", "arbitrary"),
            vmem_limit_bytes=_vmem_limit_bytes(need, gen)),
        cost_estimate=pl.CostEstimate(
            flops=2 * Mp * Kdim * C2p,
            transcendentals=Mp * C2p,
            bytes_accessed=(Mp * Kdim * 2
                            + Kdim * C2p * 2 * (Mp // tile_m if n_jc > 1 else 1)
                            + Mp * C2p * 2 + C2p * 4)),
    )(patches, wmat, bias_pad)


def conv_bn_silu(x, weight, gamma, beta, running_mean, running_var,
                 *, k=1, s=1, p=None, g=1, eps=1e-5, act=True):
    """Equivalent of Conv.forward (eval-mode BN + SiLU), groups=1, bias=False."""
    if g != 1:
        # TODO(synk): grouped conv (g > 1) is not implemented in the Pallas path.
        raise NotImplementedError("grouped conv not supported")
    p = autopad(k, p)
    N, C1, H, W = x.shape
    C2 = weight.shape[0]
    Ho = (H + 2 * p - k) // s + 1
    Wo = (W + 2 * p - k) // s + 1
    gen = _tpu_generation()

    scale = (gamma / jnp.sqrt(running_var + eps)).astype(jnp.float32)
    bias = (beta - running_mean * scale).astype(jnp.float32)
    C2p = _round_up(C2, 128)                        # lane-dense output channels
    bias_pad = jnp.pad(bias, (0, C2p - C2)).reshape(1, C2p)
    wf = weight.astype(jnp.float32) * scale[:, None, None, None]   # fold BN scale

    # Small-C1 stem-style layers run at ~C1/128 lane utilization in the NHWC implicit-GEMM
    # layout; route them (and strided convs) to the im2col GEMM where the lane dim is
    # C1*k*k.  k <= 9 keeps the 8-row halo block valid (k - 1 <= _HALO).
    use_implicit = (s == 1) and (k <= 9) and (k == 1 or C1 >= 8)

    if use_implicit:
        tn = _pick_cout_tile(C1, C2p, k, gen)
        n_jc = C2p // tn
        Wo_p = _round_up(Wo, 8)
        row_target = 512 if gen <= 5 else 1024           # GEMM rows per tile
        acc_cap = (512 << 10) if gen <= 5 else ((1 << 20) if gen >= 7 else (2 << 20))
        rows = min(row_target, max(8 * Wo_p, acc_cap // (4 * tn)))
        th = _round_up(max(1, rows // Wo_p), 8)
        th = max(8, min(th, _round_up(Ho, 8)))
        # keep >= 2 leading parallel steps for dual-TensorCore (v7x) chips
        while th > 8 and N * (-(-Ho // th)) < 2:
            th -= 8
        HB = -(-Ho // th)
        halo = _HALO if k > 1 else 0
        Hp_pad = HB * th + halo                           # only halo rows padded at the bottom
        Wp_pad = Wo_p + k - 1

        xn = jnp.transpose(x, (0, 2, 3, 1))               # NHWC
        xp = jnp.pad(xn, ((0, 0), (p, Hp_pad - H - p),
                          (p, Wp_pad - W - p), (0, 0))).astype(jnp.bfloat16)
        wmat = jnp.transpose(wf, (2, 3, 1, 0)).reshape(k * k, C1, C2)
        wmat = jnp.pad(wmat, ((0, 0), (0, 0), (0, C2p - C2))).astype(jnp.bfloat16)

        out = _conv_s1_implicit_gemm(xp, wmat, bias_pad, N=N, C1=C1, k=k, th=th, HB=HB,
                                     Wo_p=Wo_p, Wp_pad=Wp_pad, tn=tn, n_jc=n_jc,
                                     C2p=C2p, act=act, gen=gen)
        # TODO(synk): keep activations NHWC / C2p-padded between layers to avoid these
        # transposes + slices around every Conv in a full network.
        out = out[:, :Ho, :Wo, :C2]
        return jnp.transpose(out, (0, 3, 1, 2)).astype(x.dtype)

    # -------- im2col + fused GEMM (strided convs & small-C1 stem layers) --------
    # TODO(synk): extend the implicit-GEMM path to stride 2 and retire this HBM im2col.
    Kdim = C1 * k * k
    if Kdim * C2p * 2 <= (4 << 20):
        tn = C2p
    elif gen <= 5 or C2p % 256 != 0:
        tn = 128
    else:
        tn = 256
    n_jc = C2p // tn
    M = N * Ho * Wo
    tile_m = 256 if gen <= 5 else 512
    tile_m = min(tile_m, max(8, _round_up(-(-M // 2), 8)))   # keep >= 2 parallel row blocks
    Mp = _round_up(M, tile_m)

    xpad = jnp.pad(x.astype(jnp.bfloat16), ((0, 0), (0, 0), (p, p), (p, p)))  # bf16 im2col
    cols = [xpad[:, :, dh:dh + s * Ho:s, dw:dw + s * Wo:s]
            for dh in range(k) for dw in range(k)]
    patches = jnp.stack(cols, axis=2)                         # (N, C1, k*k, Ho, Wo)
    patches = patches.transpose(0, 3, 4, 1, 2).reshape(M, Kdim)
    if Mp != M:
        patches = jnp.pad(patches, ((0, Mp - M), (0, 0)))
    wmat = jnp.pad(wf.reshape(C2, Kdim).T, ((0, 0), (0, C2p - C2))).astype(jnp.bfloat16)

    out = _im2col_gemm(patches, wmat, bias_pad, Mp=Mp, Kdim=Kdim, tn=tn, n_jc=n_jc,
                       tile_m=tile_m, C2p=C2p, act=act, gen=gen)
    out = out[:M, :C2].reshape(N, Ho, Wo, C2)
    return jnp.transpose(out, (0, 3, 1, 2)).astype(x.dtype)


def _reference(x, weight, gamma, beta, running_mean, running_var, *, k, s, p=None,
               eps=1e-5):
    """Plain-JAX reference with the same bf16 quantization of inputs / folded weights."""
    p = autopad(k, p)
    scale = gamma / jnp.sqrt(running_var + eps)
    bias = beta - running_mean * scale
    wq = (weight.astype(jnp.float32) * scale[:, None, None, None]
          ).astype(jnp.bfloat16).astype(jnp.float32)
    xq = x.astype(jnp.bfloat16).astype(jnp.float32)
    y = jax.lax.conv_general_dilated(
        xq, wq, window_strides=(s, s), padding=[(p, p), (p, p)],
        dimension_numbers=("NCHW", "OIHW", "NCHW"))
    y = y + bias[None, :, None, None]
    return y * jax.nn.sigmoid(y)


if __name__ == "__main__":
    key = jax.random.PRNGKey(0)
    k_x, k_w, k_g, k_b, k_m, k_v, k_s = jax.random.split(key, 7)

    def make_params(C2, C1, k):
        w = 0.1 * jax.random.normal(k_w, (C2, C1, k, k), dtype=jnp.float32)
        gamma = 1.0 + 0.1 * jax.random.normal(k_g, (C2,), dtype=jnp.float32)
        beta = 0.05 * jax.random.normal(k_b, (C2,), dtype=jnp.float32)
        rm = 0.1 * jax.random.normal(k_m, (C2,), dtype=jnp.float32)
        rv = jnp.abs(jax.random.normal(k_v, (C2,), dtype=jnp.float32)) + 0.5
        return w, gamma, beta, rm, rv

    def check(x, params, k, s, want_shape):
        w, gamma, beta, rm, rv = params
        out = jax.block_until_ready(
            conv_bn_silu(x, w, gamma, beta, rm, rv, k=k, s=s))
        ref = _reference(x, w, gamma, beta, rm, rv, k=k, s=s)
        assert out.shape == want_shape, (out.shape, want_shape)
        err = float(jnp.max(jnp.abs(out - ref)))
        assert err < 5e-2, err

    N, C1, H, W, C2 = 2, 8, 16, 16, 16
    x = jax.random.normal(k_x, (N, C1, H, W), dtype=jnp.float32)

    # 3x3 stride-1 -> implicit-GEMM fast path
    check(x, make_params(C2, C1, 3), 3, 1, (N, C2, H, W))
    # 1x1 stride-1 (most common YOLO Conv) -> fast path, k == 1 branch
    check(x, make_params(C2, C1, 1), 1, 1, (N, C2, H, W))
    # 3x3 stride-2 downsample -> im2col fallback path
    check(x, make_params(C2, C1, 3), 3, 2, (N, C2, 8, 8))
    # 3x3 stride-1 stem (C1 = 3) -> small-C1 routing to the im2col path
    x3 = jax.random.normal(k_s, (N, 3, H, W), dtype=jnp.float32)
    check(x3, make_params(C2, 3, 3), 3, 1, (N, C2, H, W))

    print("KERNEL_OK")
</pallas_src>

<mosaic_0001>
module attributes {stable_mosaic.version = 11 : i64} {
  func.func @kernel(%arg0: i32, %arg1: i32, %arg2: i32, %arg3: memref<1x16x18x8xbf16, #tpu.memory_space<vmem>>, %arg4: memref<1x8x18x8xbf16, #tpu.memory_space<vmem>>, %arg5: memref<9x8x128xbf16, #tpu.memory_space<vmem>>, %arg6: memref<1x128xf32, #tpu.memory_space<vmem>>, %arg7: memref<1x16x16x128xbf16, #tpu.memory_space<vmem>>, %arg8: memref<256x128xf32, #tpu.memory_space<vmem>>) attributes {dimension_semantics = [#tpu.dimension_semantics<parallel>, #tpu.dimension_semantics<parallel>, #tpu.dimension_semantics<arbitrary>], iteration_bounds = array<i64: 2, 1, 1>, scalar_prefetch = 0 : i64, scratch_operands = 1 : i64, tpu.core_type = #tpu.core_type<tc>, window_params = [{transform_indices = @transform_0, window_bounds = array<i64: 1, 16, 18, 8>}, {transform_indices = @transform_1, window_bounds = array<i64: 1, 8, 18, 8>}, {transform_indices = @transform_2, window_bounds = array<i64: 9, 8, 128>}, {transform_indices = @transform_3, window_bounds = array<i64: 1, 128>}, {transform_indices = @transform_4, window_bounds = array<i64: 1, 16, 16, 128>}]} {
    %c0 = arith.constant 0 : index
    %c0_0 = arith.constant 0 : index
    %c0_1 = arith.constant 0 : index
    %0 = vector.load %arg5[%c0, %c0_0, %c0_1] : memref<9x8x128xbf16, #tpu.memory_space<vmem>>, vector<1x8x128xbf16>
    %1 = vector.shape_cast %0 : vector<1x8x128xbf16> to vector<8x128xbf16>
    %c0_2 = arith.constant 0 : index
    %c0_3 = arith.constant 0 : index
    %c0_4 = arith.constant 0 : index
    %c0_5 = arith.constant 0 : index
    %2 = vector.load %arg3[%c0_2, %c0_3, %c0_4, %c0_5] : memref<1x16x18x8xbf16, #tpu.memory_space<vmem>>, vector<1x16x16x8xbf16>
    %3 = vector.shape_cast %2 : vector<1x16x16x8xbf16> to vector<16x16x8xbf16>
    %4 = vector.shape_cast %3 : vector<16x16x8xbf16> to vector<256x8xbf16>
    %cst = arith.constant dense<0.000000e+00> : vector<256x128xf32>
    %5 = tpu.matmul %4, %1, %cst {dimension_numbers = #tpu.dot_dimension_numbers<[1], [0], [0], [1], [0, 0, 1, 1], [], []>} : vector<256x8xbf16>, vector<8x128xbf16>, vector<256x128xf32> -> vector<256x128xf32>
    %c0_6 = arith.constant 0 : index
    %c0_7 = arith.constant 0 : index
    %6 = vector.load %arg8[%c0_6, %c0_7] : memref<256x128xf32, #tpu.memory_space<vmem>>, vector<256x128xf32>
    tpu.vector_store %arg8[%c0_6, %c0_7], %5 {strides = array<i32>} : memref<256x128xf32, #tpu.memory_space<vmem>>, vector<256x128xf32>,
    %c1 = arith.constant 1 : index
    %c0_8 = arith.constant 0 : index
    %c0_9 = arith.constant 0 : index
    %7 = vector.load %arg5[%c1, %c0_8, %c0_9] : memref<9x8x128xbf16, #tpu.memory_space<vmem>>, vector<1x8x128xbf16>
    %8 = vector.shape_cast %7 : vector<1x8x128xbf16> to vector<8x128xbf16>
    %c0_10 = arith.constant 0 : index
    %c0_11 = arith.constant 0 : index
    %c1_12 = arith.constant 1 : index
    %c0_13 = arith.constant 0 : index
    %9 = vector.load %arg3[%c0_10, %c0_11, %c1_12, %c0_13] : memref<1x16x18x8xbf16, #tpu.memory_space<vmem>>, vector<1x16x16x8xbf16>
    %10 = vector.shape_cast %9 : vector<1x16x16x8xbf16> to vector<16x16x8xbf16>
    %11 = vector.shape_cast %10 : vector<16x16x8xbf16> to vector<256x8xbf16>
    %cst_14 = arith.constant dense<0.000000e+00> : vector<256x128xf32>
    %12 = tpu.matmul %11, %8, %cst_14 {dimension_numbers = #tpu.dot_dimension_numbers<[1], [0], [0], [1], [0, 0, 1, 1], [], []>} : vector<256x8xbf16>, vector<8x128xbf16>, vector<256x128xf32> -> vector<256x128xf32>
    %c0_15 = arith.constant 0 : index
    %c0_16 = arith.constant 0 : index
    %13 = vector.load %arg8[%c0_15, %c0_16] : memref<256x128xf32, #tpu.memory_space<vmem>>, vector<256x128xf32>
    %14 = arith.addf %13, %12 : vector<256x128xf32>
    %c0_17 = arith.constant 0 : index
    %c0_18 = arith.constant 0 : index
    %15 = vector.load %arg8[%c0_17, %c0_18] : memref<256x128xf32, #tpu.memory_space<vmem>>, vector<256x128xf32>
    tpu.vector_store %arg8[%c0_17, %c0_18], %14 {strides = array<i32>} : memref<256x128xf32, #tpu.memory_space<vmem>>, vector<256x128xf32>,
    %c2 = arith.constant 2 : index
    %c0_19 = arith.constant 0 : index
    %c0_20 = arith.constant 0 : index
    %16 = vector.load %arg5[%c2, %c0_19, %c0_20] : memref<9x8x128xbf16, #tpu.memory_space<vmem>>, vector<1x8x128xbf16>
    %17 = vector.shape_cast %16 : vector<1x8x128xbf16> to vector<8x128xbf16>
    %c0_21 = arith.constant 0 : index
    %c0_22 = arith.constant 0 : index
    %c2_23 = arith.constant 2 : index
    %c0_24 = arith.constant 0 : index
    %18 = vector.load %arg3[%c0_21, %c0_22, %c2_23, %c0_24] : memref<1x16x18x8xbf16, #tpu.memory_space<vmem>>, vector<1x16x16x8xbf16>
    %19 = vector.shape_cast %18 : vector<1x16x16x8xbf16> to vector<16x16x8xbf16>
    %20 = vector.shape_cast %19 : vector<16x16x8xbf16> to vector<256x8xbf16>
    %cst_25 = arith.constant dense<0.000000e+00> : vector<256x128xf32>
    %21 = tpu.matmul %20, %17, %cst_25 {dimension_numbers = #tpu.dot_dimension_numbers<[1], [0], [0], [1], [0, 0, 1, 1], [], []>} : vector<256x8xbf16>, vector<8x128xbf16>, vector<256x128xf32> -> vector<256x128xf32>
    %c0_26 = arith.constant 0 : index
    %c0_27 = arith.constant 0 : index
    %22 = vector.load %arg8[%c0_26, %c0_27] : memref<256x128xf32, #tpu.memory_space<vmem>>, vector<256x128xf32>
    %23 = arith.addf %22, %21 : vector<256x128xf32>
    %c0_28 = arith.constant 0 : index
    %c0_29 = arith.constant 0 : index
    %24 = vector.load %arg8[%c0_28, %c0_29] : memref<256x128xf32, #tpu.memory_space<vmem>>, vector<256x128xf32>
    tpu.vector_store %arg8[%c0_28, %c0_29], %23 {strides = array<i32>} : memref<256x128xf32, #tpu.memory_space<vmem>>, vector<256x128xf32>,
    %c3 = arith.constant 3 : index
    %c0_30 = arith.constant 0 : index
    %c0_31 = arith.constant 0 : index
    %25 = vector.load %arg5[%c3, %c0_30, %c0_31] : memref<9x8x128xbf16, #tpu.memory_space<vmem>>, vector<1x8x128xbf16>
    %26 = vector.shape_cast %25 : vector<1x8x128xbf16> to vector<8x128xbf16>
    %c0_32 = arith.constant 0 : index
    %c1_33 = arith.constant 1 : index
    %c0_34 = arith.constant 0 : index
    %c0_35 = arith.constant 0 : index
    %27 = vector.load %arg3[%c0_32, %c1_33, %c0_34, %c0_35] : memref<1x16x18x8xbf16, #tpu.memory_space<vmem>>, vector<1x15x16x8xbf16>
    %28 = vector.shape_cast %27 : vector<1x15x16x8xbf16> to vector<15x16x8xbf16>
    %29 = vector.shape_cast %28 : vector<15x16x8xbf16> to vector<240x8xbf16>
    %cst_36 = arith.constant dense<0.000000e+00> : vector<240x128xf32>
    %30 = tpu.matmul %29, %26, %cst_36 {dimension_numbers = #tpu.dot_dimension_numbers<[1], [0], [0], [1], [0, 0, 1, 1], [], []>} : vector<240x8xbf16>, vector<8x128xbf16>, vector<240x128xf32> -> vector<240x128xf32>
    %c0_37 = arith.constant 0 : index
    %c0_38 = arith.constant 0 : index
    %31 = vector.load %arg8[%c0_37, %c0_38] : memref<256x128xf32, #tpu.memory_space<vmem>>, vector<240x128xf32>
    %32 = arith.addf %31, %30 : vector<240x128xf32>
    %c0_39 = arith.constant 0 : index
    %c0_40 = arith.constant 0 : index
    %33 = vector.load %arg8[%c0_39, %c0_40] : memref<256x128xf32, #tpu.memory_space<vmem>>, vector<240x128xf32>
    tpu.vector_store %arg8[%c0_39, %c0_40], %32 {strides = array<i32>} : memref<256x128xf32, #tpu.memory_space<vmem>>, vector<240x128xf32>,
    %c4 = arith.constant 4 : index
    %c0_41 = arith.constant 0 : index
    %c0_42 = arith.constant 0 : index
    %34 = vector.load %arg5[%c4, %c0_41, %c0_42] : memref<9x8x128xbf16, #tpu.memory_space<vmem>>, vector<1x8x128xbf16>
    %35 = vector.shape_cast %34 : vector<1x8x128xbf16> to vector<8x128xbf16>
    %c0_43 = arith.constant 0 : index
    %c1_44 = arith.constant 1 : index
    %c1_45 = arith.constant 1 : index
    %c0_46 = arith.constant 0 : index
    %36 = vector.load %arg3[%c0_43, %c1_44, %c1_45, %c0_46] : memref<1x16x18x8xbf16, #tpu.memory_space<vmem>>, vector<1x15x16x8xbf16>
    %37 = vector.shape_cast %36 : vector<1x15x16x8xbf16> to vector<15x16x8xbf16>
    %38 = vector.shape_cast %37 : vector<15x16x8xbf16> to vector<240x8xbf16>
    %cst_47 = arith.constant dense<0.000000e+00> : vector<240x128xf32>
    %39 = tpu.matmul %38, %35, %cst_47 {dimension_numbers = #tpu.dot_dimension_numbers<[1], [0], [0], [1], [0, 0, 1, 1], [], []>} : vector<240x8xbf16>, vector<8x128xbf16>, vector<240x128xf32> -> vector<240x128xf32>
    %c0_48 = arith.constant 0 : index
    %c0_49 = arith.constant 0 : index
    %40 = vector.load %arg8[%c0_48, %c0_49] : memref<256x128xf32, #tpu.memory_space<vmem>>, vector<240x128xf32>
    %41 = arith.addf %40, %39 : vector<240x128xf32>
    %c0_50 = arith.constant 0 : index
    %c0_51 = arith.constant 0 : index
    %42 = vector.load %arg8[%c0_50, %c0_51] : memref<256x128xf32, #tpu.memory_space<vmem>>, vector<240x128xf32>
    tpu.vector_store %arg8[%c0_50, %c0_51], %41 {strides = array<i32>} : memref<256x128xf32, #tpu.memory_space<vmem>>, vector<240x128xf32>,
    %c5 = arith.constant 5 : index
    %c0_52 = arith.constant 0 : index
    %c0_53 = arith.constant 0 : index
    %43 = vector.load %arg5[%c5, %c0_52, %c0_53] : memref<9x8x128xbf16, #tpu.memory_space<vmem>>, vector<1x8x128xbf16>
    %44 = vector.shape_cast %43 : vector<1x8x128xbf16> to vector<8x128xbf16>
    %c0_54 = arith.constant 0 : index
    %c1_55 = arith.constant 1 : index
    %c2_56 = arith.constant 2 : index
    %c0_57 = arith.constant 0 : index
    %45 = vector.load %arg3[%c0_54, %c1_55, %c2_56, %c0_57] : memref<1x16x18x8xbf16, #tpu.memory_space<vmem>>, vector<1x15x16x8xbf16>
    %46 = vector.shape_cast %45 : vector<1x15x16x8xbf16> to vector<15x16x8xbf16>
    %47 = vector.shape_cast %46 : vector<15x16x8xbf16> to vector<240x8xbf16>
    %cst_58 = arith.constant dense<0.000000e+00> : vector<240x128xf32>
    %48 = tpu.matmul %47, %44, %cst_58 {dimension_numbers = #tpu.dot_dimension_numbers<[1], [0], [0], [1], [0, 0, 1, 1], [], []>} : vector<240x8xbf16>, vector<8x128xbf16>, vector<240x128xf32> -> vector<240x128xf32>
    %c0_59 = arith.constant 0 : index
    %c0_60 = arith.constant 0 : index
    %49 = vector.load %arg8[%c0_59, %c0_60] : memref<256x128xf32, #tpu.memory_space<vmem>>, vector<240x128xf32>
    %50 = arith.addf %49, %48 : vector<240x128xf32>
    %c0_61 = arith.constant 0 : index
    %c0_62 = arith.constant 0 : index
    %51 = vector.load %arg8[%c0_61, %c0_62] : memref<256x128xf32, #tpu.memory_space<vmem>>, vector<240x128xf32>
    tpu.vector_store %arg8[%c0_61, %c0_62], %50 {strides = array<i32>} : memref<256x128xf32, #tpu.memory_space<vmem>>, vector<240x128xf32>,
    %c3_63 = arith.constant 3 : index
    %c0_64 = arith.constant 0 : index
    %c0_65 = arith.constant 0 : index
    %52 = vector.load %arg5[%c3_63, %c0_64, %c0_65] : memref<9x8x128xbf16, #tpu.memory_space<vmem>>, vector<1x8x128xbf16>
    %53 = vector.shape_cast %52 : vector<1x8x128xbf16> to vector<8x128xbf16>
    %c0_66 = arith.constant 0 : index
    %c0_67 = arith.constant 0 : index
    %c0_68 = arith.constant 0 : index
    %c0_69 = arith.constant 0 : index
    %54 = vector.load %arg4[%c0_66, %c0_67, %c0_68, %c0_69] : memref<1x8x18x8xbf16, #tpu.memory_space<vmem>>, vector<1x1x16x8xbf16>
    %55 = vector.shape_cast %54 : vector<1x1x16x8xbf16> to vector<1x16x8xbf16>
    %56 = vector.shape_cast %55 : vector<1x16x8xbf16> to vector<16x8xbf16>
    %cst_70 = arith.constant dense<0.000000e+00> : vector<16x128xf32>
    %57 = tpu.matmul %56, %53, %cst_70 {dimension_numbers = #tpu.dot_dimension_numbers<[1], [0], [0], [1], [0, 0, 1, 1], [], []>} : vector<16x8xbf16>, vector<8x128xbf16>, vector<16x128xf32> -> vector<16x128xf32>
    %c240 = arith.constant 240 : index
    %c0_71 = arith.constant 0 : index
    %58 = vector.load %arg8[%c240, %c0_71] : memref<256x128xf32, #tpu.memory_space<vmem>>, vector<16x128xf32>
    %59 = arith.addf %58, %57 : vector<16x128xf32>
    %c240_72 = arith.constant 240 : index
    %c0_73 = arith.constant 0 : index
    %60 = vector.load %arg8[%c240_72, %c0_73] : memref<256x128xf32, #tpu.memory_space<vmem>>, vector<16x128xf32>
    tpu.vector_store %arg8[%c240_72, %c0_73], %59 {strides = array<i32>} : memref<256x128xf32, #tpu.memory_space<vmem>>, vector<16x128xf32>,
    %c4_74 = arith.constant 4 : index
    %c0_75 = arith.constant 0 : index
    %c0_76 = arith.constant 0 : index
    %61 = vector.load %arg5[%c4_74, %c0_75, %c0_76] : memref<9x8x128xbf16, #tpu.memory_space<vmem>>, vector<1x8x128xbf16>
    %62 = vector.shape_cast %61 : vector<1x8x128xbf16> to vector<8x128xbf16>
    %c0_77 = arith.constant 0 : index
    %c0_78 = arith.constant 0 : index
    %c1_79 = arith.constant 1 : index
    %c0_80 = arith.constant 0 : index
    %63 = vector.load %arg4[%c0_77, %c0_78, %c1_79, %c0_80] : memref<1x8x18x8xbf16, #tpu.memory_space<vmem>>, vector<1x1x16x8xbf16>
    %64 = vector.shape_cast %63 : vector<1x1x16x8xbf16> to vector<1x16x8xbf16>
    %65 = vector.shape_cast %64 : vector<1x16x8xbf16> to vector<16x8xbf16>
    %cst_81 = arith.constant dense<0.000000e+00> : vector<16x128xf32>
    %66 = tpu.matmul %65, %62, %cst_81 {dimension_numbers = #tpu.dot_dimension_numbers<[1], [0], [0], [1], [0, 0, 1, 1], [], []>} : vector<16x8xbf16>, vector<8x128xbf16>, vector<16x128xf32> -> vector<16x128xf32>
    %c240_82 = arith.constant 240 : index
    %c0_83 = arith.constant 0 : index
    %67 = vector.load %arg8[%c240_82, %c0_83] : memref<256x128xf32, #tpu.memory_space<vmem>>, vector<16x128xf32>
    %68 = arith.addf %67, %66 : vector<16x128xf32>
    %c240_84 = arith.constant 240 : index
    %c0_85 = arith.constant 0 : index
    %69 = vector.load %arg8[%c240_84, %c0_85] : memref<256x128xf32, #tpu.memory_space<vmem>>, vector<16x128xf32>
    tpu.vector_store %arg8[%c240_84, %c0_85], %68 {strides = array<i32>} : memref<256x128xf32, #tpu.memory_space<vmem>>, vector<16x128xf32>,
    %c5_86 = arith.constant 5 : index
    %c0_87 = arith.constant 0 : index
    %c0_88 = arith.constant 0 : index
    %70 = vector.load %arg5[%c5_86, %c0_87, %c0_88] : memref<9x8x128xbf16, #tpu.memory_space<vmem>>, vector<1x8x128xbf16>
    %71 = vector.shape_cast %70 : vector<1x8x128xbf16> to vector<8x128xbf16>
    %c0_89 = arith.constant 0 : index
    %c0_90 = arith.constant 0 : index
    %c2_91 = arith.constant 2 : index
    %c0_92 = arith.constant 0 : index
    %72 = vector.load %arg4[%c0_89, %c0_90, %c2_91, %c0_92] : memref<1x8x18x8xbf16, #tpu.memory_space<vmem>>, vector<1x1x16x8xbf16>
    %73 = vector.shape_cast %72 : vector<1x1x16x8xbf16> to vector<1x16x8xbf16>
    %74 = vector.shape_cast %73 : vector<1x16x8xbf16> to vector<16x8xbf16>
    %cst_93 = arith.constant dense<0.000000e+00> : vector<16x128xf32>
    %75 = tpu.matmul %74, %71, %cst_93 {dimension_numbers = #tpu.dot_dimension_numbers<[1], [0], [0], [1], [0, 0, 1, 1], [], []>} : vector<16x8xbf16>, vector<8x128xbf16>, vector<16x128xf32> -> vector<16x128xf32>
    %c240_94 = arith.constant 240 : index
    %c0_95 = arith.constant 0 : index
    %76 = vector.load %arg8[%c240_94, %c0_95] : memref<256x128xf32, #tpu.memory_space<vmem>>, vector<16x128xf32>
    %77 = arith.addf %76, %75 : vector<16x128xf32>
    %c240_96 = arith.constant 240 : index
    %c0_97 = arith.constant 0 : index
    %78 = vector.load %arg8[%c240_96, %c0_97] : memref<256x128xf32, #tpu.memory_space<vmem>>, vector<16x128xf32>
    tpu.vector_store %arg8[%c240_96, %c0_97], %77 {strides = array<i32>} : memref<256x128xf32, #tpu.memory_space<vmem>>, vector<16x128xf32>,
    %c6 = arith.constant 6 : index
    %c0_98 = arith.constant 0 : index
    %c0_99 = arith.constant 0 : index
    %79 = vector.load %arg5[%c6, %c0_98, %c0_99] : memref<9x8x128xbf16, #tpu.memory_space<vmem>>, vector<1x8x128xbf16>
    %80 = vector.shape_cast %79 : vector<1x8x128xbf16> to vector<8x128xbf16>
    %c0_100 = arith.constant 0 : index
    %c2_101 = arith.constant 2 : index
    %c0_102 = arith.constant 0 : index
    %c0_103 = arith.constant 0 : index
    %81 = vector.load %arg3[%c0_100, %c2_101, %c0_102, %c0_103] : memref<1x16x18x8xbf16, #tpu.memory_space<vmem>>, vector<1x14x16x8xbf16>
    %82 = vector.shape_cast %81 : vector<1x14x16x8xbf16> to vector<14x16x8xbf16>
    %83 = vector.shape_cast %82 : vector<14x16x8xbf16> to vector<224x8xbf16>
    %cst_104 = arith.constant dense<0.000000e+00> : vector<224x128xf32>
    %84 = tpu.matmul %83, %80, %cst_104 {dimension_numbers = #tpu.dot_dimension_numbers<[1], [0], [0], [1], [0, 0, 1, 1], [], []>} : vector<224x8xbf16>, vector<8x128xbf16>, vector<224x128xf32> -> vector<224x128xf32>
    %c0_105 = arith.constant 0 : index
    %c0_106 = arith.constant 0 : index
    %85 = vector.load %arg8[%c0_105, %c0_106] : memref<256x128xf32, #tpu.memory_space<vmem>>, vector<224x128xf32>
    %86 = arith.addf %85, %84 : vector<224x128xf32>
    %c0_107 = arith.constant 0 : index
    %c0_108 = arith.constant 0 : index
    %87 = vector.load %arg8[%c0_107, %c0_108] : memref<256x128xf32, #tpu.memory_space<vmem>>, vector<224x128xf32>
    tpu.vector_store %arg8[%c0_107, %c0_108], %86 {strides = array<i32>} : memref<256x128xf32, #tpu.memory_space<vmem>>, vector<224x128xf32>,
    %c7 = arith.constant 7 : index
    %c0_109 = arith.constant 0 : index
    %c0_110 = arith.constant 0 : index
    %88 = vector.load %arg5[%c7, %c0_109, %c0_110] : memref<9x8x128xbf16, #tpu.memory_space<vmem>>, vector<1x8x128xbf16>
    %89 = vector.shape_cast %88 : vector<1x8x128xbf16> to vector<8x128xbf16>
    %c0_111 = arith.constant 0 : index
    %c2_112 = arith.constant 2 : index
    %c1_113 = arith.constant 1 : index
    %c0_114 = arith.constant 0 : index
    %90 = vector.load %arg3[%c0_111, %c2_112, %c1_113, %c0_114] : memref<1x16x18x8xbf16, #tpu.memory_space<vmem>>, vector<1x14x16x8xbf16>
    %91 = vector.shape_cast %90 : vector<1x14x16x8xbf16> to vector<14x16x8xbf16>
    %92 = vector.shape_cast %91 : vector<14x16x8xbf16> to vector<224x8xbf16>
    %cst_115 = arith.constant dense<0.000000e+00> : vector<224x128xf32>
    %93 = tpu.matmul %92, %89, %cst_115 {dimension_numbers = #tpu.dot_dimension_numbers<[1], [0], [0], [1], [0, 0, 1, 1], [], []>} : vector<224x8xbf16>, vector<8x128xbf16>, vector<224x128xf32> -> vector<224x128xf32>
    %c0_116 = arith.constant 0 : index
    %c0_117 = arith.constant 0 : index
    %94 = vector.load %arg8[%c0_116, %c0_117] : memref<256x128xf32, #tpu.memory_space<vmem>>, vector<224x128xf32>
    %95 = arith.addf %94, %93 : vector<224x128xf32>
    %c0_118 = arith.constant 0 : index
    %c0_119 = arith.constant 0 : index
    %96 = vector.load %arg8[%c0_118, %c0_119] : memref<256x128xf32, #tpu.memory_space<vmem>>, vector<224x128xf32>
    tpu.vector_store %arg8[%c0_118, %c0_119], %95 {strides = array<i32>} : memref<256x128xf32, #tpu.memory_space<vmem>>, vector<224x128xf32>,
    %c8 = arith.constant 8 : index
    %c0_120 = arith.constant 0 : index
    %c0_121 = arith.constant 0 : index
    %97 = vector.load %arg5[%c8, %c0_120, %c0_121] : memref<9x8x128xbf16, #tpu.memory_space<vmem>>, vector<1x8x128xbf16>
    %98 = vector.shape_cast %97 : vector<1x8x128xbf16> to vector<8x128xbf16>
    %c0_122 = arith.constant 0 : index
    %c2_123 = arith.constant 2 : index
    %c2_124 = arith.constant 2 : index
    %c0_125 = arith.constant 0 : index
    %99 = vector.load %arg3[%c0_122, %c2_123, %c2_124, %c0_125] : memref<1x16x18x8xbf16, #tpu.memory_space<vmem>>, vector<1x14x16x8xbf16>
    %100 = vector.shape_cast %99 : vector<1x14x16x8xbf16> to vector<14x16x8xbf16>
    %101 = vector.shape_cast %100 : vector<14x16x8xbf16> to vector<224x8xbf16>
    %cst_126 = arith.constant dense<0.000000e+00> : vector<224x128xf32>
    %102 = tpu.matmul %101, %98, %cst_126 {dimension_numbers = #tpu.dot_dimension_numbers<[1], [0], [0], [1], [0, 0, 1, 1], [], []>} : vector<224x8xbf16>, vector<8x128xbf16>, vector<224x128xf32> -> vector<224x128xf32>
    %c0_127 = arith.constant 0 : index
    %c0_128 = arith.constant 0 : index
    %103 = vector.load %arg8[%c0_127, %c0_128] : memref<256x128xf32, #tpu.memory_space<vmem>>, vector<224x128xf32>
    %104 = arith.addf %103, %102 : vector<224x128xf32>
    %c0_129 = arith.constant 0 : index
    %c0_130 = arith.constant 0 : index
    %105 = vector.load %arg8[%c0_129, %c0_130] : memref<256x128xf32, #tpu.memory_space<vmem>>, vector<224x128xf32>
    tpu.vector_store %arg8[%c0_129, %c0_130], %104 {strides = array<i32>} : memref<256x128xf32, #tpu.memory_space<vmem>>, vector<224x128xf32>,
    %c6_131 = arith.constant 6 : index
    %c0_132 = arith.constant 0 : index
    %c0_133 = arith.constant 0 : index
    %106 = vector.load %arg5[%c6_131, %c0_132, %c0_133] : memref<9x8x128xbf16, #tpu.memory_space<vmem>>, vector<1x8x128xbf16>
    %107 = vector.shape_cast %106 : vector<1x8x128xbf16> to vector<8x128xbf16>
    %c0_134 = arith.constant 0 : index
    %c0_135 = arith.constant 0 : index
    %c0_136 = arith.constant 0 : index
    %c0_137 = arith.constant 0 : index
    %108 = vector.load %arg4[%c0_134, %c0_135, %c0_136, %c0_137] : memref<1x8x18x8xbf16, #tpu.memory_space<vmem>>, vector<1x2x16x8xbf16>
    %109 = vector.shape_cast %108 : vector<1x2x16x8xbf16> to vector<2x16x8xbf16>
    %110 = vector.shape_cast %109 : vector<2x16x8xbf16> to vector<32x8xbf16>
    %cst_138 = arith.constant dense<0.000000e+00> : vector<32x128xf32>
    %111 = tpu.matmul %110, %107, %cst_138 {dimension_numbers = #tpu.dot_dimension_numbers<[1], [0], [0], [1], [0, 0, 1, 1], [], []>} : vector<32x8xbf16>, vector<8x128xbf16>, vector<32x128xf32> -> vector<32x128xf32>
    %c224 = arith.constant 224 : index
    %c0_139 = arith.constant 0 : index
    %112 = vector.load %arg8[%c224, %c0_139] : memref<256x128xf32, #tpu.memory_space<vmem>>, vector<32x128xf32>
    %113 = arith.addf %112, %111 : vector<32x128xf32>
    %c224_140 = arith.constant 224 : index
    %c0_141 = arith.constant 0 : index
    %114 = vector.load %arg8[%c224_140, %c0_141] : memref<256x128xf32, #tpu.memory_space<vmem>>, vector<32x128xf32>
    tpu.vector_store %arg8[%c224_140, %c0_141], %113 {strides = array<i32>} : memref<256x128xf32, #tpu.memory_space<vmem>>, vector<32x128xf32>,
    %c7_142 = arith.constant 7 : index
    %c0_143 = arith.constant 0 : index
    %c0_144 = arith.constant 0 : index
    %115 = vector.load %arg5[%c7_142, %c0_143, %c0_144] : memref<9x8x128xbf16, #tpu.memory_space<vmem>>, vector<1x8x128xbf16>
    %116 = vector.shape_cast %115 : vector<1x8x128xbf16> to vector<8x128xbf16>
    %c0_145 = arith.constant 0 : index
    %c0_146 = arith.constant 0 : index
    %c1_147 = arith.constant 1 : index
    %c0_148 = arith.constant 0 : index
    %117 = vector.load %arg4[%c0_145, %c0_146, %c1_147, %c0_148] : memref<1x8x18x8xbf16, #tpu.memory_space<vmem>>, vector<1x2x16x8xbf16>
    %118 = vector.shape_cast %117 : vector<1x2x16x8xbf16> to vector<2x16x8xbf16>
    %119 = vector.shape_cast %118 : vector<2x16x8xbf16> to vector<32x8xbf16>
    %cst_149 = arith.constant dense<0.000000e+00> : vector<32x128xf32>
    %120 = tpu.matmul %119, %116, %cst_149 {dimension_numbers = #tpu.dot_dimension_numbers<[1], [0], [0], [1], [0, 0, 1, 1], [], []>} : vector<32x8xbf16>, vector<8x128xbf16>, vector<32x128xf32> -> vector<32x128xf32>
    %c224_150 = arith.constant 224 : index
    %c0_151 = arith.constant 0 : index
    %121 = vector.load %arg8[%c224_150, %c0_151] : memref<256x128xf32, #tpu.memory_space<vmem>>, vector<32x128xf32>
    %122 = arith.addf %121, %120 : vector<32x128xf32>
    %c224_152 = arith.constant 224 : index
    %c0_153 = arith.constant 0 : index
    %123 = vector.load %arg8[%c224_152, %c0_153] : memref<256x128xf32, #tpu.memory_space<vmem>>, vector<32x128xf32>
    tpu.vector_store %arg8[%c224_152, %c0_153], %122 {strides = array<i32>} : memref<256x128xf32, #tpu.memory_space<vmem>>, vector<32x128xf32>,
    %c8_154 = arith.constant 8 : index
    %c0_155 = arith.constant 0 : index
    %c0_156 = arith.constant 0 : index
    %124 = vector.load %arg5[%c8_154, %c0_155, %c0_156] : memref<9x8x128xbf16, #tpu.memory_space<vmem>>, vector<1x8x128xbf16>
    %125 = vector.shape_cast %124 : vector<1x8x128xbf16> to vector<8x128xbf16>
    %c0_157 = arith.constant 0 : index
    %c0_158 = arith.constant 0 : index
    %c2_159 = arith.constant 2 : index
    %c0_160 = arith.constant 0 : index
    %126 = vector.load %arg4[%c0_157, %c0_158, %c2_159, %c0_160] : memref<1x8x18x8xbf16, #tpu.memory_space<vmem>>, vector<1x2x16x8xbf16>
    %127 = vector.shape_cast %126 : vector<1x2x16x8xbf16> to vector<2x16x8xbf16>
    %128 = vector.shape_cast %127 : vector<2x16x8xbf16> to vector<32x8xbf16>
    %cst_161 = arith.constant dense<0.000000e+00> : vector<32x128xf32>
    %129 = tpu.matmul %128, %125, %cst_161 {dimension_numbers = #tpu.dot_dimension_numbers<[1], [0], [0], [1], [0, 0, 1, 1], [], []>} : vector<32x8xbf16>, vector<8x128xbf16>, vector<32x128xf32> -> vector<32x128xf32>
    %c224_162 = arith.constant 224 : index
    %c0_163 = arith.constant 0 : index
    %130 = vector.load %arg8[%c224_162, %c0_163] : memref<256x128xf32, #tpu.memory_space<vmem>>, vector<32x128xf32>
    %131 = arith.addf %130, %129 : vector<32x128xf32>
    %c224_164 = arith.constant 224 : index
    %c0_165 = arith.constant 0 : index
    %132 = vector.load %arg8[%c224_164, %c0_165] : memref<256x128xf32, #tpu.memory_space<vmem>>, vector<32x128xf32>
    tpu.vector_store %arg8[%c224_164, %c0_165], %131 {strides = array<i32>} : memref<256x128xf32, #tpu.memory_space<vmem>>, vector<32x128xf32>,
    %c0_166 = arith.constant 0 : index
    %c0_167 = arith.constant 0 : index
    %133 = vector.load %arg8[%c0_166, %c0_167] : memref<256x128xf32, #tpu.memory_space<vmem>>, vector<256x128xf32>
    %c0_168 = arith.constant 0 : index
    %c0_169 = arith.constant 0 : index
    %134 = vector.load %arg6[%c0_168, %c0_169] : memref<1x128xf32, #tpu.memory_space<vmem>>, vector<1x128xf32>
    %135 = vector.broadcast %134 : vector<1x128xf32> to vector<256x128xf32>
    %136 = arith.addf %133, %135 : vector<256x128xf32>
    %cst_170 = arith.constant 0.000000e+00 : f32
    %137 = vector.broadcast %cst_170 : f32 to vector<256x128xf32>
    %138 = arith.subf %137, %136 : vector<256x128xf32>
    %139 = math.exp %138 : vector<256x128xf32>
    %cst_171 = arith.constant 1.000000e+00 : f32
    %140 = vector.broadcast %cst_171 : f32 to vector<256x128xf32>
    %141 = arith.addf %140, %139 : vector<256x128xf32>
    %142 = tpu.reciprocal %141 {approx = true} : vector<256x128xf32> -> vector<256x128xf32>
    %143 = arith.mulf %136, %142 : vector<256x128xf32>
    %144 = vector.shape_cast %143 : vector<256x128xf32> to vector<16x16x128xf32>
    %145 = arith.truncf %144 : vector<16x16x128xf32> to vector<16x16x128xbf16>
    %c0_172 = arith.constant 0 : index
    %c0_173 = arith.constant 0 : index
    %c0_174 = arith.constant 0 : index
    %c0_175 = arith.constant 0 : index
    %146 = vector.load %arg7[%c0_172, %c0_173, %c0_174, %c0_175] : memref<1x16x16x128xbf16, #tpu.memory_space<vmem>>, vector<1x16x16x128xbf16>
    %147 = vector.shape_cast %146 : vector<1x16x16x128xbf16> to vector<16x16x128xbf16>
    %148 = vector.shape_cast %145 : vector<16x16x128xbf16> to vector<1x16x16x128xbf16>
    tpu.vector_store %arg7[%c0_172, %c0_173, %c0_174, %c0_175], %148 {strides = array<i32>} : memref<1x16x16x128xbf16, #tpu.memory_space<vmem>>, vector<1x16x16x128xbf16>,
    return
  }
  func.func @transform_0(%arg0: i32, %arg1: i32, %arg2: i32) -> (i32, i32, i32, i32) {
    %c0_i32 = arith.constant 0 : i32
    %c0_i32_0 = arith.constant 0 : i32
    %c0_i32_1 = arith.constant 0 : i32
    return %arg0, %arg1, %c0_i32, %c0_i32_0 : i32, i32, i32, i32
  }
  func.func @transform_1(%arg0: i32, %arg1: i32, %arg2: i32) -> (i32, i32, i32, i32) {
    %c1_i32 = arith.constant 1 : i32
    %0 = arith.addi %arg1, %c1_i32 : i32
    %c2_i32 = arith.constant 2 : i32
    %1 = arith.muli %0, %c2_i32 : i32
    %c0_i32 = arith.constant 0 : i32
    %c0_i32_0 = arith.constant 0 : i32
    %c0_i32_1 = arith.constant 0 : i32
    return %arg0, %1, %c0_i32, %c0_i32_0 : i32, i32, i32, i32
  }
  func.func @transform_2(%arg0: i32, %arg1: i32, %arg2: i32) -> (i32, i32, i32) {
    %c0_i32 = arith.constant 0 : i32
    %c0_i32_0 = arith.constant 0 : i32
    %c0_i32_1 = arith.constant 0 : i32
    return %c0_i32, %c0_i32_0, %arg2 : i32, i32, i32
  }
  func.func @transform_3(%arg0: i32, %arg1: i32, %arg2: i32) -> (i32, i32) {
    %c0_i32 = arith.constant 0 : i32
    %c0_i32_0 = arith.constant 0 : i32
    return %c0_i32, %arg2 : i32, i32
  }
  func.func @transform_4(%arg0: i32, %arg1: i32, %arg2: i32) -> (i32, i32, i32, i32) {
    %c0_i32 = arith.constant 0 : i32
    %c0_i32_0 = arith.constant 0 : i32
    return %arg0, %arg1, %c0_i32, %arg2 : i32, i32, i32, i32
  }
}

</mosaic_0001>

<llo_original>
// kernel: tpu_custom_call.1
$region0: #{tpu_custom_call.1}
  #allocation0 [shape = 'u32[]', space=smem, size = 0x4, offset = 0x4, fixed_abs, tag = 'smem constant byte address 0x4 - core index']
  #allocation1 [shape = 'u32[144,128]{1,0:T(1,128)}', space=vmem, size = 0x12000, scoped, tag = 'internal scratch']
  #allocation2 [shape = 'f32[256,128]{1,0:T(8,128)}', space=vmem, size = 0x20000, scoped, tag = 'scratch operand']
  %s0 = inlined_call_operand.vmem [shape: bf16[2,24,18,8], index: 0, kind: input, shape index: {}]
  %s1 = inlined_call_operand.vmem [shape: bf16[2,24,18,8], index: 1, kind: input, shape index: {}]
  %s2 = inlined_call_operand.vmem [shape: bf16[9,8,128], index: 2, kind: input, shape index: {}]
  %s3 = inlined_call_operand.vmem [shape: f32[1,128], index: 3, kind: input, shape index: {}]
  %s4 = inlined_call_operand.hbm [shape: bf16[2,16,16,128], index: 4, kind: output, shape index: {}]
  %s5 = sld [smem:[#allocation0]]
  $region49: #{tpu_custom_call.1} parent=0
    _
  %s7 = ssub.s32 1, %s5
  %s8 = scalar_select 0, %s7, %s5
  $region1: #{tpu_custom_call.1} parent=0
    #allocation3 [shape = 'u8[131072]{0}', space=vmem, size = 0x20000, scoped, tag = 'output window, operand 0']
    #allocation4 [shape = 's32[2]{0}', space=sflag, size = 0x8, scoped, tag = 'scoped memory for tpu_custom_call.1']
    %9 = vsyncpa [#allocation4], 0
    %s10 = scalar_lea.sflag [#allocation4], 1
    %11 = vsyncpa %s10, 0
    loop: start=0, step=1, limit=4
    $region2: #{tpu_custom_call.1} parent=1 // loop_pre_header
      _
    $region3: #{tpu_custom_call.1} parent=1 // loop_header
      %s13 = sphi 0, %s17
      %p14 = scmp.ge.s32.totalorder %s13, 4
      %s20 = sphi 0, %s39
      %s21 = sphi 0, %s35
      %s22 = sphi 0, %s31
      %s23 = sphi 0, %s20
      %s24 = sphi 0, %s21
      %s25 = sphi 0, %s22
      %s26 = sphi 0, %s23
      %s27 = sphi 0, %s24
      %s28 = sphi 0, %s25
      %s44 = sphi 0, %s46
      %s47 = sphi 0, %s44
      %s48 = sphi 0, %s47
      %s64 = sphi 0, %s48
      %s76 = sphi 0, %s78
      %s79 = sphi 0, %s76
      %s80 = sphi 0, %s79
      %s96 = sphi 0, %s80
      %s102 = sphi 0, %s104
      %s105 = sphi 0, %s102
      %s106 = sphi 0, %s105
      %s122 = sphi 0, %s106
      %s128 = sphi 0, %s130
      %s131 = sphi 0, %s128
      %s132 = sphi 0, %s131
      %s148 = sphi 0, %s132
      %s158 = sphi 0, %s160
      %s161 = sphi 0, %s158
      %s162 = sphi 0, %s161
      %s178 = sphi 0, %s162
    $region4: #{tpu_custom_call.1} parent=1 // loop_header_branch
      %16 = sbr.rel (%p14) target = $region8
    $region5: #{tpu_custom_call.1} parent=1 // loop_body
      %s18 = ssub.s32 %s13, 1
      %s19 = ssub.s32 %s13, 2
      %s29 = sadd.s32 1, %s22
      %p30 = scmp.ge.s32.totalorder %s29, 1
      %s31 = scalar_select %p30, 0, %s29
      %s32 = sadd.s32 1, %s21
      %s33 = scalar_select %p30, %s32, %s21
      %p34 = scmp.ge.s32.totalorder %s33, 1
      %s35 = scalar_select %p34, 0, %s33
      %s36 = sadd.s32 1, %s20
      %s37 = scalar_select %p34, %s36, %s20
      %p38 = scmp.ge.s32.totalorder %s37, 2
      %s39 = scalar_select %p38, 0, %s37
      %s40 = ssub.s32 %s20, %s39
      %s41 = ssub.s32 %s21, %s35
      %s42 = sor.u32 %s40, %s41
      %p43 = scmp.eq.s32.totalorder %s42, 0
      %s45 = sadd.s32 %s44, 1
      %s46 = scalar_select %p43, %s44, %s45
      %p49 = pneg %p43
      %p50 = scmp.eq.s32.totalorder %s13, 1
      %p51 = por %p49, %p50
      %p52 = scmp.ne.s32.totalorder %s44, %s47
      %p53 = scmp.eq.s32.totalorder %s13, 0
      %p54 = por %p52, %p53
      %p55 = scmp.ne.s32.totalorder %s44, %s47
      %p56 = scmp.eq.s32.totalorder %s18, 1
      %p57 = por %p55, %p56
      %p58 = scmp.ne.s32.totalorder %s47, %s48
      %p59 = scmp.eq.s32.totalorder %s18, 0
      %p60 = por %p58, %p59
      %p61 = scmp.ne.s32.totalorder %s47, %s48
      %p62 = scmp.eq.s32.totalorder %s19, 1
      %p63 = por %p61, %p62
      %p65 = scmp.ne.s32.totalorder %s48, %s64
      %p66 = scmp.eq.s32.totalorder %s19, 0
      %p67 = por %p65, %p66
      %s68 = sadd.s32 %s21, 1
      %s69 = smul.u32 %s68, 2
      %s70 = sadd.s32 %s35, 1
      %s71 = smul.u32 %s70, 2
      %s72 = ssub.s32 %s20, %s39
      %s73 = ssub.s32 %s69, %s71
      %s74 = sor.u32 %s72, %s73
      %p75 = scmp.eq.s32.totalorder %s74, 0
      %s77 = sadd.s32 %s76, 1
      %s78 = scalar_select %p75, %s76, %s77
      %p81 = pneg %p75
      %p82 = scmp.eq.s32.totalorder %s13, 1
      %p83 = por %p81, %p82
      %p84 = scmp.ne.s32.totalorder %s76, %s79
      %p85 = scmp.eq.s32.totalorder %s13, 0
      %p86 = por %p84, %p85
      %p87 = scmp.ne.s32.totalorder %s76, %s79
      %p88 = scmp.eq.s32.totalorder %s18, 1
      %p89 = por %p87, %p88
      %p90 = scmp.ne.s32.totalorder %s79, %s80
      %p91 = scmp.eq.s32.totalorder %s18, 0
      %p92 = por %p90, %p91
      %p93 = scmp.ne.s32.totalorder %s79, %s80
      %p94 = scmp.eq.s32.totalorder %s19, 1
      %p95 = por %p93, %p94
      %p97 = scmp.ne.s32.totalorder %s80, %s96
      %p98 = scmp.eq.s32.totalorder %s19, 0
      %p99 = por %p97, %p98
      %s100 = ssub.s32 %s22, %s31
      %p101 = scmp.eq.s32.totalorder %s100, 0
      %s103 = sadd.s32 %s102, 1
      %s104 = scalar_select %p101, %s102, %s103
      %p107 = pneg %p101
      %p108 = scmp.eq.s32.totalorder %s13, 1
      %p109 = por %p107, %p108
      %p110 = scmp.ne.s32.totalorder %s102, %s105
      %p111 = scmp.eq.s32.totalorder %s13, 0
      %p112 = por %p110, %p111
      %p113 = scmp.ne.s32.totalorder %s102, %s105
      %p114 = scmp.eq.s32.totalorder %s18, 1
      %p115 = por %p113, %p114
      %p116 = scmp.ne.s32.totalorder %s105, %s106
      %p117 = scmp.eq.s32.totalorder %s18, 0
      %p118 = por %p116, %p117
      %p119 = scmp.ne.s32.totalorder %s105, %s106
      %p120 = scmp.eq.s32.totalorder %s19, 1
      %p121 = por %p119, %p120
      %p123 = scmp.ne.s32.totalorder %s106, %s122
      %p124 = scmp.eq.s32.totalorder %s19, 0
      %p125 = por %p123, %p124
      %s126 = ssub.s32 %s22, %s31
      %p127 = scmp.eq.s32.totalorder %s126, 0
      %s129 = sadd.s32 %s128, 1
      %s130 = scalar_select %p127, %s128, %s129
      %p133 = pneg %p127
      %p134 = scmp.eq.s32.totalorder %s13, 1
      %p135 = por %p133, %p134
      %p136 = scmp.ne.s32.totalorder %s128, %s131
      %p137 = scmp.eq.s32.totalorder %s13, 0
      %p138 = por %p136, %p137
      %p139 = scmp.ne.s32.totalorder %s128, %s131
      %p140 = scmp.eq.s32.totalorder %s18, 1
      %p141 = por %p139, %p140
      %p142 = scmp.ne.s32.totalorder %s131, %s132
      %p143 = scmp.eq.s32.totalorder %s18, 0
      %p144 = por %p142, %p143
      %p145 = scmp.ne.s32.totalorder %s131, %s132
      %p146 = scmp.eq.s32.totalorder %s19, 1
      %p147 = por %p145, %p146
      %p149 = scmp.ne.s32.totalorder %s132, %s148
      %p150 = scmp.eq.s32.totalorder %s19, 0
      %p151 = por %p149, %p150
      %s152 = ssub.s32 %s20, %s39
      %s153 = ssub.s32 %s21, %s35
      %s154 = sor.u32 %s152, %s153
      %s155 = ssub.s32 %s22, %s31
      %s156 = sor.u32 %s154, %s155
      %p157 = scmp.eq.s32.totalorder %s156, 0
      %s159 = sadd.s32 %s158, 1
      %s160 = scalar_select %p157, %s158, %s159
      %p163 = pneg %p157
      %p164 = scmp.eq.s32.totalorder %s13, 1
      %p165 = por %p163, %p164
      %p166 = scmp.ne.s32.totalorder %s158, %s161
      %p167 = scmp.eq.s32.totalorder %s13, 0
      %p168 = por %p166, %p167
      %p169 = scmp.ne.s32.totalorder %s158, %s161
      %p170 = scmp.eq.s32.totalorder %s18, 1
      %p171 = por %p169, %p170
      %p172 = scmp.ne.s32.totalorder %s161, %s162
      %p173 = scmp.eq.s32.totalorder %s18, 0
      %p174 = por %p172, %p173
      %p175 = scmp.ne.s32.totalorder %s161, %s162
      %p176 = scmp.eq.s32.totalorder %s19, 1
      %p177 = por %p175, %p176
      %p179 = scmp.ne.s32.totalorder %s162, %s178
      %p180 = scmp.eq.s32.totalorder %s19, 0
      %p181 = por %p179, %p180
      %p182 = scmp.le.s32.totalorder 1, %s13
      %p183 = scmp.lt.s32.totalorder %s13, 3
      %p184 = pnand %p182, %p183
      %p185 = pneg %p184
      // Predicated region
      $region9: #{tpu_custom_call.1} parent=5 // pred_check
        _
      $region10: #{tpu_custom_call.1} parent=5 // pred_check_branch
        %187 = sbr.rel (%p184) target = $region12
      $region11: #{tpu_custom_call.1} parent=5 // pred_region
        %s188 = ssub.s32 %s13, 1
        // Predicated region
        $region13: #{tpu_custom_call.1} parent=11 // pred_check
          %p189 = pneg %p118
        $region14: #{tpu_custom_call.1} parent=11 // pred_check_branch
          %191 = sbr.rel (%p189) target = $region16
        $region15: #{tpu_custom_call.1} parent=11 // pred_region
          %p192 = scmp.lt.s32.totalorder %s25, 0
          %s193 = scalar_select %p192, %s25, 0
          %s194 = smul.addr %s193, 4
          %s195 = scalar_lea.vmem %s2, %s194
        $region16: #{tpu_custom_call.1} parent=11 // pred_fallthru
          _
        // Predicated region
        $region17: #{tpu_custom_call.1} parent=11 // pred_check
          %p196 = pneg %p144
        $region18: #{tpu_custom_call.1} parent=11 // pred_check_branch
          %198 = sbr.rel (%p196) target = $region20
        $region19: #{tpu_custom_call.1} parent=11 // pred_region
          %p199 = scmp.lt.s32.totalorder %s25, 0
          %s200 = scalar_select %p199, %s25, 0
          %s201 = scalar_lea.vmem %s3, %s200
        $region20: #{tpu_custom_call.1} parent=11 // pred_fallthru
          _
      $region12: #{tpu_custom_call.1} parent=5 // pred_fallthru
        _
      %p202 = scmp.lt.s32.totalorder %s13, 2
      // Predicated region
      $region21: #{tpu_custom_call.1} parent=5 // pred_check
        %p203 = pneg %p202
      $region22: #{tpu_custom_call.1} parent=5 // pred_check_branch
        %205 = sbr.rel (%p203) target = $region24
      $region23: #{tpu_custom_call.1} parent=5 // pred_region
        // Predicated region
        $region25: #{tpu_custom_call.1} parent=23 // pred_check
          %p206 = pneg %p54
        $region26: #{tpu_custom_call.1} parent=23 // pred_check_branch
          %208 = sbr.rel (%p206) target = $region28
        $region27: #{tpu_custom_call.1} parent=23 // pred_region
          %s209 = smul.u32 16, %s21
          %s210 = ssub.s32 24, %s209
          %p211 = scmp.lt.s32.totalorder %s210, 16
          %s212 = scalar_select %p211, %s210, 16
          %s213 = smul.u32 64, %s212
          %s214 = smul.u32 %s213, 3
          %p215 = scmp.lt.s32.totalorder %s20, 1
          %s216 = scalar_select %p215, %s20, 1
          %p217 = scmp.lt.s32.totalorder %s209, 23
          %s218 = scalar_select %p217, %s209, 23
          %s219 = smul.addr %s218, 3
          %s220 = smul.addr %s216, 72
          %s221 = sadd.s32 %s219, %s220
          %s222 = smul.addr %s221, 4
          %s223 = scalar_lea.vmem %s0, %s222
          %s224 = smul.u32 16, %s21
          %s225 = ssub.s32 24, %s224
          %p226 = scmp.lt.s32.totalorder %s225, 16
          %s227 = scalar_select %p226, %s225, 16
          %s228 = smul.u32 64, %s227
          %s229 = smul.u32 %s228, 3
        $region28: #{tpu_custom_call.1} parent=23 // pred_fallthru
          _
        // Predicated region
        $region29: #{tpu_custom_call.1} parent=23 // pred_check
          %p230 = pneg %p86
        $region30: #{tpu_custom_call.1} parent=23 // pred_check_branch
          %232 = sbr.rel (%p230) target = $region32
        $region31: #{tpu_custom_call.1} parent=23 // pred_region
          %s233 = sadd.s32 %s21, 1
          %s234 = smul.u32 %s233, 2
          %s235 = smul.u32 8, %s234
          %p236 = scmp.lt.s32.totalorder %s20, 1
          %s237 = scalar_select %p236, %s20, 1
          %p238 = scmp.lt.s32.totalorder %s235, 23
          %s239 = scalar_select %p238, %s235, 23
          %s240 = smul.addr %s239, 3
          %s241 = smul.addr %s237, 72
          %s242 = sadd.s32 %s240, %s241
          %s243 = smul.addr %s242, 4
          %s244 = scalar_lea.vmem %s1, %s243
          %s245 = sadd.s32 %s21, 1
          %s246 = smul.u32 %s245, 2
          %s247 = smul.u32 8, %s246
        $region32: #{tpu_custom_call.1} parent=23 // pred_fallthru
          _
      $region24: #{tpu_custom_call.1} parent=5 // pred_fallthru
        _
      %p248 = scmp.le.s32.totalorder 1, %s13
      %p249 = scmp.lt.s32.totalorder %s13, 3
      %p250 = pnand %p248, %p249
      %p251 = pneg %p250
      // Predicated region
      $region33: #{tpu_custom_call.1} parent=5 // pred_check
        _
      $region34: #{tpu_custom_call.1} parent=5 // pred_check_branch
        %253 = sbr.rel (%p250) target = $region36
      $region35: #{tpu_custom_call.1} parent=5 // pred_region
        %s254 = ssub.s32 %s13, 1
        %s255 = smul.u32 16, %s24
        %s256 = ssub.s32 24, %s255
        %p257 = scmp.lt.s32.totalorder %s256, 16
        %s258 = scalar_select %p257, %s256, 16
        %s259 = smul.u32 64, %s258
        %s260 = smul.u32 %s259, 3
        %p261 = scmp.lt.s32.totalorder %s23, 1
        %s262 = scalar_select %p261, %s23, 1
        %p263 = scmp.lt.s32.totalorder %s255, 23
        %s264 = scalar_select %p263, %s255, 23
        %s265 = smul.addr %s264, 3
        %s266 = smul.addr %s262, 72
        %s267 = sadd.s32 %s265, %s266
        %s268 = smul.addr %s267, 4
        %s269 = scalar_lea.vmem %s0, %s268
        %p270 = pneg %p60
        %p271 = pneg %p57
        %s272 = sadd.s32 %s24, 1
        %s273 = smul.u32 %s272, 2
        %s274 = smul.u32 8, %s273
        %p275 = scmp.lt.s32.totalorder %s23, 1
        %s276 = scalar_select %p275, %s23, 1
        %p277 = scmp.lt.s32.totalorder %s274, 23
        %s278 = scalar_select %p277, %s274, 23
        %s279 = smul.addr %s278, 3
        %s280 = smul.addr %s276, 72
        %s281 = sadd.s32 %s279, %s280
        %s282 = smul.addr %s281, 4
        %s283 = scalar_lea.vmem %s1, %s282
        %p284 = pneg %p92
        %p285 = pneg %p89
        %p286 = scmp.lt.s32.totalorder %s25, 0
        %s287 = scalar_select %p286, %s25, 0
        %s288 = smul.addr %s287, 4
        %s289 = scalar_lea.vmem %s2, %s288
        %p290 = pneg %p118
        %p291 = pneg %p115
        %p292 = scmp.lt.s32.totalorder %s25, 0
        %s293 = scalar_select %p292, %s25, 0
        %s294 = scalar_lea.vmem %s3, %s293
        %p295 = pneg %p144
        %p296 = pneg %p141
        %p297 = pneg %p174
        %p298 = pneg %p171
        %s299 = sand.u32 %s161, 1
        %s300 = scalar_lea.sflag [#allocation4], %s299
        %s301 = sand.u32 %s161, 1
        %s302 = smul.addr %s301, 128
        %s303 = scalar_lea.vmem [#allocation3], %s302
        %s304 = smul.u32 16, %s24
        %s305 = ssub.s32 24, %s304
        %p306 = scmp.lt.s32.totalorder %s305, 16
        %s307 = scalar_select %p306, %s305, 16
        %s308 = smul.u32 64, %s307
        %s309 = smul.u32 %s308, 3
        %p310 = scmp.lt.s32.totalorder %s23, 1
        %s311 = scalar_select %p310, %s23, 1
        %p312 = scmp.lt.s32.totalorder %s304, 23
        %s313 = scalar_select %p312, %s304, 23
        %s314 = smul.addr %s313, 3
        %s315 = smul.addr %s311, 72
        %s316 = sadd.s32 %s314, %s315
        %s317 = smul.addr %s316, 4
        %s318 = scalar_lea.vmem %s0, %s317
        %s319 = smul.u32 16, %s24
        %s320 = ssub.s32 24, %s319
        %p321 = scmp.lt.s32.totalorder %s320, 16
        %s322 = scalar_select %p321, %s320, 16
        %s323 = smul.u32 64, %s322
        %s324 = smul.u32 %s323, 3
        %s325 = sadd.s32 %s24, 1
        %s326 = smul.u32 %s325, 2
        %s327 = smul.u32 8, %s326
        %p328 = scmp.lt.s32.totalorder %s23, 1
        %s329 = scalar_select %p328, %s23, 1
        %p330 = scmp.lt.s32.totalorder %s327, 23
        %s331 = scalar_select %p330, %s327, 23
        %s332 = smul.addr %s331, 3
        %s333 = smul.addr %s329, 72
        %s334 = sadd.s32 %s332, %s333
        %s335 = smul.addr %s334, 4
        %s336 = scalar_lea.vmem %s1, %s335
        %s337 = sadd.s32 %s24, 1
        %s338 = smul.u32 %s337, 2
        %s339 = smul.u32 8, %s338
        %p340 = scmp.lt.s32.totalorder %s25, 0
        %s341 = scalar_select %p340, %s25, 0
        %s342 = smul.addr %s341, 4
        %s343 = scalar_lea.vmem %s2, %s342
        %p344 = scmp.lt.s32.totalorder %s25, 0
        %s345 = scalar_select %p344, %s25, 0
        %s346 = scalar_lea.vmem %s3, %s345
        %s347 = smul.u32 16, %s24
        %v349 = vld [vmem:[%s343] sm:$0xf]
        %v350 = vld [vmem:[%s318] sm:$0xf]
        %v351 = vld [vmem:[%s318 + $0x4] sm:$0xf]
        %v352 = vld [vmem:[%s318 + $0xc] sm:$0xf]
        %v353 = vld [vmem:[%s318 + $0x10] sm:$0xf]
        %v354 = vld [vmem:[%s318 + $0x18] sm:$0xf]
        %v355 = vld [vmem:[%s318 + $0x1c] sm:$0xf]
        %v356 = vld [vmem:[%s318 + $0x24] sm:$0xf]
        %v357 = vld [vmem:[%s318 + $0x28] sm:$0xf]
        %v358 = vld [vmem:[%s318 + $0x30] sm:$0xf]
        %v359 = vld [vmem:[%s318 + $0x34] sm:$0xf]
        %v360 = vld [vmem:[%s318 + $0x3c] sm:$0xf]
        %v361 = vld [vmem:[%s318 + $0x40] sm:$0xf]
        %v362 = vld [vmem:[%s318 + $0x48] sm:$0xf]
        %v363 = vld [vmem:[%s318 + $0x4c] sm:$0xf]
        %v364 = vld [vmem:[%s318 + $0x54] sm:$0xf]
        %v365 = vld [vmem:[%s318 + $0x58] sm:$0xf]
        %v366 = vld [vmem:[%s318 + $0x60] sm:$0xf]
        %v367 = vld [vmem:[%s318 + $0x64] sm:$0xf]
        %v368 = vld [vmem:[%s318 + $0x6c] sm:$0xf]
        %v369 = vld [vmem:[%s318 + $0x70] sm:$0xf]
        %v370 = vld [vmem:[%s318 + $0x78] sm:$0xf]
        %v371 = vld [vmem:[%s318 + $0x7c] sm:$0xf]
        %v372 = vld [vmem:[%s318 + $0x84] sm:$0xf]
        %v373 = vld [vmem:[%s318 + $0x88] sm:$0xf]
        %v374 = vld [vmem:[%s318 + $0x90] sm:$0xf]
        %v375 = vld [vmem:[%s318 + $0x94] sm:$0xf]
        %v376 = vld [vmem:[%s318 + $0x9c] sm:$0xf]
        %v377 = vld [vmem:[%s318 + $0xa0] sm:$0xf]
        %v378 = vld [vmem:[%s318 + $0xa8] sm:$0xf]
        %v379 = vld [vmem:[%s318 + $0xac] sm:$0xf]
        %v380 = vld [vmem:[%s318 + $0xb4] sm:$0xf]
        %v381 = vld [vmem:[%s318 + $0xb8] sm:$0xf]
        %v414 = vunpack.c.l.b16 %v350
        %v415 = vunpack.c.l.b16 %v351
        %v416 = vunpack.c.l.b16 %v352
        %v417 = vunpack.c.l.b16 %v353
        %v418 = vunpack.c.l.b16 %v354
        %v419 = vunpack.c.l.b16 %v355
        %v420 = vunpack.c.l.b16 %v356
        %v421 = vunpack.c.l.b16 %v357
        %v422 = vunpack.c.l.b16 %v358
        %v423 = vunpack.c.l.b16 %v359
        %v424 = vunpack.c.l.b16 %v360
        %v425 = vunpack.c.l.b16 %v361
        %v426 = vunpack.c.l.b16 %v362
        %v427 = vunpack.c.l.b16 %v363
        %v428 = vunpack.c.l.b16 %v364
        %v429 = vunpack.c.l.b16 %v365
        %v430 = vunpack.c.l.b16 %v366
        %v431 = vunpack.c.l.b16 %v367
        %v432 = vunpack.c.l.b16 %v368
        %v433 = vunpack.c.l.b16 %v369
        %v434 = vunpack.c.l.b16 %v370
        %v435 = vunpack.c.l.b16 %v371
        %v436 = vunpack.c.l.b16 %v372
        %v437 = vunpack.c.l.b16 %v373
        %v438 = vunpack.c.l.b16 %v374
        %v439 = vunpack.c.l.b16 %v375
        %v440 = vunpack.c.l.b16 %v376
        %v441 = vunpack.c.l.b16 %v377
        %v442 = vunpack.c.l.b16 %v378
        %v443 = vunpack.c.l.b16 %v379
        %v444 = vunpack.c.l.b16 %v380
        %v445 = vunpack.c.l.b16 %v381
        %v446 = vpack.c.b16 %v415, %v414
        %v447 = vpack.c.b16 %v417, %v416
        %v448 = vpack.c.b16 %v419, %v418
        %v449 = vpack.c.b16 %v421, %v420
        %v450 = vpack.c.b16 %v423, %v422
        %v451 = vpack.c.b16 %v425, %v424
        %v452 = vpack.c.b16 %v427, %v426
        %v453 = vpack.c.b16 %v429, %v428
        %v454 = vpack.c.b16 %v431, %v430
        %v455 = vpack.c.b16 %v433, %v432
        %v456 = vpack.c.b16 %v435, %v434
        %v457 = vpack.c.b16 %v437, %v436
        %v458 = vpack.c.b16 %v439, %v438
        %v459 = vpack.c.b16 %v441, %v440
        %v460 = vpack.c.b16 %v443, %v442
        %v461 = vpack.c.b16 %v445, %v444
        %vm462 = vcmask 64512
        %v464 = vsel %vm462, %v446, 0
        %v467 = vsel %vm462, %v447, 0
        %v470 = vsel %vm462, %v448, 0
        %v473 = vsel %vm462, %v449, 0
        %v476 = vsel %vm462, %v450, 0
        %v479 = vsel %vm462, %v451, 0
        %v482 = vsel %vm462, %v452, 0
        %v485 = vsel %vm462, %v453, 0
        %v488 = vsel %vm462, %v454, 0
        %v491 = vsel %vm462, %v455, 0
        %v494 = vsel %vm462, %v456, 0
        %v497 = vsel %vm462, %v457, 0
        %v500 = vsel %vm462, %v458, 0
        %v503 = vsel %vm462, %v459, 0
        %v506 = vsel %vm462, %v460, 0
        %v509 = vsel %vm462, %v461, 0
        %vm511 = vcmask 1043456
        %v513 = vsel %vm511, %v349, 0
        %515 = vmatprep.subr.bf16.mxu0 0
        %516 = vmatpush1.bf16.msra.mxu0 0
        %517 = vmatprep.subr.bf16.mxu0 0
        %518 = vmatpush1.bf16.msra.mxu0 0
        %519 = vmatprep.subr.bf16.mxu0 0
        %520 = vmatpush1.bf16.msra.mxu0 0
        %521 = vmatprep.subr.bf16.mxu0 0
        %522 = vmatpush1.bf16.msra.mxu0 0
        %523 = vmatprep.subr.bf16.mxu0 0
        %524 = vmatpush1.bf16.msra.mxu0 0
        %525 = vmatprep.subr.bf16.mxu0 0
        %526 = vmatpush1.bf16.msra.mxu0 0
        %527 = vmatprep.subr.bf16.mxu0 0
        %528 = vmatpush1.bf16.msra.mxu0 0
        %529 = vmatprep.subr.bf16.mxu0 0
        %530 = vmatpush1.bf16.msra.mxu0 %v513
        %531 = vmatprep.subr.bf16.mxu0 0
        %532 = vmatpush2.bf16.msra.mxu0 0
        %533 = vmatprep.subr.bf16.mxu0 0
        %534 = vmatpush2.bf16.msra.mxu0 0
        %535 = vmatprep.subr.bf16.mxu0 0
        %536 = vmatpush2.bf16.msra.mxu0 0
        %537 = vmatprep.subr.bf16.mxu0 0
        %538 = vmatpush2.bf16.msra.mxu0 0
        %539 = vmatprep.subr.bf16.mxu0 0
        %540 = vmatpush2.bf16.msra.mxu0 0
        %541 = vmatprep.subr.bf16.mxu0 0
        %542 = vmatpush2.bf16.msra.mxu0 0
        %543 = vmatprep.subr.bf16.mxu0 0
        %544 = vmatpush2.bf16.msra.mxu0 0
        %545 = vmatprep.subr.bf16.mxu0 0
        %546 = vmatpush2.bf16.msra.mxu0 0
        %547 = vmatprep.mubr.bf16.mxu0 0
        %548 = vmatmul.mubr.bf16.gmra.mxu0 %v464
        %v549 = vpop.f32.mrf.mxu0
        %v550 = vadd.f32 0.0, %v549
        %v551 = vpop.f32.mrf.mxu0
        %v552 = vpop.f32.mrf.mxu0
        %v553 = vadd.f32 0.0, %v552
        %v554 = vpop.f32.mrf.mxu0
        %555 = vmatprep.mubr.bf16.mxu0 0
        %556 = vmatmul.mubr.bf16.gmra.mxu0 %v467
        %v557 = vpop.f32.mrf.mxu0
        %v558 = vadd.f32 0.0, %v557
        %v559 = vpop.f32.mrf.mxu0
        %v560 = vpop.f32.mrf.mxu0
        %v561 = vadd.f32 0.0, %v560
        %v562 = vpop.f32.mrf.mxu0
        %563 = vmatprep.mubr.bf16.mxu0 0
        %564 = vmatmul.mubr.bf16.gmra.mxu0 %v470
        %v565 = vpop.f32.mrf.mxu0
        %v566 = vadd.f32 0.0, %v565
        %v567 = vpop.f32.mrf.mxu0
        %v568 = vpop.f32.mrf.mxu0
        %v569 = vadd.f32 0.0, %v568
        %v570 = vpop.f32.mrf.mxu0
        %571 = vmatprep.mubr.bf16.mxu0 0
        %572 = vmatmul.mubr.bf16.gmra.mxu0 %v473
        %v573 = vpop.f32.mrf.mxu0
        %v574 = vadd.f32 0.0, %v573
        %v575 = vpop.f32.mrf.mxu0
        %v576 = vpop.f32.mrf.mxu0
        %v577 = vadd.f32 0.0, %v576
        %v578 = vpop.f32.mrf.mxu0
        %579 = vmatprep.mubr.bf16.mxu0 0
        %580 = vmatmul.mubr.bf16.gmra.mxu0 %v476
        %v581 = vpop.f32.mrf.mxu0
        %v582 = vadd.f32 0.0, %v581
        %v583 = vpop.f32.mrf.mxu0
        %v584 = vpop.f32.mrf.mxu0
        %v585 = vadd.f32 0.0, %v584
        %v586 = vpop.f32.mrf.mxu0
        %587 = vmatprep.mubr.bf16.mxu0 0
        %588 = vmatmul.mubr.bf16.gmra.mxu0 %v479
        %v589 = vpop.f32.mrf.mxu0
        %v590 = vadd.f32 0.0, %v589
        %v591 = vpop.f32.mrf.mxu0
        %v592 = vpop.f32.mrf.mxu0
        %v593 = vadd.f32 0.0, %v592
        %v594 = vpop.f32.mrf.mxu0
        %595 = vmatprep.mubr.bf16.mxu0 0
        %596 = vmatmul.mubr.bf16.gmra.mxu0 %v482
        %v597 = vpop.f32.mrf.mxu0
        %v598 = vadd.f32 0.0, %v597
        %v599 = vpop.f32.mrf.mxu0
        %v600 = vpop.f32.mrf.mxu0
        %v601 = vadd.f32 0.0, %v600
        %v602 = vpop.f32.mrf.mxu0
        %603 = vmatprep.mubr.bf16.mxu0 0
        %604 = vmatmul.mubr.bf16.gmra.mxu0 %v485
        %v605 = vpop.f32.mrf.mxu0
        %v606 = vadd.f32 0.0, %v605
        %v607 = vpop.f32.mrf.mxu0
        %v608 = vpop.f32.mrf.mxu0
        %v609 = vadd.f32 0.0, %v608
        %v610 = vpop.f32.mrf.mxu0
        %611 = vmatprep.mubr.bf16.mxu0 0
        %612 = vmatmul.mubr.bf16.gmra.mxu0 %v488
        %v613 = vpop.f32.mrf.mxu0
        %v614 = vadd.f32 0.0, %v613
        %v615 = vpop.f32.mrf.mxu0
        %v616 = vpop.f32.mrf.mxu0
        %v617 = vadd.f32 0.0, %v616
        %v618 = vpop.f32.mrf.mxu0
        %619 = vmatprep.mubr.bf16.mxu0 0
        %620 = vmatmul.mubr.bf16.gmra.mxu0 %v491
        %v621 = vpop.f32.mrf.mxu0
        %v622 = vadd.f32 0.0, %v621
        %v623 = vpop.f32.mrf.mxu0
        %v624 = vpop.f32.mrf.mxu0
        %v625 = vadd.f32 0.0, %v624
        %v626 = vpop.f32.mrf.mxu0
        %627 = vmatprep.mubr.bf16.mxu0 0
        %628 = vmatmul.mubr.bf16.gmra.mxu0 %v494
        %v629 = vpop.f32.mrf.mxu0
        %v630 = vadd.f32 0.0, %v629
        %v631 = vpop.f32.mrf.mxu0
        %v632 = vpop.f32.mrf.mxu0
        %v633 = vadd.f32 0.0, %v632
        %v634 = vpop.f32.mrf.mxu0
        %635 = vmatprep.mubr.bf16.mxu0 0
        %636 = vmatmul.mubr.bf16.gmra.mxu0 %v497
        %v637 = vpop.f32.mrf.mxu0
        %v638 = vadd.f32 0.0, %v637
        %v639 = vpop.f32.mrf.mxu0
        %v640 = vpop.f32.mrf.mxu0
        %v641 = vadd.f32 0.0, %v640
        %v642 = vpop.f32.mrf.mxu0
        %643 = vmatprep.mubr.bf16.mxu0 0
        %644 = vmatmul.mubr.bf16.gmra.mxu0 %v500
        %v645 = vpop.f32.mrf.mxu0
        %v646 = vadd.f32 0.0, %v645
        %v647 = vpop.f32.mrf.mxu0
        %v648 = vpop.f32.mrf.mxu0
        %v649 = vadd.f32 0.0, %v648
        %v650 = vpop.f32.mrf.mxu0
        %651 = vmatprep.mubr.bf16.mxu0 0
        %652 = vmatmul.mubr.bf16.gmra.mxu0 %v503
        %v653 = vpop.f32.mrf.mxu0
        %v654 = vadd.f32 0.0, %v653
        %v655 = vpop.f32.mrf.mxu0
        %v656 = vpop.f32.mrf.mxu0
        %v657 = vadd.f32 0.0, %v656
        %v658 = vpop.f32.mrf.mxu0
        %659 = vmatprep.mubr.bf16.mxu0 0
        %660 = vmatmul.mubr.bf16.gmra.mxu0 %v506
        %v661 = vpop.f32.mrf.mxu0
        %v662 = vadd.f32 0.0, %v661
        %v663 = vpop.f32.mrf.mxu0
        %v664 = vpop.f32.mrf.mxu0
        %v665 = vadd.f32 0.0, %v664
        %v666 = vpop.f32.mrf.mxu0
        %667 = vmatprep.mubr.bf16.mxu0 0
        %668 = vmatmul.mubr.bf16.gmra.mxu0 %v509
        %v669 = vpop.f32.mrf.mxu0
        %v670 = vadd.f32 0.0, %v669
        %v671 = vpop.f32.mrf.mxu0
        %v672 = vpop.f32.mrf.mxu0
        %v673 = vadd.f32 0.0, %v672
        %v674 = vpop.f32.mrf.mxu0
        %675 = vdwg.mxu0
        %676 = vst [vmem:[#allocation2] sm:$0xff] %v550
        %677 = vst [vmem:[#allocation2 + $0x8] sm:$0xff] %v553
        %678 = vst [vmem:[#allocation2 + $0x10] sm:$0xff] %v558
        %679 = vst [vmem:[#allocation2 + $0x18] sm:$0xff] %v561
        %680 = vst [vmem:[#allocation2 + $0x20] sm:$0xff] %v566
        %681 = vst [vmem:[#allocation2 + $0x28] sm:$0xff] %v569
        %682 = vst [vmem:[#allocation2 + $0x30] sm:$0xff] %v574
        %683 = vst [vmem:[#allocation2 + $0x38] sm:$0xff] %v577
        %684 = vst [vmem:[#allocation2 + $0x40] sm:$0xff] %v582
        %685 = vst [vmem:[#allocation2 + $0x48] sm:$0xff] %v585
        %686 = vst [vmem:[#allocation2 + $0x50] sm:$0xff] %v590
        %687 = vst [vmem:[#allocation2 + $0x58] sm:$0xff] %v593
        %688 = vst [vmem:[#allocation2 + $0x60] sm:$0xff] %v598
        %689 = vst [vmem:[#allocation2 + $0x68] sm:$0xff] %v601
        %690 = vst [vmem:[#allocation2 + $0x70] sm:$0xff] %v606
        %691 = vst [vmem:[#allocation2 + $0x78] sm:$0xff] %v609
        %692 = vst [vmem:[#allocation2 + $0x80] sm:$0xff] %v614
        %693 = vst [vmem:[#allocation2 + $0x88] sm:$0xff] %v617
        %694 = vst [vmem:[#allocation2 + $0x90] sm:$0xff] %v622
        %695 = vst [vmem:[#allocation2 + $0x98] sm:$0xff] %v625
        %696 = vst [vmem:[#allocation2 + $0xa0] sm:$0xff] %v630
        %697 = vst [vmem:[#allocation2 + $0xa8] sm:$0xff] %v633
        %698 = vst [vmem:[#allocation2 + $0xb0] sm:$0xff] %v638
        %699 = vst [vmem:[#allocation2 + $0xb8] sm:$0xff] %v641
        %700 = vst [vmem:[#allocation2 + $0xc0] sm:$0xff] %v646
        %701 = vst [vmem:[#allocation2 + $0xc8] sm:$0xff] %v649
        %702 = vst [vmem:[#allocation2 + $0xd0] sm:$0xff] %v654
        %703 = vst [vmem:[#allocation2 + $0xd8] sm:$0xff] %v657
        %704 = vst [vmem:[#allocation2 + $0xe0] sm:$0xff] %v662
        %705 = vst [vmem:[#allocation2 + $0xe8] sm:$0xff] %v665
        %706 = vst [vmem:[#allocation2 + $0xf0] sm:$0xff] %v670
        %707 = vst [vmem:[#allocation2 + $0xf8] sm:$0xff] %v673
        %s708 = scalar_lea.vmem %s343, 4
        %v709 = vld [vmem:[%s708] sm:$0xf]
        %v710 = vld [vmem:[%s318] sm:$0xf]
        %v711 = vld [vmem:[%s318 + $0x4] sm:$0xf]
        %v712 = vld [vmem:[%s318 + $0x8] sm:$0x1]
        %v713 = vld [vmem:[%s318 + $0xc] sm:$0xf]
        %v714 = vld [vmem:[%s318 + $0x10] sm:$0xf]
        %v715 = vld [vmem:[%s318 + $0x14] sm:$0x1]
        %v716 = vld [vmem:[%s318 + $0x18] sm:$0xf]
        %v717 = vld [vmem:[%s318 + $0x1c] sm:$0xf]
        %v718 = vld [vmem:[%s318 + $0x20] sm:$0x1]
        %v719 = vld [vmem:[%s318 + $0x24] sm:$0xf]
        %v720 = vld [vmem:[%s318 + $0x28] sm:$0xf]
        %v721 = vld [vmem:[%s318 + $0x2c] sm:$0x1]
        %v722 = vld [vmem:[%s318 + $0x30] sm:$0xf]
        %v723 = vld [vmem:[%s318 + $0x34] sm:$0xf]
        %v724 = vld [vmem:[%s318 + $0x38] sm:$0x1]
        %v725 = vld [vmem:[%s318 + $0x3c] sm:$0xf]
        %v726 = vld [vmem:[%s318 + $0x40] sm:$0xf]
        %v727 = vld [vmem:[%s318 + $0x44] sm:$0x1]
        %v728 = vld [vmem:[%s318 + $0x48] sm:$0xf]
        %v729 = vld [vmem:[%s318 + $0x4c] sm:$0xf]
        %v730 = vld [vmem:[%s318 + $0x50] sm:$0x1]
        %v731 = vld [vmem:[%s318 + $0x54] sm:$0xf]
        %v732 = vld [vmem:[%s318 + $0x58] sm:$0xf]
        %v733 = vld [vmem:[%s318 + $0x5c] sm:$0x1]
        %v734 = vld [vmem:[%s318 + $0x60] sm:$0xf]
        %v735 = vld [vmem:[%s318 + $0x64] sm:$0xf]
        %v736 = vld [vmem:[%s318 + $0x68] sm:$0x1]
        %v737 = vld [vmem:[%s318 + $0x6c] sm:$0xf]
        %v738 = vld [vmem:[%s318 + $0x70] sm:$0xf]
        %v739 = vld [vmem:[%s318 + $0x74] sm:$0x1]
        %v740 = vld [vmem:[%s318 + $0x78] sm:$0xf]
        %v741 = vld [vmem:[%s318 + $0x7c] sm:$0xf]
        %v742 = vld [vmem:[%s318 + $0x80] sm:$0x1]
        %v743 = vld [vmem:[%s318 + $0x84] sm:$0xf]
        %v744 = vld [vmem:[%s318 + $0x88] sm:$0xf]
        %v745 = vld [vmem:[%s318 + $0x8c] sm:$0x1]
        %v746 = vld [vmem:[%s318 + $0x90] sm:$0xf]
        %v747 = vld [vmem:[%s318 + $0x94] sm:$0xf]
        %v748 = vld [vmem:[%s318 + $0x98] sm:$0x1]
        %v749 = vld [vmem:[%s318 + $0x9c] sm:$0xf]
        %v750 = vld [vmem:[%s318 + $0xa0] sm:$0xf]
        %v751 = vld [vmem:[%s318 + $0xa4] sm:$0x1]
        %v752 = vld [vmem:[%s318 + $0xa8] sm:$0xf]
        %v753 = vld [vmem:[%s318 + $0xac] sm:$0xf]
        %v754 = vld [vmem:[%s318 + $0xb0] sm:$0x1]
        %v755 = vld [vmem:[%s318 + $0xb4] sm:$0xf]
        %v756 = vld [vmem:[%s318 + $0xb8] sm:$0xf]
        %v757 = vld [vmem:[%s318 + $0xbc] sm:$0x1]
        %vm758 = vsmask.f32 3328
        %vm759 = vsmask.f32 7440
        %vm760 = vmor %vm758, %vm759
        %v762 = vshrl.u32 %v710, 16
        %v764 = vrot.slane %v762, 4
        %v765 = vshll.u32 %v710, 16
        %v767 = vrot.slane %v765, 5
        %v768 = vor.u32 %v764, %v767
        %v769 = vrot.slane %v768, 4
        %v771 = vshll.u32 %v711, 16
        %v773 = vrot.slane %v771, 5
        %v774 = vsel %vm760, %v769, %v773
        %v775 = vshrl.u32 %v711, 16
        %v777 = vrot.slane %v775, 4
        %v778 = vor.u32 %v777, %v773
        %v779 = vrot.slane %v778, 4
        %v781 = vshll.u32 %v712, 16
        %v783 = vrot.slane %v781, 5
        %v784 = vsel %vm760, %v779, %v783
        %v786 = vshrl.u32 %v713, 16
        %v788 = vrot.slane %v786, 4
        %v789 = vshll.u32 %v713, 16
        %v791 = vrot.slane %v789, 5
        %v792 = vor.u32 %v788, %v791
        %v793 = vrot.slane %v792, 4
        %v795 = vshll.u32 %v714, 16
        %v797 = vrot.slane %v795, 5
        %v798 = vsel %vm760, %v793, %v797
        %v799 = vshrl.u32 %v714, 16
        %v801 = vrot.slane %v799, 4
        %v802 = vor.u32 %v801, %v797
        %v803 = vrot.slane %v802, 4
        %v805 = vshll.u32 %v715, 16
        %v807 = vrot.slane %v805, 5
        %v808 = vsel %vm760, %v803, %v807
        %v810 = vshrl.u32 %v716, 16
        %v812 = vrot.slane %v810, 4
        %v813 = vshll.u32 %v716, 16
        %v815 = vrot.slane %v813, 5
        %v816 = vor.u32 %v812, %v815
        %v817 = vrot.slane %v816, 4
        %v819 = vshll.u32 %v717, 16
        %v821 = vrot.slane %v819, 5
        %v822 = vsel %vm760, %v817, %v821
        %v823 = vshrl.u32 %v717, 16
        %v825 = vrot.slane %v823, 4
        %v826 = vor.u32 %v825, %v821
        %v827 = vrot.slane %v826, 4
        %v829 = vshll.u32 %v718, 16
        %v831 = vrot.slane %v829, 5
        %v832 = vsel %vm760, %v827, %v831
        %v834 = vshrl.u32 %v719, 16
        %v836 = vrot.slane %v834, 4
        %v837 = vshll.u32 %v719, 16
        %v839 = vrot.slane %v837, 5
        %v840 = vor.u32 %v836, %v839
        %v841 = vrot.slane %v840, 4
        %v843 = vshll.u32 %v720, 16
        %v845 = vrot.slane %v843, 5
        %v846 = vsel %vm760, %v841, %v845
        %v847 = vshrl.u32 %v720, 16
        %v849 = vrot.slane %v847, 4
        %v850 = vor.u32 %v849, %v845
        %v851 = vrot.slane %v850, 4
        %v853 = vshll.u32 %v721, 16
        %v855 = vrot.slane %v853, 5
        %v856 = vsel %vm760, %v851, %v855
        %v858 = vshrl.u32 %v722, 16
        %v860 = vrot.slane %v858, 4
        %v861 = vshll.u32 %v722, 16
        %v863 = vrot.slane %v861, 5
        %v864 = vor.u32 %v860, %v863
        %v865 = vrot.slane %v864, 4
        %v867 = vshll.u32 %v723, 16
        %v869 = vrot.slane %v867, 5
        %v870 = vsel %vm760, %v865, %v869
        %v871 = vshrl.u32 %v723, 16
        %v873 = vrot.slane %v871, 4
        %v874 = vor.u32 %v873, %v869
        %v875 = vrot.slane %v874, 4
        %v877 = vshll.u32 %v724, 16
        %v879 = vrot.slane %v877, 5
        %v880 = vsel %vm760, %v875, %v879
        %v882 = vshrl.u32 %v725, 16
        %v884 = vrot.slane %v882, 4
        %v885 = vshll.u32 %v725, 16
        %v887 = vrot.slane %v885, 5
        %v888 = vor.u32 %v884, %v887
        %v889 = vrot.slane %v888, 4
        %v891 = vshll.u32 %v726, 16
        %v893 = vrot.slane %v891, 5
        %v894 = vsel %vm760, %v889, %v893
        %v895 = vshrl.u32 %v726, 16
        %v897 = vrot.slane %v895, 4
        %v898 = vor.u32 %v897, %v893
        %v899 = vrot.slane %v898, 4
        %v901 = vshll.u32 %v727, 16
        %v903 = vrot.slane %v901, 5
        %v904 = vsel %vm760, %v899, %v903
        %v906 = vshrl.u32 %v728, 16
        %v908 = vrot.slane %v906, 4
        %v909 = vshll.u32 %v728, 16
        %v911 = vrot.slane %v909, 5
        %v912 = vor.u32 %v908, %v911
        %v913 = vrot.slane %v912, 4
        %v915 = vshll.u32 %v729, 16
        %v917 = vrot.slane %v915, 5
        %v918 = vsel %vm760, %v913, %v917
        %v919 = vshrl.u32 %v729, 16
        %v921 = vrot.slane %v919, 4
        %v922 = vor.u32 %v921, %v917
        %v923 = vrot.slane %v922, 4
        %v925 = vshll.u32 %v730, 16
        %v927 = vrot.slane %v925, 5
        %v928 = vsel %vm760, %v923, %v927
        %v930 = vshrl.u32 %v731, 16
        %v932 = vrot.slane %v930, 4
        %v933 = vshll.u32 %v731, 16
        %v935 = vrot.slane %v933, 5
        %v936 = vor.u32 %v932, %v935
        %v937 = vrot.slane %v936, 4
        %v939 = vshll.u32 %v732, 16
        %v941 = vrot.slane %v939, 5
        %v942 = vsel %vm760, %v937, %v941
        %v943 = vshrl.u32 %v732, 16
        %v945 = vrot.slane %v943, 4
        %v946 = vor.u32 %v945, %v941
        %v947 = vrot.slane %v946, 4
        %v949 = vshll.u32 %v733, 16
        %v951 = vrot.slane %v949, 5
        %v952 = vsel %vm760, %v947, %v951
        %v954 = vshrl.u32 %v734, 16
        %v956 = vrot.slane %v954, 4
        %v957 = vshll.u32 %v734, 16
        %v959 = vrot.slane %v957, 5
        %v960 = vor.u32 %v956, %v959
        %v961 = vrot.slane %v960, 4
        %v963 = vshll.u32 %v735, 16
        %v965 = vrot.slane %v963, 5
        %v966 = vsel %vm760, %v961, %v965
        %v967 = vshrl.u32 %v735, 16
        %v969 = vrot.slane %v967, 4
        %v970 = vor.u32 %v969, %v965
        %v971 = vrot.slane %v970, 4
        %v973 = vshll.u32 %v736, 16
        %v975 = vrot.slane %v973, 5
        %v976 = vsel %vm760, %v971, %v975
        %v978 = vshrl.u32 %v737, 16
        %v980 = vrot.slane %v978, 4
        %v981 = vshll.u32 %v737, 16
        %v983 = vrot.slane %v981, 5
        %v984 = vor.u32 %v980, %v983
        %v985 = vrot.slane %v984, 4
        %v987 = vshll.u32 %v738, 16
        %v989 = vrot.slane %v987, 5
        %v990 = vsel %vm760, %v985, %v989
        %v991 = vshrl.u32 %v738, 16
        %v993 = vrot.slane %v991, 4
        %v994 = vor.u32 %v993, %v989
        %v995 = vrot.slane %v994, 4
        %v997 = vshll.u32 %v739, 16
        %v999 = vrot.slane %v997, 5
        %v1000 = vsel %vm760, %v995, %v999
        %v1002 = vshrl.u32 %v740, 16
        %v1004 = vrot.slane %v1002, 4
        %v1005 = vshll.u32 %v740, 16
        %v1007 = vrot.slane %v1005, 5
        %v1008 = vor.u32 %v1004, %v1007
        %v1009 = vrot.slane %v1008, 4
        %v1011 = vshll.u32 %v741, 16
        %v1013 = vrot.slane %v1011, 5
        %v1014 = vsel %vm760, %v1009, %v1013
        %v1015 = vshrl.u32 %v741, 16
        %v1017 = vrot.slane %v1015, 4
        %v1018 = vor.u32 %v1017, %v1013
        %v1019 = vrot.slane %v1018, 4
        %v1021 = vshll.u32 %v742, 16
        %v1023 = vrot.slane %v1021, 5
        %v1024 = vsel %vm760, %v1019, %v1023
        %v1026 = vshrl.u32 %v743, 16
        %v1028 = vrot.slane %v1026, 4
        %v1029 = vshll.u32 %v743, 16
        %v1031 = vrot.slane %v1029, 5
        %v1032 = vor.u32 %v1028, %v1031
        %v1033 = vrot.slane %v1032, 4
        %v1035 = vshll.u32 %v744, 16
        %v1037 = vrot.slane %v1035, 5
        %v1038 = vsel %vm760, %v1033, %v1037
        %v1039 = vshrl.u32 %v744, 16
        %v1041 = vrot.slane %v1039, 4
        %v1042 = vor.u32 %v1041, %v1037
        %v1043 = vrot.slane %v1042, 4
        %v1045 = vshll.u32 %v745, 16
        %v1047 = vrot.slane %v1045, 5
        %v1048 = vsel %vm760, %v1043, %v1047
        %v1050 = vshrl.u32 %v746, 16
        %v1052 = vrot.slane %v1050, 4
        %v1053 = vshll.u32 %v746, 16
        %v1055 = vrot.slane %v1053, 5
        %v1056 = vor.u32 %v1052, %v1055
        %v1057 = vrot.slane %v1056, 4
        %v1059 = vshll.u32 %v747, 16
        %v1061 = vrot.slane %v1059, 5
        %v1062 = vsel %vm760, %v1057, %v1061
        %v1063 = vshrl.u32 %v747, 16
        %v1065 = vrot.slane %v1063, 4
        %v1066 = vor.u32 %v1065, %v1061
        %v1067 = vrot.slane %v1066, 4
        %v1069 = vshll.u32 %v748, 16
        %v1071 = vrot.slane %v1069, 5
        %v1072 = vsel %vm760, %v1067, %v1071
        %v1074 = vshrl.u32 %v749, 16
        %v1076 = vrot.slane %v1074, 4
        %v1077 = vshll.u32 %v749, 16
        %v1079 = vrot.slane %v1077, 5
        %v1080 = vor.u32 %v1076, %v1079
        %v1081 = vrot.slane %v1080, 4
        %v1083 = vshll.u32 %v750, 16
        %v1085 = vrot.slane %v1083, 5
        %v1086 = vsel %vm760, %v1081, %v1085
        %v1087 = vshrl.u32 %v750, 16
        %v1089 = vrot.slane %v1087, 4
        %v1090 = vor.u32 %v1089, %v1085
        %v1091 = vrot.slane %v1090, 4
        %v1093 = vshll.u32 %v751, 16
        %v1095 = vrot.slane %v1093, 5
        %v1096 = vsel %vm760, %v1091, %v1095
        %v1098 = vshrl.u32 %v752, 16
        %v1100 = vrot.slane %v1098, 4
        %v1101 = vshll.u32 %v752, 16
        %v1103 = vrot.slane %v1101, 5
        %v1104 = vor.u32 %v1100, %v1103
        %v1105 = vrot.slane %v1104, 4
        %v1107 = vshll.u32 %v753, 16
        %v1109 = vrot.slane %v1107, 5
        %v1110 = vsel %vm760, %v1105, %v1109
        %v1111 = vshrl.u32 %v753, 16
        %v1113 = vrot.slane %v1111, 4
        %v1114 = vor.u32 %v1113, %v1109
        %v1115 = vrot.slane %v1114, 4
        %v1117 = vshll.u32 %v754, 16
        %v1119 = vrot.slane %v1117, 5
        %v1120 = vsel %vm760, %v1115, %v1119
        %v1122 = vshrl.u32 %v755, 16
        %v1124 = vrot.slane %v1122, 4
        %v1125 = vshll.u32 %v755, 16
        %v1127 = vrot.slane %v1125, 5
        %v1128 = vor.u32 %v1124, %v1127
        %v1129 = vrot.slane %v1128, 4
        %v1131 = vshll.u32 %v756, 16
        %v1133 = vrot.slane %v1131, 5
        %v1134 = vsel %vm760, %v1129, %v1133
        %v1135 = vshrl.u32 %v756, 16
        %v1137 = vrot.slane %v1135, 4
        %v1138 = vor.u32 %v1137, %v1133
        %v1139 = vrot.slane %v1138, 4
        %v1141 = vshll.u32 %v757, 16
        %v1143 = vrot.slane %v1141, 5
        %v1144 = vsel %vm760, %v1139, %v1143
        %v1145 = vunpack.c.l.b16 %v774
        %v1146 = vunpack.c.l.b16 %v784
        %v1147 = vunpack.c.l.b16 %v798
        %v1148 = vunpack.c.l.b16 %v808
        %v1149 = vunpack.c.l.b16 %v822
        %v1150 = vunpack.c.l.b16 %v832
        %v1151 = vunpack.c.l.b16 %v846
        %v1152 = vunpack.c.l.b16 %v856
        %v1153 = vunpack.c.l.b16 %v870
        %v1154 = vunpack.c.l.b16 %v880
        %v1155 = vunpack.c.l.b16 %v894
        %v1156 = vunpack.c.l.b16 %v904
        %v1157 = vunpack.c.l.b16 %v918
        %v1158 = vunpack.c.l.b16 %v928
        %v1159 = vunpack.c.l.b16 %v942
        %v1160 = vunpack.c.l.b16 %v952
        %v1161 = vunpack.c.l.b16 %v966
        %v1162 = vunpack.c.l.b16 %v976
        %v1163 = vunpack.c.l.b16 %v990
        %v1164 = vunpack.c.l.b16 %v1000
        %v1165 = vunpack.c.l.b16 %v1014
        %v1166 = vunpack.c.l.b16 %v1024
        %v1167 = vunpack.c.l.b16 %v1038
        %v1168 = vunpack.c.l.b16 %v1048
        %v1169 = vunpack.c.l.b16 %v1062
        %v1170 = vunpack.c.l.b16 %v1072
        %v1171 = vunpack.c.l.b16 %v1086
        %v1172 = vunpack.c.l.b16 %v1096
        %v1173 = vunpack.c.l.b16 %v1110
        %v1174 = vunpack.c.l.b16 %v1120
        %v1175 = vunpack.c.l.b16 %v1134
        %v1176 = vunpack.c.l.b16 %v1144
        %v1177 = vpack.c.b16 %v1146, %v1145
        %v1178 = vpack.c.b16 %v1148, %v1147
        %v1179 = vpack.c.b16 %v1150, %v1149
        %v1180 = vpack.c.b16 %v1152, %v1151
        %v1181 = vpack.c.b16 %v1154, %v1153
        %v1182 = vpack.c.b16 %v1156, %v1155
        %v1183 = vpack.c.b16 %v1158, %v1157
        %v1184 = vpack.c.b16 %v1160, %v1159
        %v1185 = vpack.c.b16 %v1162, %v1161
        %v1186 = vpack.c.b16 %v1164, %v1163
        %v1187 = vpack.c.b16 %v1166, %v1165
        %v1188 = vpack.c.b16 %v1168, %v1167
        %v1189 = vpack.c.b16 %v1170, %v1169
        %v1190 = vpack.c.b16 %v1172, %v1171
        %v1191 = vpack.c.b16 %v1174, %v1173
        %v1192 = vpack.c.b16 %v1176, %v1175
        %v1194 = vsel %vm462, %v1177, 0
        %v1197 = vsel %vm462, %v1178, 0
        %v1200 = vsel %vm462, %v1179, 0
        %v1203 = vsel %vm462, %v1180, 0
        %v1206 = vsel %vm462, %v1181, 0
        %v1209 = vsel %vm462, %v1182, 0
        %v1212 = vsel %vm462, %v1183, 0
        %v1215 = vsel %vm462, %v1184, 0
        %v1218 = vsel %vm462, %v1185, 0
        %v1221 = vsel %vm462, %v1186, 0
        %v1224 = vsel %vm462, %v1187, 0
        %v1227 = vsel %vm462, %v1188, 0
        %v1230 = vsel %vm462, %v1189, 0
        %v1233 = vsel %vm462, %v1190, 0
        %v1236 = vsel %vm462, %v1191, 0
        %v1239 = vsel %vm462, %v1192, 0
        %v1242 = vsel %vm511, %v709, 0
        %1244 = vmatprep.subr.bf16.mxu0 0
        %1245 = vmatpush1.bf16.msra.mxu0 0
        %1246 = vmatprep.subr.bf16.mxu0 0
        %1247 = vmatpush1.bf16.msra.mxu0 0
        %1248 = vmatprep.subr.bf16.mxu0 0
        %1249 = vmatpush1.bf16.msra.mxu0 0
        %1250 = vmatprep.subr.bf16.mxu0 0
        %1251 = vmatpush1.bf16.msra.mxu0 0
        %1252 = vmatprep.subr.bf16.mxu0 0
        %1253 = vmatpush1.bf16.msra.mxu0 0
        %1254 = vmatprep.subr.bf16.mxu0 0
        %1255 = vmatpush1.bf16.msra.mxu0 0
        %1256 = vmatprep.subr.bf16.mxu0 0
        %1257 = vmatpush1.bf16.msra.mxu0 0
        %1258 = vmatprep.subr.bf16.mxu0 0
        %1259 = vmatpush1.bf16.msra.mxu0 %v1242
        %1260 = vmatprep.subr.bf16.mxu0 0
        %1261 = vmatpush2.bf16.msra.mxu0 0
        %1262 = vmatprep.subr.bf16.mxu0 0
        %1263 = vmatpush2.bf16.msra.mxu0 0
        %1264 = vmatprep.subr.bf16.mxu0 0
        %1265 = vmatpush2.bf16.msra.mxu0 0
        %1266 = vmatprep.subr.bf16.mxu0 0
        %1267 = vmatpush2.bf16.msra.mxu0 0
        %1268 = vmatprep.subr.bf16.mxu0 0
        %1269 = vmatpush2.bf16.msra.mxu0 0
        %1270 = vmatprep.subr.bf16.mxu0 0
        %1271 = vmatpush2.bf16.msra.mxu0 0
        %1272 = vmatprep.subr.bf16.mxu0 0
        %1273 = vmatpush2.bf16.msra.mxu0 0
        %1274 = vmatprep.subr.bf16.mxu0 0
        %1275 = vmatpush2.bf16.msra.mxu0 0
        %1276 = vmatprep.mubr.bf16.mxu0 0
        %1277 = vmatmul.mubr.bf16.gmra.mxu0 %v1194
        %v1278 = vpop.f32.mrf.mxu0
        %v1279 = vadd.f32 0.0, %v1278
        %v1280 = vpop.f32.mrf.mxu0
        %v1281 = vpop.f32.mrf.mxu0
        %v1282 = vadd.f32 0.0, %v1281
        %v1283 = vpop.f32.mrf.mxu0
        %1284 = vmatprep.mubr.bf16.mxu0 0
        %1285 = vmatmul.mubr.bf16.gmra.mxu0 %v1197
        %v1286 = vpop.f32.mrf.mxu0
        %v1287 = vadd.f32 0.0, %v1286
        %v1288 = vpop.f32.mrf.mxu0
        %v1289 = vpop.f32.mrf.mxu0
        %v1290 = vadd.f32 0.0, %v1289
        %v1291 = vpop.f32.mrf.mxu0
        %1292 = vmatprep.mubr.bf16.mxu0 0
        %1293 = vmatmul.mubr.bf16.gmra.mxu0 %v1200
        %v1294 = vpop.f32.mrf.mxu0
        %v1295 = vadd.f32 0.0, %v1294
        %v1296 = vpop.f32.mrf.mxu0
        %v1297 = vpop.f32.mrf.mxu0
        %v1298 = vadd.f32 0.0, %v1297
        %v1299 = vpop.f32.mrf.mxu0
        %1300 = vmatprep.mubr.bf16.mxu0 0
        %1301 = vmatmul.mubr.bf16.gmra.mxu0 %v1203
        %v1302 = vpop.f32.mrf.mxu0
        %v1303 = vadd.f32 0.0, %v1302
        %v1304 = vpop.f32.mrf.mxu0
        %v1305 = vpop.f32.mrf.mxu0
        %v1306 = vadd.f32 0.0, %v1305
        %v1307 = vpop.f32.mrf.mxu0
        %1308 = vmatprep.mubr.bf16.mxu0 0
        %1309 = vmatmul.mubr.bf16.gmra.mxu0 %v1206
        %v1310 = vpop.f32.mrf.mxu0
        %v1311 = vadd.f32 0.0, %v1310
        %v1312 = vpop.f32.mrf.mxu0
        %v1313 = vpop.f32.mrf.mxu0
        %v1314 = vadd.f32 0.0, %v1313
        %v1315 = vpop.f32.mrf.mxu0
        %1316 = vmatprep.mubr.bf16.mxu0 0
        %1317 = vmatmul.mubr.bf16.gmra.mxu0 %v1209
        %v1318 = vpop.f32.mrf.mxu0
        %v1319 = vadd.f32 0.0, %v1318
        %v1320 = vpop.f32.mrf.mxu0
        %v1321 = vpop.f32.mrf.mxu0
        %v1322 = vadd.f32 0.0, %v1321
        %v1323 = vpop.f32.mrf.mxu0
        %1324 = vmatprep.mubr.bf16.mxu0 0
        %1325 = vmatmul.mubr.bf16.gmra.mxu0 %v1212
        %v1326 = vpop.f32.mrf.mxu0
        %v1327 = vadd.f32 0.0, %v1326
        %v1328 = vpop.f32.mrf.mxu0
        %v1329 = vpop.f32.mrf.mxu0
        %v1330 = vadd.f32 0.0, %v1329
        %v1331 = vpop.f32.mrf.mxu0
        %1332 = vmatprep.mubr.bf16.mxu0 0
        %1333 = vmatmul.mubr.bf16.gmra.mxu0 %v1215
        %v1334 = vpop.f32.mrf.mxu0
        %v1335 = vadd.f32 0.0, %v1334
        %v1336 = vpop.f32.mrf.mxu0
        %v1337 = vpop.f32.mrf.mxu0
        %v1338 = vadd.f32 0.0, %v1337
        %v1339 = vpop.f32.mrf.mxu0
        %1340 = vmatprep.mubr.bf16.mxu0 0
        %1341 = vmatmul.mubr.bf16.gmra.mxu0 %v1218
        %v1342 = vpop.f32.mrf.mxu0
        %v1343 = vadd.f32 0.0, %v1342
        %v1344 = vpop.f32.mrf.mxu0
        %v1345 = vpop.f32.mrf.mxu0
        %v1346 = vadd.f32 0.0, %v1345
        %v1347 = vpop.f32.mrf.mxu0
        %1348 = vmatprep.mubr.bf16.mxu0 0
        %1349 = vmatmul.mubr.bf16.gmra.mxu0 %v1221
        %v1350 = vpop.f32.mrf.mxu0
        %v1351 = vadd.f32 0.0, %v1350
        %v1352 = vpop.f32.mrf.mxu0
        %v1353 = vpop.f32.mrf.mxu0
        %v1354 = vadd.f32 0.0, %v1353
        %v1355 = vpop.f32.mrf.mxu0
        %1356 = vmatprep.mubr.bf16.mxu0 0
        %1357 = vmatmul.mubr.bf16.gmra.mxu0 %v1224
        %v1358 = vpop.f32.mrf.mxu0
        %v1359 = vadd.f32 0.0, %v1358
        %v1360 = vpop.f32.mrf.mxu0
        %v1361 = vpop.f32.mrf.mxu0
        %v1362 = vadd.f32 0.0, %v1361
        %v1363 = vpop.f32.mrf.mxu0
        %1364 = vmatprep.mubr.bf16.mxu0 0
        %1365 = vmatmul.mubr.bf16.gmra.mxu0 %v1227
        %v1366 = vpop.f32.mrf.mxu0
        %v1367 = vadd.f32 0.0, %v1366
        %v1368 = vpop.f32.mrf.mxu0
        %v1369 = vpop.f32.mrf.mxu0
        %v1370 = vadd.f32 0.0, %v1369
        %v1371 = vpop.f32.mrf.mxu0
        %1372 = vmatprep.mubr.bf16.mxu0 0
        %1373 = vmatmul.mubr.bf16.gmra.mxu0 %v1230
        %v1374 = vpop.f32.mrf.mxu0
        %v1375 = vadd.f32 0.0, %v1374
        %v1376 = vpop.f32.mrf.mxu0
        %v1377 = vpop.f32.mrf.mxu0
        %v1378 = vadd.f32 0.0, %v1377
        %v1379 = vpop.f32.mrf.mxu0
        %1380 = vmatprep.mubr.bf16.mxu0 0
        %1381 = vmatmul.mubr.bf16.gmra.mxu0 %v1233
        %v1382 = vpop.f32.mrf.mxu0
        %v1383 = vadd.f32 0.0, %v1382
        %v1384 = vpop.f32.mrf.mxu0
        %v1385 = vpop.f32.mrf.mxu0
        %v1386 = vadd.f32 0.0, %v1385
        %v1387 = vpop.f32.mrf.mxu0
        %1388 = vmatprep.mubr.bf16.mxu0 0
        %1389 = vmatmul.mubr.bf16.gmra.mxu0 %v1236
        %v1390 = vpop.f32.mrf.mxu0
        %v1391 = vadd.f32 0.0, %v1390
        %v1392 = vpop.f32.mrf.mxu0
        %v1393 = vpop.f32.mrf.mxu0
        %v1394 = vadd.f32 0.0, %v1393
        %v1395 = vpop.f32.mrf.mxu0
        %1396 = vmatprep.mubr.bf16.mxu0 0
        %1397 = vmatmul.mubr.bf16.gmra.mxu0 %v1239
        %v1398 = vpop.f32.mrf.mxu0
        %v1399 = vadd.f32 0.0, %v1398
        %v1400 = vpop.f32.mrf.mxu0
        %v1401 = vpop.f32.mrf.mxu0
        %v1402 = vadd.f32 0.0, %v1401
        %v1403 = vpop.f32.mrf.mxu0
        %1404 = vdwg.mxu0
        %v1405 = vld [vmem:[#allocation2] sm:$0xff]
        %v1406 = vld [vmem:[#allocation2 + $0x8] sm:$0xff]
        %v1407 = vld [vmem:[#allocation2 + $0x10] sm:$0xff]
        %v1408 = vld [vmem:[#allocation2 + $0x18] sm:$0xff]
        %v1409 = vld [vmem:[#allocation2 + $0x20] sm:$0xff]
        %v1410 = vld [vmem:[#allocation2 + $0x28] sm:$0xff]
        %v1411 = vld [vmem:[#allocation2 + $0x30] sm:$0xff]
        %v1412 = vld [vmem:[#allocation2 + $0x38] sm:$0xff]
        %v1413 = vld [vmem:[#allocation2 + $0x40] sm:$0xff]
        %v1414 = vld [vmem:[#allocation2 + $0x48] sm:$0xff]
        %v1415 = vld [vmem:[#allocation2 + $0x50] sm:$0xff]
        %v1416 = vld [vmem:[#allocation2 + $0x58] sm:$0xff]
        %v1417 = vld [vmem:[#allocation2 + $0x60] sm:$0xff]
        %v1418 = vld [vmem:[#allocation2 + $0x68] sm:$0xff]
        %v1419 = vld [vmem:[#allocation2 + $0x70] sm:$0xff]
        %v1420 = vld [vmem:[#allocation2 + $0x78] sm:$0xff]
        %v1421 = vld [vmem:[#allocation2 + $0x80] sm:$0xff]
        %v1422 = vld [vmem:[#allocation2 + $0x88] sm:$0xff]
        %v1423 = vld [vmem:[#allocation2 + $0x90] sm:$0xff]
        %v1424 = vld [vmem:[#allocation2 + $0x98] sm:$0xff]
        %v1425 = vld [vmem:[#allocation2 + $0xa0] sm:$0xff]
        %v1426 = vld [vmem:[#allocation2 + $0xa8] sm:$0xff]
        %v1427 = vld [vmem:[#allocation2 + $0xb0] sm:$0xff]
        %v1428 = vld [vmem:[#allocation2 + $0xb8] sm:$0xff]
        %v1429 = vld [vmem:[#allocation2 + $0xc0] sm:$0xff]
        %v1430 = vld [vmem:[#allocation2 + $0xc8] sm:$0xff]
        %v1431 = vld [vmem:[#allocation2 + $0xd0] sm:$0xff]
        %v1432 = vld [vmem:[#allocation2 + $0xd8] sm:$0xff]
        %v1433 = vld [vmem:[#allocation2 + $0xe0] sm:$0xff]
        %v1434 = vld [vmem:[#allocation2 + $0xe8] sm:$0xff]
        %v1435 = vld [vmem:[#allocation2 + $0xf0] sm:$0xff]
        %v1436 = vld [vmem:[#allocation2 + $0xf8] sm:$0xff]
        %v1437 = vadd.f32 %v1405, %v1279
        %v1438 = vadd.f32 %v1406, %v1282
        %v1439 = vadd.f32 %v1407, %v1287
        %v1440 = vadd.f32 %v1408, %v1290
        %v1441 = vadd.f32 %v1409, %v1295
        %v1442 = vadd.f32 %v1410, %v1298
        %v1443 = vadd.f32 %v1411, %v1303
        %v1444 = vadd.f32 %v1412, %v1306
        %v1445 = vadd.f32 %v1413, %v1311
        %v1446 = vadd.f32 %v1414, %v1314
        %v1447 = vadd.f32 %v1415, %v1319
        %v1448 = vadd.f32 %v1416, %v1322
        %v1449 = vadd.f32 %v1417, %v1327
        %v1450 = vadd.f32 %v1418, %v1330
        %v1451 = vadd.f32 %v1419, %v1335
        %v1452 = vadd.f32 %v1420, %v1338
        %v1453 = vadd.f32 %v1421, %v1343
        %v1454 = vadd.f32 %v1422, %v1346
        %v1455 = vadd.f32 %v1423, %v1351
        %v1456 = vadd.f32 %v1424, %v1354
        %v1457 = vadd.f32 %v1425, %v1359
        %v1458 = vadd.f32 %v1426, %v1362
        %v1459 = vadd.f32 %v1427, %v1367
        %v1460 = vadd.f32 %v1428, %v1370
        %v1461 = vadd.f32 %v1429, %v1375
        %v1462 = vadd.f32 %v1430, %v1378
        %v1463 = vadd.f32 %v1431, %v1383
        %v1464 = vadd.f32 %v1432, %v1386
        %v1465 = vadd.f32 %v1433, %v1391
        %v1466 = vadd.f32 %v1434, %v1394
        %v1467 = vadd.f32 %v1435, %v1399
        %v1468 = vadd.f32 %v1436, %v1402
        %1469 = vst [vmem:[#allocation2] sm:$0xff] %v1437
        %1470 = vst [vmem:[#allocation2 + $0x8] sm:$0xff] %v1438
        %1471 = vst [vmem:[#allocation2 + $0x10] sm:$0xff] %v1439
        %1472 = vst [vmem:[#allocation2 + $0x18] sm:$0xff] %v1440
        %1473 = vst [vmem:[#allocation2 + $0x20] sm:$0xff] %v1441
        %1474 = vst [vmem:[#allocation2 + $0x28] sm:$0xff] %v1442
        %1475 = vst [vmem:[#allocation2 + $0x30] sm:$0xff] %v1443
        %1476 = vst [vmem:[#allocation2 + $0x38] sm:$0xff] %v1444
        %1477 = vst [vmem:[#allocation2 + $0x40] sm:$0xff] %v1445
        %1478 = vst [vmem:[#allocation2 + $0x48] sm:$0xff] %v1446
        %1479 = vst [vmem:[#allocation2 + $0x50] sm:$0xff] %v1447
        %1480 = vst [vmem:[#allocation2 + $0x58] sm:$0xff] %v1448
        %1481 = vst [vmem:[#allocation2 + $0x60] sm:$0xff] %v1449
        %1482 = vst [vmem:[#allocation2 + $0x68] sm:$0xff] %v1450
        %1483 = vst [vmem:[#allocation2 + $0x70] sm:$0xff] %v1451
        %1484 = vst [vmem:[#allocation2 + $0x78] sm:$0xff] %v1452
        %1485 = vst [vmem:[#allocation2 + $0x80] sm:$0xff] %v1453
        %1486 = vst [vmem:[#allocation2 + $0x88] sm:$0xff] %v1454
        %1487 = vst [vmem:[#allocation2 + $0x90] sm:$0xff] %v1455
        %1488 = vst [vmem:[#allocation2 + $0x98] sm:$0xff] %v1456
        %1489 = vst [vmem:[#allocation2 + $0xa0] sm:$0xff] %v1457
        %1490 = vst [vmem:[#allocation2 + $0xa8] sm:$0xff] %v1458
        %1491 = vst [vmem:[#allocation2 + $0xb0] sm:$0xff] %v1459
        %1492 = vst [vmem:[#allocation2 + $0xb8] sm:$0xff] %v1460
        %1493 = vst [vmem:[#allocation2 + $0xc0] sm:$0xff] %v1461
        %1494 = vst [vmem:[#allocation2 + $0xc8] sm:$0xff] %v1462
        %1495 = vst [vmem:[#allocation2 + $0xd0] sm:$0xff] %v1463
        %1496 = vst [vmem:[#allocation2 + $0xd8] sm:$0xff] %v1464
        %1497 = vst [vmem:[#allocation2 + $0xe0] sm:$0xff] %v1465
        %1498 = vst [vmem:[#allocation2 + $0xe8] sm:$0xff] %v1466
        %1499 = vst [vmem:[#allocation2 + $0xf0] sm:$0xff] %v1467
        %1500 = vst [vmem:[#allocation2 + $0xf8] sm:$0xff] %v1468
        %s1501 = scalar_lea.vmem %s343, 8
        %v1502 = vld [vmem:[%s1501] sm:$0xf]
        %v1503 = vld [vmem:[%s318] sm:$0xe]
        %v1504 = vld [vmem:[%s318 + $0x4] sm:$0xf]
        %v1505 = vld [vmem:[%s318 + $0x8] sm:$0x1]
        %v1506 = vld [vmem:[%s318 + $0xc] sm:$0xe]
        %v1507 = vld [vmem:[%s318 + $0x10] sm:$0xf]
        %v1508 = vld [vmem:[%s318 + $0x14] sm:$0x1]
        %v1509 = vld [vmem:[%s318 + $0x18] sm:$0xe]
        %v1510 = vld [vmem:[%s318 + $0x1c] sm:$0xf]
        %v1511 = vld [vmem:[%s318 + $0x20] sm:$0x1]
        %v1512 = vld [vmem:[%s318 + $0x24] sm:$0xe]
        %v1513 = vld [vmem:[%s318 + $0x28] sm:$0xf]
        %v1514 = vld [vmem:[%s318 + $0x2c] sm:$0x1]
        %v1515 = vld [vmem:[%s318 + $0x30] sm:$0xe]
        %v1516 = vld [vmem:[%s318 + $0x34] sm:$0xf]
        %v1517 = vld [vmem:[%s318 + $0x38] sm:$0x1]
        %v1518 = vld [vmem:[%s318 + $0x3c] sm:$0xe]
        %v1519 = vld [vmem:[%s318 + $0x40] sm:$0xf]
        %v1520 = vld [vmem:[%s318 + $0x44] sm:$0x1]
        %v1521 = vld [vmem:[%s318 + $0x48] sm:$0xe]
        %v1522 = vld [vmem:[%s318 + $0x4c] sm:$0xf]
        %v1523 = vld [vmem:[%s318 + $0x50] sm:$0x1]
        %v1524 = vld [vmem:[%s318 + $0x54] sm:$0xe]
        %v1525 = vld [vmem:[%s318 + $0x58] sm:$0xf]
        %v1526 = vld [vmem:[%s318 + $0x5c] sm:$0x1]
        %v1527 = vld [vmem:[%s318 + $0x60] sm:$0xe]
        %v1528 = vld [vmem:[%s318 + $0x64] sm:$0xf]
        %v1529 = vld [vmem:[%s318 + $0x68] sm:$0x1]
        %v1530 = vld [vmem:[%s318 + $0x6c] sm:$0xe]
        %v1531 = vld [vmem:[%s318 + $0x70] sm:$0xf]
        %v1532 = vld [vmem:[%s318 + $0x74] sm:$0x1]
        %v1533 = vld [vmem:[%s318 + $0x78] sm:$0xe]
        %v1534 = vld [vmem:[%s318 + $0x7c] sm:$0xf]
        %v1535 = vld [vmem:[%s318 + $0x80] sm:$0x1]
        %v1536 = vld [vmem:[%s318 + $0x84] sm:$0xe]
        %v1537 = vld [vmem:[%s318 + $0x88] sm:$0xf]
        %v1538 = vld [vmem:[%s318 + $0x8c] sm:$0x1]
        %v1539 = vld [vmem:[%s318 + $0x90] sm:$0xe]
        %v1540 = vld [vmem:[%s318 + $0x94] sm:$0xf]
        %v1541 = vld [vmem:[%s318 + $0x98] sm:$0x1]
        %v1542 = vld [vmem:[%s318 + $0x9c] sm:$0xe]
        %v1543 = vld [vmem:[%s318 + $0xa0] sm:$0xf]
        %v1544 = vld [vmem:[%s318 + $0xa4] sm:$0x1]
        %v1545 = vld [vmem:[%s318 + $0xa8] sm:$0xe]
        %v1546 = vld [vmem:[%s318 + $0xac] sm:$0xf]
        %v1547 = vld [vmem:[%s318 + $0xb0] sm:$0x1]
        %v1548 = vld [vmem:[%s318 + $0xb4] sm:$0xe]
        %v1549 = vld [vmem:[%s318 + $0xb8] sm:$0xf]
        %v1550 = vld [vmem:[%s318 + $0xbc] sm:$0x1]
        %vm1599 = vcmask 1042432
        %vm1600 = vcmask 1046532
        %vm1601 = vmor %vm1599, %vm1600
        %v1602 = vrot.slane %v1503, 5
        %v1603 = vrot.slane %v1602, 4
        %v1604 = vrot.slane %v1504, 5
        %v1605 = vsel %vm1601, %v1603, %v1604
        %v1606 = vrot.slane %v1604, 4
        %v1607 = vrot.slane %v1505, 5
        %v1608 = vsel %vm1601, %v1606, %v1607
        %v1609 = vrot.slane %v1506, 5
        %v1610 = vrot.slane %v1609, 4
        %v1611 = vrot.slane %v1507, 5
        %v1612 = vsel %vm1601, %v1610, %v1611
        %v1613 = vrot.slane %v1611, 4
        %v1614 = vrot.slane %v1508, 5
        %v1615 = vsel %vm1601, %v1613, %v1614
        %v1616 = vrot.slane %v1509, 5
        %v1617 = vrot.slane %v1616, 4
        %v1618 = vrot.slane %v1510, 5
        %v1619 = vsel %vm1601, %v1617, %v1618
        %v1620 = vrot.slane %v1618, 4
        %v1621 = vrot.slane %v1511, 5
        %v1622 = vsel %vm1601, %v1620, %v1621
        %v1623 = vrot.slane %v1512, 5
        %v1624 = vrot.slane %v1623, 4
        %v1625 = vrot.slane %v1513, 5
        %v1626 = vsel %vm1601, %v1624, %v1625
        %v1627 = vrot.slane %v1625, 4
        %v1628 = vrot.slane %v1514, 5
        %v1629 = vsel %vm1601, %v1627, %v1628
        %v1630 = vrot.slane %v1515, 5
        %v1631 = vrot.slane %v1630, 4
        %v1632 = vrot.slane %v1516, 5
        %v1633 = vsel %vm1601, %v1631, %v1632
        %v1634 = vrot.slane %v1632, 4
        %v1635 = vrot.slane %v1517, 5
        %v1636 = vsel %vm1601, %v1634, %v1635
        %v1637 = vrot.slane %v1518, 5
        %v1638 = vrot.slane %v1637, 4
        %v1639 = vrot.slane %v1519, 5
        %v1640 = vsel %vm1601, %v1638, %v1639
        %v1641 = vrot.slane %v1639, 4
        %v1642 = vrot.slane %v1520, 5
        %v1643 = vsel %vm1601, %v1641, %v1642
        %v1644 = vrot.slane %v1521, 5
        %v1645 = vrot.slane %v1644, 4
        %v1646 = vrot.slane %v1522, 5
        %v1647 = vsel %vm1601, %v1645, %v1646
        %v1648 = vrot.slane %v1646, 4
        %v1649 = vrot.slane %v1523, 5
        %v1650 = vsel %vm1601, %v1648, %v1649
        %v1651 = vrot.slane %v1524, 5
        %v1652 = vrot.slane %v1651, 4
        %v1653 = vrot.slane %v1525, 5
        %v1654 = vsel %vm1601, %v1652, %v1653
        %v1655 = vrot.slane %v1653, 4
        %v1656 = vrot.slane %v1526, 5
        %v1657 = vsel %vm1601, %v1655, %v1656
        %v1658 = vrot.slane %v1527, 5
        %v1659 = vrot.slane %v1658, 4
        %v1660 = vrot.slane %v1528, 5
        %v1661 = vsel %vm1601, %v1659, %v1660
        %v1662 = vrot.slane %v1660, 4
        %v1663 = vrot.slane %v1529, 5
        %v1664 = vsel %vm1601, %v1662, %v1663
        %v1665 = vrot.slane %v1530, 5
        %v1666 = vrot.slane %v1665, 4
        %v1667 = vrot.slane %v1531, 5
        %v1668 = vsel %vm1601, %v1666, %v1667
        %v1669 = vrot.slane %v1667, 4
        %v1670 = vrot.slane %v1532, 5
        %v1671 = vsel %vm1601, %v1669, %v1670
        %v1672 = vrot.slane %v1533, 5
        %v1673 = vrot.slane %v1672, 4
        %v1674 = vrot.slane %v1534, 5
        %v1675 = vsel %vm1601, %v1673, %v1674
        %v1676 = vrot.slane %v1674, 4
        %v1677 = vrot.slane %v1535, 5
        %v1678 = vsel %vm1601, %v1676, %v1677
        %v1679 = vrot.slane %v1536, 5
        %v1680 = vrot.slane %v1679, 4
        %v1681 = vrot.slane %v1537, 5
        %v1682 = vsel %vm1601, %v1680, %v1681
        %v1683 = vrot.slane %v1681, 4
        %v1684 = vrot.slane %v1538, 5
        %v1685 = vsel %vm1601, %v1683, %v1684
        %v1686 = vrot.slane %v1539, 5
        %v1687 = vrot.slane %v1686, 4
        %v1688 = vrot.slane %v1540, 5
        %v1689 = vsel %vm1601, %v1687, %v1688
        %v1690 = vrot.slane %v1688, 4
        %v1691 = vrot.slane %v1541, 5
        %v1692 = vsel %vm1601, %v1690, %v1691
        %v1693 = vrot.slane %v1542, 5
        %v1694 = vrot.slane %v1693, 4
        %v1695 = vrot.slane %v1543, 5
        %v1696 = vsel %vm1601, %v1694, %v1695
        %v1697 = vrot.slane %v1695, 4
        %v1698 = vrot.slane %v1544, 5
        %v1699 = vsel %vm1601, %v1697, %v1698
        %v1700 = vrot.slane %v1545, 5
        %v1701 = vrot.slane %v1700, 4
        %v1702 = vrot.slane %v1546, 5
        %v1703 = vsel %vm1601, %v1701, %v1702
        %v1704 = vrot.slane %v1702, 4
        %v1705 = vrot.slane %v1547, 5
        %v1706 = vsel %vm1601, %v1704, %v1705
        %v1707 = vrot.slane %v1548, 5
        %v1708 = vrot.slane %v1707, 4
        %v1709 = vrot.slane %v1549, 5
        %v1710 = vsel %vm1601, %v1708, %v1709
        %v1711 = vrot.slane %v1709, 4
        %v1712 = vrot.slane %v1550, 5
        %v1713 = vsel %vm1601, %v1711, %v1712
        %v1714 = vunpack.c.l.b16 %v1605
        %v1715 = vunpack.c.l.b16 %v1608
        %v1716 = vunpack.c.l.b16 %v1612
        %v1717 = vunpack.c.l.b16 %v1615
        %v1718 = vunpack.c.l.b16 %v1619
        %v1719 = vunpack.c.l.b16 %v1622
        %v1720 = vunpack.c.l.b16 %v1626
        %v1721 = vunpack.c.l.b16 %v1629
        %v1722 = vunpack.c.l.b16 %v1633
        %v1723 = vunpack.c.l.b16 %v1636
        %v1724 = vunpack.c.l.b16 %v1640
        %v1725 = vunpack.c.l.b16 %v1643
        %v1726 = vunpack.c.l.b16 %v1647
        %v1727 = vunpack.c.l.b16 %v1650
        %v1728 = vunpack.c.l.b16 %v1654
        %v1729 = vunpack.c.l.b16 %v1657
        %v1730 = vunpack.c.l.b16 %v1661
        %v1731 = vunpack.c.l.b16 %v1664
        %v1732 = vunpack.c.l.b16 %v1668
        %v1733 = vunpack.c.l.b16 %v1671
        %v1734 = vunpack.c.l.b16 %v1675
        %v1735 = vunpack.c.l.b16 %v1678
        %v1736 = vunpack.c.l.b16 %v1682
        %v1737 = vunpack.c.l.b16 %v1685
        %v1738 = vunpack.c.l.b16 %v1689
        %v1739 = vunpack.c.l.b16 %v1692
        %v1740 = vunpack.c.l.b16 %v1696
        %v1741 = vunpack.c.l.b16 %v1699
        %v1742 = vunpack.c.l.b16 %v1703
        %v1743 = vunpack.c.l.b16 %v1706
        %v1744 = vunpack.c.l.b16 %v1710
        %v1745 = vunpack.c.l.b16 %v1713
        %v1746 = vpack.c.b16 %v1715, %v1714
        %v1747 = vpack.c.b16 %v1717, %v1716
        %v1748 = vpack.c.b16 %v1719, %v1718
        %v1749 = vpack.c.b16 %v1721, %v1720
        %v1750 = vpack.c.b16 %v1723, %v1722
        %v1751 = vpack.c.b16 %v1725, %v1724
        %v1752 = vpack.c.b16 %v1727, %v1726
        %v1753 = vpack.c.b16 %v1729, %v1728
        %v1754 = vpack.c.b16 %v1731, %v1730
        %v1755 = vpack.c.b16 %v1733, %v1732
        %v1756 = vpack.c.b16 %v1735, %v1734
        %v1757 = vpack.c.b16 %v1737, %v1736
        %v1758 = vpack.c.b16 %v1739, %v1738
        %v1759 = vpack.c.b16 %v1741, %v1740
        %v1760 = vpack.c.b16 %v1743, %v1742
        %v1761 = vpack.c.b16 %v1745, %v1744
        %v1763 = vsel %vm462, %v1746, 0
        %v1766 = vsel %vm462, %v1747, 0
        %v1769 = vsel %vm462, %v1748, 0
        %v1772 = vsel %vm462, %v1749, 0
        %v1775 = vsel %vm462, %v1750, 0
        %v1778 = vsel %vm462, %v1751, 0
        %v1781 = vsel %vm462, %v1752, 0
        %v1784 = vsel %vm462, %v1753, 0
        %v1787 = vsel %vm462, %v1754, 0
        %v1790 = vsel %vm462, %v1755, 0
        %v1793 = vsel %vm462, %v1756, 0
        %v1796 = vsel %vm462, %v1757, 0
        %v1799 = vsel %vm462, %v1758, 0
        %v1802 = vsel %vm462, %v1759, 0
        %v1805 = vsel %vm462, %v1760, 0
        %v1808 = vsel %vm462, %v1761, 0
        %v1811 = vsel %vm511, %v1502, 0
        %1813 = vmatprep.subr.bf16.mxu0 0
        %1814 = vmatpush1.bf16.msra.mxu0 0
        %1815 = vmatprep.subr.bf16.mxu0 0
        %1816 = vmatpush1.bf16.msra.mxu0 0
        %1817 = vmatprep.subr.bf16.mxu0 0
        %1818 = vmatpush1.bf16.msra.mxu0 0
        %1819 = vmatprep.subr.bf16.mxu0 0
        %1820 = vmatpush1.bf16.msra.mxu0 0
        %1821 = vmatprep.subr.bf16.mxu0 0
        %1822 = vmatpush1.bf16.msra.mxu0 0
        %1823 = vmatprep.subr.bf16.mxu0 0
        %1824 = vmatpush1.bf16.msra.mxu0 0
        %1825 = vmatprep.subr.bf16.mxu0 0
        %1826 = vmatpush1.bf16.msra.mxu0 0
        %1827 = vmatprep.subr.bf16.mxu0 0
        %1828 = vmatpush1.bf16.msra.mxu0 %v1811
        %1829 = vmatprep.subr.bf16.mxu0 0
        %1830 = vmatpush2.bf16.msra.mxu0 0
        %1831 = vmatprep.subr.bf16.mxu0 0
        %1832 = vmatpush2.bf16.msra.mxu0 0
        %1833 = vmatprep.subr.bf16.mxu0 0
        %1834 = vmatpush2.bf16.msra.mxu0 0
        %1835 = vmatprep.subr.bf16.mxu0 0
        %1836 = vmatpush2.bf16.msra.mxu0 0
        %1837 = vmatprep.subr.bf16.mxu0 0
        %1838 = vmatpush2.bf16.msra.mxu0 0
        %1839 = vmatprep.subr.bf16.mxu0 0
        %1840 = vmatpush2.bf16.msra.mxu0 0
        %1841 = vmatprep.subr.bf16.mxu0 0
        %1842 = vmatpush2.bf16.msra.mxu0 0
        %1843 = vmatprep.subr.bf16.mxu0 0
        %1844 = vmatpush2.bf16.msra.mxu0 0
        %1845 = vmatprep.mubr.bf16.mxu0 0
        %1846 = vmatmul.mubr.bf16.gmra.mxu0 %v1763
        %v1847 = vpop.f32.mrf.mxu0
        %v1848 = vadd.f32 0.0, %v1847
        %v1849 = vpop.f32.mrf.mxu0
        %v1850 = vpop.f32.mrf.mxu0
        %v1851 = vadd.f32 0.0, %v1850
        %v1852 = vpop.f32.mrf.mxu0
        %1853 = vmatprep.mubr.bf16.mxu0 0
        %1854 = vmatmul.mubr.bf16.gmra.mxu0 %v1766
        %v1855 = vpop.f32.mrf.mxu0
        %v1856 = vadd.f32 0.0, %v1855
        %v1857 = vpop.f32.mrf.mxu0
        %v1858 = vpop.f32.mrf.mxu0
        %v1859 = vadd.f32 0.0, %v1858
        %v1860 = vpop.f32.mrf.mxu0
        %1861 = vmatprep.mubr.bf16.mxu0 0
        %1862 = vmatmul.mubr.bf16.gmra.mxu0 %v1769
        %v1863 = vpop.f32.mrf.mxu0
        %v1864 = vadd.f32 0.0, %v1863
        %v1865 = vpop.f32.mrf.mxu0
        %v1866 = vpop.f32.mrf.mxu0
        %v1867 = vadd.f32 0.0, %v1866
        %v1868 = vpop.f32.mrf.mxu0
        %1869 = vmatprep.mubr.bf16.mxu0 0
        %1870 = vmatmul.mubr.bf16.gmra.mxu0 %v1772
        %v1871 = vpop.f32.mrf.mxu0
        %v1872 = vadd.f32 0.0, %v1871
        %v1873 = vpop.f32.mrf.mxu0
        %v1874 = vpop.f32.mrf.mxu0
        %v1875 = vadd.f32 0.0, %v1874
        %v1876 = vpop.f32.mrf.mxu0
        %1877 = vmatprep.mubr.bf16.mxu0 0
        %1878 = vmatmul.mubr.bf16.gmra.mxu0 %v1775
        %v1879 = vpop.f32.mrf.mxu0
        %v1880 = vadd.f32 0.0, %v1879
        %v1881 = vpop.f32.mrf.mxu0
        %v1882 = vpop.f32.mrf.mxu0
        %v1883 = vadd.f32 0.0, %v1882
        %v1884 = vpop.f32.mrf.mxu0
        %1885 = vmatprep.mubr.bf16.mxu0 0
        %1886 = vmatmul.mubr.bf16.gmra.mxu0 %v1778
        %v1887 = vpop.f32.mrf.mxu0
        %v1888 = vadd.f32 0.0, %v1887
        %v1889 = vpop.f32.mrf.mxu0
        %v1890 = vpop.f32.mrf.mxu0
        %v1891 = vadd.f32 0.0, %v1890
        %v1892 = vpop.f32.mrf.mxu0
        %1893 = vmatprep.mubr.bf16.mxu0 0
        %1894 = vmatmul.mubr.bf16.gmra.mxu0 %v1781
        %v1895 = vpop.f32.mrf.mxu0
        %v1896 = vadd.f32 0.0, %v1895
        %v1897 = vpop.f32.mrf.mxu0
        %v1898 = vpop.f32.mrf.mxu0
        %v1899 = vadd.f32 0.0, %v1898
        %v1900 = vpop.f32.mrf.mxu0
        %1901 = vmatprep.mubr.bf16.mxu0 0
        %1902 = vmatmul.mubr.bf16.gmra.mxu0 %v1784
        %v1903 = vpop.f32.mrf.mxu0
        %v1904 = vadd.f32 0.0, %v1903
        %v1905 = vpop.f32.mrf.mxu0
        %v1906 = vpop.f32.mrf.mxu0
        %v1907 = vadd.f32 0.0, %v1906
        %v1908 = vpop.f32.mrf.mxu0
        %1909 = vmatprep.mubr.bf16.mxu0 0
        %1910 = vmatmul.mubr.bf16.gmra.mxu0 %v1787
        %v1911 = vpop.f32.mrf.mxu0
        %v1912 = vadd.f32 0.0, %v1911
        %v1913 = vpop.f32.mrf.mxu0
        %v1914 = vpop.f32.mrf.mxu0
        %v1915 = vadd.f32 0.0, %v1914
        %v1916 = vpop.f32.mrf.mxu0
        %1917 = vmatprep.mubr.bf16.mxu0 0
        %1918 = vmatmul.mubr.bf16.gmra.mxu0 %v1790
        %v1919 = vpop.f32.mrf.mxu0
        %v1920 = vadd.f32 0.0, %v1919
        %v1921 = vpop.f32.mrf.mxu0
        %v1922 = vpop.f32.mrf.mxu0
        %v1923 = vadd.f32 0.0, %v1922
        %v1924 = vpop.f32.mrf.mxu0
        %1925 = vmatprep.mubr.bf16.mxu0 0
        %1926 = vmatmul.mubr.bf16.gmra.mxu0 %v1793
        %v1927 = vpop.f32.mrf.mxu0
        %v1928 = vadd.f32 0.0, %v1927
        %v1929 = vpop.f32.mrf.mxu0
        %v1930 = vpop.f32.mrf.mxu0
        %v1931 = vadd.f32 0.0, %v1930
        %v1932 = vpop.f32.mrf.mxu0
        %1933 = vmatprep.mubr.bf16.mxu0 0
        %1934 = vmatmul.mubr.bf16.gmra.mxu0 %v1796
        %v1935 = vpop.f32.mrf.mxu0
        %v1936 = vadd.f32 0.0, %v1935
        %v1937 = vpop.f32.mrf.mxu0
        %v1938 = vpop.f32.mrf.mxu0
        %v1939 = vadd.f32 0.0, %v1938
        %v1940 = vpop.f32.mrf.mxu0
        %1941 = vmatprep.mubr.bf16.mxu0 0
        %1942 = vmatmul.mubr.bf16.gmra.mxu0 %v1799
        %v1943 = vpop.f32.mrf.mxu0
        %v1944 = vadd.f32 0.0, %v1943
        %v1945 = vpop.f32.mrf.mxu0
        %v1946 = vpop.f32.mrf.mxu0
        %v1947 = vadd.f32 0.0, %v1946
        %v1948 = vpop.f32.mrf.mxu0
        %1949 = vmatprep.mubr.bf16.mxu0 0
        %1950 = vmatmul.mubr.bf16.gmra.mxu0 %v1802
        %v1951 = vpop.f32.mrf.mxu0
        %v1952 = vadd.f32 0.0, %v1951
        %v1953 = vpop.f32.mrf.mxu0
        %v1954 = vpop.f32.mrf.mxu0
        %v1955 = vadd.f32 0.0, %v1954
        %v1956 = vpop.f32.mrf.mxu0
        %1957 = vmatprep.mubr.bf16.mxu0 0
        %1958 = vmatmul.mubr.bf16.gmra.mxu0 %v1805
        %v1959 = vpop.f32.mrf.mxu0
        %v1960 = vadd.f32 0.0, %v1959
        %v1961 = vpop.f32.mrf.mxu0
        %v1962 = vpop.f32.mrf.mxu0
        %v1963 = vadd.f32 0.0, %v1962
        %v1964 = vpop.f32.mrf.mxu0
        %1965 = vmatprep.mubr.bf16.mxu0 0
        %1966 = vmatmul.mubr.bf16.gmra.mxu0 %v1808
        %v1967 = vpop.f32.mrf.mxu0
        %v1968 = vadd.f32 0.0, %v1967
        %v1969 = vpop.f32.mrf.mxu0
        %v1970 = vpop.f32.mrf.mxu0
        %v1971 = vadd.f32 0.0, %v1970
        %v1972 = vpop.f32.mrf.mxu0
        %1973 = vdwg.mxu0
        %v1974 = vld [vmem:[#allocation2] sm:$0xff]
        %v1975 = vld [vmem:[#allocation2 + $0x8] sm:$0xff]
        %v1976 = vld [vmem:[#allocation2 + $0x10] sm:$0xff]
        %v1977 = vld [vmem:[#allocation2 + $0x18] sm:$0xff]
        %v1978 = vld [vmem:[#allocation2 + $0x20] sm:$0xff]
        %v1979 = vld [vmem:[#allocation2 + $0x28] sm:$0xff]
        %v1980 = vld [vmem:[#allocation2 + $0x30] sm:$0xff]
        %v1981 = vld [vmem:[#allocation2 + $0x38] sm:$0xff]
        %v1982 = vld [vmem:[#allocation2 + $0x40] sm:$0xff]
        %v1983 = vld [vmem:[#allocation2 + $0x48] sm:$0xff]
        %v1984 = vld [vmem:[#allocation2 + $0x50] sm:$0xff]
        %v1985 = vld [vmem:[#allocation2 + $0x58] sm:$0xff]
        %v1986 = vld [vmem:[#allocation2 + $0x60] sm:$0xff]
        %v1987 = vld [vmem:[#allocation2 + $0x68] sm:$0xff]
        %v1988 = vld [vmem:[#allocation2 + $0x70] sm:$0xff]
        %v1989 = vld [vmem:[#allocation2 + $0x78] sm:$0xff]
        %v1990 = vld [vmem:[#allocation2 + $0x80] sm:$0xff]
        %v1991 = vld [vmem:[#allocation2 + $0x88] sm:$0xff]
        %v1992 = vld [vmem:[#allocation2 + $0x90] sm:$0xff]
        %v1993 = vld [vmem:[#allocation2 + $0x98] sm:$0xff]
        %v1994 = vld [vmem:[#allocation2 + $0xa0] sm:$0xff]
        %v1995 = vld [vmem:[#allocation2 + $0xa8] sm:$0xff]
        %v1996 = vld [vmem:[#allocation2 + $0xb0] sm:$0xff]
        %v1997 = vld [vmem:[#allocation2 + $0xb8] sm:$0xff]
        %v1998 = vld [vmem:[#allocation2 + $0xc0] sm:$0xff]
        %v1999 = vld [vmem:[#allocation2 + $0xc8] sm:$0xff]
        %v2000 = vld [vmem:[#allocation2 + $0xd0] sm:$0xff]
        %v2001 = vld [vmem:[#allocation2 + $0xd8] sm:$0xff]
        %v2002 = vld [vmem:[#allocation2 + $0xe0] sm:$0xff]
        %v2003 = vld [vmem:[#allocation2 + $0xe8] sm:$0xff]
        %v2004 = vld [vmem:[#allocation2 + $0xf0] sm:$0xff]
        %v2005 = vld [vmem:[#allocation2 + $0xf8] sm:$0xff]
        %v2006 = vadd.f32 %v1974, %v1848
        %v2007 = vadd.f32 %v1975, %v1851
        %v2008 = vadd.f32 %v1976, %v1856
        %v2009 = vadd.f32 %v1977, %v1859
        %v2010 = vadd.f32 %v1978, %v1864
        %v2011 = vadd.f32 %v1979, %v1867
        %v2012 = vadd.f32 %v1980, %v1872
        %v2013 = vadd.f32 %v1981, %v1875
        %v2014 = vadd.f32 %v1982, %v1880
        %v2015 = vadd.f32 %v1983, %v1883
        %v2016 = vadd.f32 %v1984, %v1888
        %v2017 = vadd.f32 %v1985, %v1891
        %v2018 = vadd.f32 %v1986, %v1896
        %v2019 = vadd.f32 %v1987, %v1899
        %v2020 = vadd.f32 %v1988, %v1904
        %v2021 = vadd.f32 %v1989, %v1907
        %v2022 = vadd.f32 %v1990, %v1912
        %v2023 = vadd.f32 %v1991, %v1915
        %v2024 = vadd.f32 %v1992, %v1920
        %v2025 = vadd.f32 %v1993, %v1923
        %v2026 = vadd.f32 %v1994, %v1928
        %v2027 = vadd.f32 %v1995, %v1931
        %v2028 = vadd.f32 %v1996, %v1936
        %v2029 = vadd.f32 %v1997, %v1939
        %v2030 = vadd.f32 %v1998, %v1944
        %v2031 = vadd.f32 %v1999, %v1947
        %v2032 = vadd.f32 %v2000, %v1952
        %v2033 = vadd.f32 %v2001, %v1955
        %v2034 = vadd.f32 %v2002, %v1960
        %v2035 = vadd.f32 %v2003, %v1963
        %v2036 = vadd.f32 %v2004, %v1968
        %v2037 = vadd.f32 %v2005, %v1971
        %2038 = vst [vmem:[#allocation2] sm:$0xff] %v2006
        %2039 = vst [vmem:[#allocation2 + $0x8] sm:$0xff] %v2007
        %2040 = vst [vmem:[#allocation2 + $0x10] sm:$0xff] %v2008
        %2041 = vst [vmem:[#allocation2 + $0x18] sm:$0xff] %v2009
        %2042 = vst [vmem:[#allocation2 + $0x20] sm:$0xff] %v2010
        %2043 = vst [vmem:[#allocation2 + $0x28] sm:$0xff] %v2011
        %2044 = vst [vmem:[#allocation2 + $0x30] sm:$0xff] %v2012
        %2045 = vst [vmem:[#allocation2 + $0x38] sm:$0xff] %v2013
        %2046 = vst [vmem:[#allocation2 + $0x40] sm:$0xff] %v2014
        %2047 = vst [vmem:[#allocation2 + $0x48] sm:$0xff] %v2015
        %2048 = vst [vmem:[#allocation2 + $0x50] sm:$0xff] %v2016
        %2049 = vst [vmem:[#allocation2 + $0x58] sm:$0xff] %v2017
        %2050 = vst [vmem:[#allocation2 + $0x60] sm:$0xff] %v2018
        %2051 = vst [vmem:[#allocation2 + $0x68] sm:$0xff] %v2019
        %2052 = vst [vmem:[#allocation2 + $0x70] sm:$0xff] %v2020
        %2053 = vst [vmem:[#allocation2 + $0x78] sm:$0xff] %v2021
        %2054 = vst [vmem:[#allocation2 + $0x80] sm:$0xff] %v2022
        %2055 = vst [vmem:[#allocation2 + $0x88] sm:$0xff] %v2023
        %2056 = vst [vmem:[#allocation2 + $0x90] sm:$0xff] %v2024
        %2057 = vst [vmem:[#allocation2 + $0x98] sm:$0xff] %v2025
        %2058 = vst [vmem:[#allocation2 + $0xa0] sm:$0xff] %v2026
        %2059 = vst [vmem:[#allocation2 + $0xa8] sm:$0xff] %v2027
        %2060 = vst [vmem:[#allocation2 + $0xb0] sm:$0xff] %v2028
        %2061 = vst [vmem:[#allocation2 + $0xb8] sm:$0xff] %v2029
        %2062 = vst [vmem:[#allocation2 + $0xc0] sm:$0xff] %v2030
        %2063 = vst [vmem:[#allocation2 + $0xc8] sm:$0xff] %v2031
        %2064 = vst [vmem:[#allocation2 + $0xd0] sm:$0xff] %v2032
        %2065 = vst [vmem:[#allocation2 + $0xd8] sm:$0xff] %v2033
        %2066 = vst [vmem:[#allocation2 + $0xe0] sm:$0xff] %v2034
        %2067 = vst [vmem:[#allocation2 + $0xe8] sm:$0xff] %v2035
        %2068 = vst [vmem:[#allocation2 + $0xf0] sm:$0xff] %v2036
        %2069 = vst [vmem:[#allocation2 + $0xf8] sm:$0xff] %v2037
        %s2070 = scalar_lea.vmem %s343, 12
        %v2071 = vld [vmem:[%s2070] sm:$0xf]
        %s2072 = scalar_lea.vmem %s318, 12
        %v2073 = vld [vmem:[%s2072] sm:$0xf]
        %v2074 = vld [vmem:[%s2072 + $0x4] sm:$0xf]
        %v2075 = vld [vmem:[%s2072 + $0xc] sm:$0xf]
        %v2076 = vld [vmem:[%s2072 + $0x10] sm:$0xf]
        %v2077 = vld [vmem:[%s2072 + $0x18] sm:$0xf]
        %v2078 = vld [vmem:[%s2072 + $0x1c] sm:$0xf]
        %v2079 = vld [vmem:[%s2072 + $0x24] sm:$0xf]
        %v2080 = vld [vmem:[%s2072 + $0x28] sm:$0xf]
        %v2081 = vld [vmem:[%s2072 + $0x30] sm:$0xf]
        %v2082 = vld [vmem:[%s2072 + $0x34] sm:$0xf]
        %v2083 = vld [vmem:[%s2072 + $0x3c] sm:$0xf]
        %v2084 = vld [vmem:[%s2072 + $0x40] sm:$0xf]
        %v2085 = vld [vmem:[%s2072 + $0x48] sm:$0xf]
        %v2086 = vld [vmem:[%s2072 + $0x4c] sm:$0xf]
        %v2087 = vld [vmem:[%s2072 + $0x54] sm:$0xf]
        %v2088 = vld [vmem:[%s2072 + $0x58] sm:$0xf]
        %v2089 = vld [vmem:[%s2072 + $0x60] sm:$0xf]
        %v2090 = vld [vmem:[%s2072 + $0x64] sm:$0xf]
        %v2091 = vld [vmem:[%s2072 + $0x6c] sm:$0xf]
        %v2092 = vld [vmem:[%s2072 + $0x70] sm:$0xf]
        %v2093 = vld [vmem:[%s2072 + $0x78] sm:$0xf]
        %v2094 = vld [vmem:[%s2072 + $0x7c] sm:$0xf]
        %v2095 = vld [vmem:[%s2072 + $0x84] sm:$0xf]
        %v2096 = vld [vmem:[%s2072 + $0x88] sm:$0xf]
        %v2097 = vld [vmem:[%s2072 + $0x90] sm:$0xf]
        %v2098 = vld [vmem:[%s2072 + $0x94] sm:$0xf]
        %v2099 = vld [vmem:[%s2072 + $0x9c] sm:$0xf]
        %v2100 = vld [vmem:[%s2072 + $0xa0] sm:$0xf]
        %v2101 = vld [vmem:[%s2072 + $0xa8] sm:$0xf]
        %v2102 = vld [vmem:[%s2072 + $0xac] sm:$0xf]
        %v2133 = vunpack.c.l.b16 %v2073
        %v2134 = vunpack.c.l.b16 %v2074
        %v2135 = vunpack.c.l.b16 %v2075
        %v2136 = vunpack.c.l.b16 %v2076
        %v2137 = vunpack.c.l.b16 %v2077
        %v2138 = vunpack.c.l.b16 %v2078
        %v2139 = vunpack.c.l.b16 %v2079
        %v2140 = vunpack.c.l.b16 %v2080
        %v2141 = vunpack.c.l.b16 %v2081
        %v2142 = vunpack.c.l.b16 %v2082
        %v2143 = vunpack.c.l.b16 %v2083
        %v2144 = vunpack.c.l.b16 %v2084
        %v2145 = vunpack.c.l.b16 %v2085
        %v2146 = vunpack.c.l.b16 %v2086
        %v2147 = vunpack.c.l.b16 %v2087
        %v2148 = vunpack.c.l.b16 %v2088
        %v2149 = vunpack.c.l.b16 %v2089
        %v2150 = vunpack.c.l.b16 %v2090
        %v2151 = vunpack.c.l.b16 %v2091
        %v2152 = vunpack.c.l.b16 %v2092
        %v2153 = vunpack.c.l.b16 %v2093
        %v2154 = vunpack.c.l.b16 %v2094
        %v2155 = vunpack.c.l.b16 %v2095
        %v2156 = vunpack.c.l.b16 %v2096
        %v2157 = vunpack.c.l.b16 %v2097
        %v2158 = vunpack.c.l.b16 %v2098
        %v2159 = vunpack.c.l.b16 %v2099
        %v2160 = vunpack.c.l.b16 %v2100
        %v2161 = vunpack.c.l.b16 %v2101
        %v2162 = vunpack.c.l.b16 %v2102
        %v2163 = vpack.c.b16 %v2134, %v2133
        %v2164 = vpack.c.b16 %v2136, %v2135
        %v2165 = vpack.c.b16 %v2138, %v2137
        %v2166 = vpack.c.b16 %v2140, %v2139
        %v2167 = vpack.c.b16 %v2142, %v2141
        %v2168 = vpack.c.b16 %v2144, %v2143
        %v2169 = vpack.c.b16 %v2146, %v2145
        %v2170 = vpack.c.b16 %v2148, %v2147
        %v2171 = vpack.c.b16 %v2150, %v2149
        %v2172 = vpack.c.b16 %v2152, %v2151
        %v2173 = vpack.c.b16 %v2154, %v2153
        %v2174 = vpack.c.b16 %v2156, %v2155
        %v2175 = vpack.c.b16 %v2158, %v2157
        %v2176 = vpack.c.b16 %v2160, %v2159
        %v2177 = vpack.c.b16 %v2162, %v2161
        %v2179 = vsel %vm462, %v2163, 0
        %v2182 = vsel %vm462, %v2164, 0
        %v2185 = vsel %vm462, %v2165, 0
        %v2188 = vsel %vm462, %v2166, 0
        %v2191 = vsel %vm462, %v2167, 0
        %v2194 = vsel %vm462, %v2168, 0
        %v2197 = vsel %vm462, %v2169, 0
        %v2200 = vsel %vm462, %v2170, 0
        %v2203 = vsel %vm462, %v2171, 0
        %v2206 = vsel %vm462, %v2172, 0
        %v2209 = vsel %vm462, %v2173, 0
        %v2212 = vsel %vm462, %v2174, 0
        %v2215 = vsel %vm462, %v2175, 0
        %v2218 = vsel %vm462, %v2176, 0
        %v2221 = vsel %vm462, %v2177, 0
        %v2224 = vsel %vm511, %v2071, 0
        %2226 = vmatprep.subr.bf16.mxu0 0
        %2227 = vmatpush1.bf16.msra.mxu0 0
        %2228 = vmatprep.subr.bf16.mxu0 0
        %2229 = vmatpush1.bf16.msra.mxu0 0
        %2230 = vmatprep.subr.bf16.mxu0 0
        %2231 = vmatpush1.bf16.msra.mxu0 0
        %2232 = vmatprep.subr.bf16.mxu0 0
        %2233 = vmatpush1.bf16.msra.mxu0 0
        %2234 = vmatprep.subr.bf16.mxu0 0
        %2235 = vmatpush1.bf16.msra.mxu0 0
        %2236 = vmatprep.subr.bf16.mxu0 0
        %2237 = vmatpush1.bf16.msra.mxu0 0
        %2238 = vmatprep.subr.bf16.mxu0 0
        %2239 = vmatpush1.bf16.msra.mxu0 0
        %2240 = vmatprep.subr.bf16.mxu0 0
        %2241 = vmatpush1.bf16.msra.mxu0 %v2224
        %2242 = vmatprep.subr.bf16.mxu0 0
        %2243 = vmatpush2.bf16.msra.mxu0 0
        %2244 = vmatprep.subr.bf16.mxu0 0
        %2245 = vmatpush2.bf16.msra.mxu0 0
        %2246 = vmatprep.subr.bf16.mxu0 0
        %2247 = vmatpush2.bf16.msra.mxu0 0
        %2248 = vmatprep.subr.bf16.mxu0 0
        %2249 = vmatpush2.bf16.msra.mxu0 0
        %2250 = vmatprep.subr.bf16.mxu0 0
        %2251 = vmatpush2.bf16.msra.mxu0 0
        %2252 = vmatprep.subr.bf16.mxu0 0
        %2253 = vmatpush2.bf16.msra.mxu0 0
        %2254 = vmatprep.subr.bf16.mxu0 0
        %2255 = vmatpush2.bf16.msra.mxu0 0
        %2256 = vmatprep.subr.bf16.mxu0 0
        %2257 = vmatpush2.bf16.msra.mxu0 0
        %2258 = vmatprep.mubr.bf16.mxu0 0
        %2259 = vmatmul.mubr.bf16.gmra.mxu0 %v2179
        %v2260 = vpop.f32.mrf.mxu0
        %v2261 = vadd.f32 0.0, %v2260
        %v2262 = vpop.f32.mrf.mxu0
        %v2263 = vpop.f32.mrf.mxu0
        %v2264 = vadd.f32 0.0, %v2263
        %v2265 = vpop.f32.mrf.mxu0
        %2266 = vmatprep.mubr.bf16.mxu0 0
        %2267 = vmatmul.mubr.bf16.gmra.mxu0 %v2182
        %v2268 = vpop.f32.mrf.mxu0
        %v2269 = vadd.f32 0.0, %v2268
        %v2270 = vpop.f32.mrf.mxu0
        %v2271 = vpop.f32.mrf.mxu0
        %v2272 = vadd.f32 0.0, %v2271
        %v2273 = vpop.f32.mrf.mxu0
        %2274 = vmatprep.mubr.bf16.mxu0 0
        %2275 = vmatmul.mubr.bf16.gmra.mxu0 %v2185
        %v2276 = vpop.f32.mrf.mxu0
        %v2277 = vadd.f32 0.0, %v2276
        %v2278 = vpop.f32.mrf.mxu0
        %v2279 = vpop.f32.mrf.mxu0
        %v2280 = vadd.f32 0.0, %v2279
        %v2281 = vpop.f32.mrf.mxu0
        %2282 = vmatprep.mubr.bf16.mxu0 0
        %2283 = vmatmul.mubr.bf16.gmra.mxu0 %v2188
        %v2284 = vpop.f32.mrf.mxu0
        %v2285 = vadd.f32 0.0, %v2284
        %v2286 = vpop.f32.mrf.mxu0
        %v2287 = vpop.f32.mrf.mxu0
        %v2288 = vadd.f32 0.0, %v2287
        %v2289 = vpop.f32.mrf.mxu0
        %2290 = vmatprep.mubr.bf16.mxu0 0
        %2291 = vmatmul.mubr.bf16.gmra.mxu0 %v2191
        %v2292 = vpop.f32.mrf.mxu0
        %v2293 = vadd.f32 0.0, %v2292
        %v2294 = vpop.f32.mrf.mxu0
        %v2295 = vpop.f32.mrf.mxu0
        %v2296 = vadd.f32 0.0, %v2295
        %v2297 = vpop.f32.mrf.mxu0
        %2298 = vmatprep.mubr.bf16.mxu0 0
        %2299 = vmatmul.mubr.bf16.gmra.mxu0 %v2194
        %v2300 = vpop.f32.mrf.mxu0
        %v2301 = vadd.f32 0.0, %v2300
        %v2302 = vpop.f32.mrf.mxu0
        %v2303 = vpop.f32.mrf.mxu0
        %v2304 = vadd.f32 0.0, %v2303
        %v2305 = vpop.f32.mrf.mxu0
        %2306 = vmatprep.mubr.bf16.mxu0 0
        %2307 = vmatmul.mubr.bf16.gmra.mxu0 %v2197
        %v2308 = vpop.f32.mrf.mxu0
        %v2309 = vadd.f32 0.0, %v2308
        %v2310 = vpop.f32.mrf.mxu0
        %v2311 = vpop.f32.mrf.mxu0
        %v2312 = vadd.f32 0.0, %v2311
        %v2313 = vpop.f32.mrf.mxu0
        %2314 = vmatprep.mubr.bf16.mxu0 0
        %2315 = vmatmul.mubr.bf16.gmra.mxu0 %v2200
        %v2316 = vpop.f32.mrf.mxu0
        %v2317 = vadd.f32 0.0, %v2316
        %v2318 = vpop.f32.mrf.mxu0
        %v2319 = vpop.f32.mrf.mxu0
        %v2320 = vadd.f32 0.0, %v2319
        %v2321 = vpop.f32.mrf.mxu0
        %2322 = vmatprep.mubr.bf16.mxu0 0
        %2323 = vmatmul.mubr.bf16.gmra.mxu0 %v2203
        %v2324 = vpop.f32.mrf.mxu0
        %v2325 = vadd.f32 0.0, %v2324
        %v2326 = vpop.f32.mrf.mxu0
        %v2327 = vpop.f32.mrf.mxu0
        %v2328 = vadd.f32 0.0, %v2327
        %v2329 = vpop.f32.mrf.mxu0
        %2330 = vmatprep.mubr.bf16.mxu0 0
        %2331 = vmatmul.mubr.bf16.gmra.mxu0 %v2206
        %v2332 = vpop.f32.mrf.mxu0
        %v2333 = vadd.f32 0.0, %v2332
        %v2334 = vpop.f32.mrf.mxu0
        %v2335 = vpop.f32.mrf.mxu0
        %v2336 = vadd.f32 0.0, %v2335
        %v2337 = vpop.f32.mrf.mxu0
        %2338 = vmatprep.mubr.bf16.mxu0 0
        %2339 = vmatmul.mubr.bf16.gmra.mxu0 %v2209
        %v2340 = vpop.f32.mrf.mxu0
        %v2341 = vadd.f32 0.0, %v2340
        %v2342 = vpop.f32.mrf.mxu0
        %v2343 = vpop.f32.mrf.mxu0
        %v2344 = vadd.f32 0.0, %v2343
        %v2345 = vpop.f32.mrf.mxu0
        %2346 = vmatprep.mubr.bf16.mxu0 0
        %2347 = vmatmul.mubr.bf16.gmra.mxu0 %v2212
        %v2348 = vpop.f32.mrf.mxu0
        %v2349 = vadd.f32 0.0, %v2348
        %v2350 = vpop.f32.mrf.mxu0
        %v2351 = vpop.f32.mrf.mxu0
        %v2352 = vadd.f32 0.0, %v2351
        %v2353 = vpop.f32.mrf.mxu0
        %2354 = vmatprep.mubr.bf16.mxu0 0
        %2355 = vmatmul.mubr.bf16.gmra.mxu0 %v2215
        %v2356 = vpop.f32.mrf.mxu0
        %v2357 = vadd.f32 0.0, %v2356
        %v2358 = vpop.f32.mrf.mxu0
        %v2359 = vpop.f32.mrf.mxu0
        %v2360 = vadd.f32 0.0, %v2359
        %v2361 = vpop.f32.mrf.mxu0
        %2362 = vmatprep.mubr.bf16.mxu0 0
        %2363 = vmatmul.mubr.bf16.gmra.mxu0 %v2218
        %v2364 = vpop.f32.mrf.mxu0
        %v2365 = vadd.f32 0.0, %v2364
        %v2366 = vpop.f32.mrf.mxu0
        %v2367 = vpop.f32.mrf.mxu0
        %v2368 = vadd.f32 0.0, %v2367
        %v2369 = vpop.f32.mrf.mxu0
        %2370 = vmatprep.mubr.bf16.mxu0 0
        %2371 = vmatmul.mubr.bf16.gmra.mxu0 %v2221
        %v2372 = vpop.f32.mrf.mxu0
        %v2373 = vadd.f32 0.0, %v2372
        %v2374 = vpop.f32.mrf.mxu0
        %v2375 = vpop.f32.mrf.mxu0
        %v2376 = vadd.f32 0.0, %v2375
        %v2377 = vpop.f32.mrf.mxu0
        %2378 = vdwg.mxu0
        %v2379 = vld [vmem:[#allocation2] sm:$0xff]
        %v2380 = vld [vmem:[#allocation2 + $0x8] sm:$0xff]
        %v2381 = vld [vmem:[#allocation2 + $0x10] sm:$0xff]
        %v2382 = vld [vmem:[#allocation2 + $0x18] sm:$0xff]
        %v2383 = vld [vmem:[#allocation2 + $0x20] sm:$0xff]
        %v2384 = vld [vmem:[#allocation2 + $0x28] sm:$0xff]
        %v2385 = vld [vmem:[#allocation2 + $0x30] sm:$0xff]
        %v2386 = vld [vmem:[#allocation2 + $0x38] sm:$0xff]
        %v2387 = vld [vmem:[#allocation2 + $0x40] sm:$0xff]
        %v2388 = vld [vmem:[#allocation2 + $0x48] sm:$0xff]
        %v2389 = vld [vmem:[#allocation2 + $0x50] sm:$0xff]
        %v2390 = vld [vmem:[#allocation2 + $0x58] sm:$0xff]
        %v2391 = vld [vmem:[#allocation2 + $0x60] sm:$0xff]
        %v2392 = vld [vmem:[#allocation2 + $0x68] sm:$0xff]
        %v2393 = vld [vmem:[#allocation2 + $0x70] sm:$0xff]
        %v2394 = vld [vmem:[#allocation2 + $0x78] sm:$0xff]
        %v2395 = vld [vmem:[#allocation2 + $0x80] sm:$0xff]
        %v2396 = vld [vmem:[#allocation2 + $0x88] sm:$0xff]
        %v2397 = vld [vmem:[#allocation2 + $0x90] sm:$0xff]
        %v2398 = vld [vmem:[#allocation2 + $0x98] sm:$0xff]
        %v2399 = vld [vmem:[#allocation2 + $0xa0] sm:$0xff]
        %v2400 = vld [vmem:[#allocation2 + $0xa8] sm:$0xff]
        %v2401 = vld [vmem:[#allocation2 + $0xb0] sm:$0xff]
        %v2402 = vld [vmem:[#allocation2 + $0xb8] sm:$0xff]
        %v2403 = vld [vmem:[#allocation2 + $0xc0] sm:$0xff]
        %v2404 = vld [vmem:[#allocation2 + $0xc8] sm:$0xff]
        %v2405 = vld [vmem:[#allocation2 + $0xd0] sm:$0xff]
        %v2406 = vld [vmem:[#allocation2 + $0xd8] sm:$0xff]
        %v2407 = vld [vmem:[#allocation2 + $0xe0] sm:$0xff]
        %v2408 = vld [vmem:[#allocation2 + $0xe8] sm:$0xff]
        %v2409 = vadd.f32 %v2379, %v2261
        %v2410 = vadd.f32 %v2380, %v2264
        %v2411 = vadd.f32 %v2381, %v2269
        %v2412 = vadd.f32 %v2382, %v2272
        %v2413 = vadd.f32 %v2383, %v2277
        %v2414 = vadd.f32 %v2384, %v2280
        %v2415 = vadd.f32 %v2385, %v2285
        %v2416 = vadd.f32 %v2386, %v2288
        %v2417 = vadd.f32 %v2387, %v2293
        %v2418 = vadd.f32 %v2388, %v2296
        %v2419 = vadd.f32 %v2389, %v2301
        %v2420 = vadd.f32 %v2390, %v2304
        %v2421 = vadd.f32 %v2391, %v2309
        %v2422 = vadd.f32 %v2392, %v2312
        %v2423 = vadd.f32 %v2393, %v2317
        %v2424 = vadd.f32 %v2394, %v2320
        %v2425 = vadd.f32 %v2395, %v2325
        %v2426 = vadd.f32 %v2396, %v2328
        %v2427 = vadd.f32 %v2397, %v2333
        %v2428 = vadd.f32 %v2398, %v2336
        %v2429 = vadd.f32 %v2399, %v2341
        %v2430 = vadd.f32 %v2400, %v2344
        %v2431 = vadd.f32 %v2401, %v2349
        %v2432 = vadd.f32 %v2402, %v2352
        %v2433 = vadd.f32 %v2403, %v2357
        %v2434 = vadd.f32 %v2404, %v2360
        %v2435 = vadd.f32 %v2405, %v2365
        %v2436 = vadd.f32 %v2406, %v2368
        %v2437 = vadd.f32 %v2407, %v2373
        %v2438 = vadd.f32 %v2408, %v2376
        %2439 = vst [vmem:[#allocation2] sm:$0xff] %v2409
        %2440 = vst [vmem:[#allocation2 + $0x8] sm:$0xff] %v2410
        %2441 = vst [vmem:[#allocation2 + $0x10] sm:$0xff] %v2411
        %2442 = vst [vmem:[#allocation2 + $0x18] sm:$0xff] %v2412
        %2443 = vst [vmem:[#allocation2 + $0x20] sm:$0xff] %v2413
        %2444 = vst [vmem:[#allocation2 + $0x28] sm:$0xff] %v2414
        %2445 = vst [vmem:[#allocation2 + $0x30] sm:$0xff] %v2415
        %2446 = vst [vmem:[#allocation2 + $0x38] sm:$0xff] %v2416
        %2447 = vst [vmem:[#allocation2 + $0x40] sm:$0xff] %v2417
        %2448 = vst [vmem:[#allocation2 + $0x48] sm:$0xff] %v2418
        %2449 = vst [vmem:[#allocation2 + $0x50] sm:$0xff] %v2419
        %2450 = vst [vmem:[#allocation2 + $0x58] sm:$0xff] %v2420
        %2451 = vst [vmem:[#allocation2 + $0x60] sm:$0xff] %v2421
        %2452 = vst [vmem:[#allocation2 + $0x68] sm:$0xff] %v2422
        %2453 = vst [vmem:[#allocation2 + $0x70] sm:$0xff] %v2423
        %2454 = vst [vmem:[#allocation2 + $0x78] sm:$0xff] %v2424
        %2455 = vst [vmem:[#allocation2 + $0x80] sm:$0xff] %v2425
        %2456 = vst [vmem:[#allocation2 + $0x88] sm:$0xff] %v2426
        %2457 = vst [vmem:[#allocation2 + $0x90] sm:$0xff] %v2427
        %2458 = vst [vmem:[#allocation2 + $0x98] sm:$0xff] %v2428
        %2459 = vst [vmem:[#allocation2 + $0xa0] sm:$0xff] %v2429
        %2460 = vst [vmem:[#allocation2 + $0xa8] sm:$0xff] %v2430
        %2461 = vst [vmem:[#allocation2 + $0xb0] sm:$0xff] %v2431
        %2462 = vst [vmem:[#allocation2 + $0xb8] sm:$0xff] %v2432
        %2463 = vst [vmem:[#allocation2 + $0xc0] sm:$0xff] %v2433
        %2464 = vst [vmem:[#allocation2 + $0xc8] sm:$0xff] %v2434
        %2465 = vst [vmem:[#allocation2 + $0xd0] sm:$0xff] %v2435
        %2466 = vst [vmem:[#allocation2 + $0xd8] sm:$0xff] %v2436
        %2467 = vst [vmem:[#allocation2 + $0xe0] sm:$0xff] %v2437
        %2468 = vst [vmem:[#allocation2 + $0xe8] sm:$0xff] %v2438
        %s2469 = scalar_lea.vmem %s343, 16
        %v2470 = vld [vmem:[%s2469] sm:$0xf]
        %v2471 = vld [vmem:[%s2072] sm:$0xf]
        %v2472 = vld [vmem:[%s2072 + $0x4] sm:$0xf]
        %v2473 = vld [vmem:[%s2072 + $0x8] sm:$0x1]
        %v2474 = vld [vmem:[%s2072 + $0xc] sm:$0xf]
        %v2475 = vld [vmem:[%s2072 + $0x10] sm:$0xf]
        %v2476 = vld [vmem:[%s2072 + $0x14] sm:$0x1]
        %v2477 = vld [vmem:[%s2072 + $0x18] sm:$0xf]
        %v2478 = vld [vmem:[%s2072 + $0x1c] sm:$0xf]
        %v2479 = vld [vmem:[%s2072 + $0x20] sm:$0x1]
        %v2480 = vld [vmem:[%s2072 + $0x24] sm:$0xf]
        %v2481 = vld [vmem:[%s2072 + $0x28] sm:$0xf]
        %v2482 = vld [vmem:[%s2072 + $0x2c] sm:$0x1]
        %v2483 = vld [vmem:[%s2072 + $0x30] sm:$0xf]
        %v2484 = vld [vmem:[%s2072 + $0x34] sm:$0xf]
        %v2485 = vld [vmem:[%s2072 + $0x38] sm:$0x1]
        %v2486 = vld [vmem:[%s2072 + $0x3c] sm:$0xf]
        %v2487 = vld [vmem:[%s2072 + $0x40] sm:$0xf]
        %v2488 = vld [vmem:[%s2072 + $0x44] sm:$0x1]
        %v2489 = vld [vmem:[%s2072 + $0x48] sm:$0xf]
        %v2490 = vld [vmem:[%s2072 + $0x4c] sm:$0xf]
        %v2491 = vld [vmem:[%s2072 + $0x50] sm:$0x1]
        %v2492 = vld [vmem:[%s2072 + $0x54] sm:$0xf]
        %v2493 = vld [vmem:[%s2072 + $0x58] sm:$0xf]
        %v2494 = vld [vmem:[%s2072 + $0x5c] sm:$0x1]
        %v2495 = vld [vmem:[%s2072 + $0x60] sm:$0xf]
        %v2496 = vld [vmem:[%s2072 + $0x64] sm:$0xf]
        %v2497 = vld [vmem:[%s2072 + $0x68] sm:$0x1]
        %v2498 = vld [vmem:[%s2072 + $0x6c] sm:$0xf]
        %v2499 = vld [vmem:[%s2072 + $0x70] sm:$0xf]
        %v2500 = vld [vmem:[%s2072 + $0x74] sm:$0x1]
        %v2501 = vld [vmem:[%s2072 + $0x78] sm:$0xf]
        %v2502 = vld [vmem:[%s2072 + $0x7c] sm:$0xf]
        %v2503 = vld [vmem:[%s2072 + $0x80] sm:$0x1]
        %v2504 = vld [vmem:[%s2072 + $0x84] sm:$0xf]
        %v2505 = vld [vmem:[%s2072 + $0x88] sm:$0xf]
        %v2506 = vld [vmem:[%s2072 + $0x8c] sm:$0x1]
        %v2507 = vld [vmem:[%s2072 + $0x90] sm:$0xf]
        %v2508 = vld [vmem:[%s2072 + $0x94] sm:$0xf]
        %v2509 = vld [vmem:[%s2072 + $0x98] sm:$0x1]
        %v2510 = vld [vmem:[%s2072 + $0x9c] sm:$0xf]
        %v2511 = vld [vmem:[%s2072 + $0xa0] sm:$0xf]
        %v2512 = vld [vmem:[%s2072 + $0xa4] sm:$0x1]
        %v2513 = vld [vmem:[%s2072 + $0xa8] sm:$0xf]
        %v2514 = vld [vmem:[%s2072 + $0xac] sm:$0xf]
        %v2515 = vld [vmem:[%s2072 + $0xb0] sm:$0x1]
        %v2517 = vshrl.u32 %v2471, 16
        %v2519 = vrot.slane %v2517, 4
        %v2520 = vshll.u32 %v2471, 16
        %v2522 = vrot.slane %v2520, 5
        %v2523 = vor.u32 %v2519, %v2522
        %v2524 = vrot.slane %v2523, 4
        %v2526 = vshll.u32 %v2472, 16
        %v2528 = vrot.slane %v2526, 5
        %v2529 = vsel %vm760, %v2524, %v2528
        %v2530 = vshrl.u32 %v2472, 16
        %v2532 = vrot.slane %v2530, 4
        %v2533 = vor.u32 %v2532, %v2528
        %v2534 = vrot.slane %v2533, 4
        %v2536 = vshll.u32 %v2473, 16
        %v2538 = vrot.slane %v2536, 5
        %v2539 = vsel %vm760, %v2534, %v2538
        %v2541 = vshrl.u32 %v2474, 16
        %v2543 = vrot.slane %v2541, 4
        %v2544 = vshll.u32 %v2474, 16
        %v2546 = vrot.slane %v2544, 5
        %v2547 = vor.u32 %v2543, %v2546
        %v2548 = vrot.slane %v2547, 4
        %v2550 = vshll.u32 %v2475, 16
        %v2552 = vrot.slane %v2550, 5
        %v2553 = vsel %vm760, %v2548, %v2552
        %v2554 = vshrl.u32 %v2475, 16
        %v2556 = vrot.slane %v2554, 4
        %v2557 = vor.u32 %v2556, %v2552
        %v2558 = vrot.slane %v2557, 4
        %v2560 = vshll.u32 %v2476, 16
        %v2562 = vrot.slane %v2560, 5
        %v2563 = vsel %vm760, %v2558, %v2562
        %v2565 = vshrl.u32 %v2477, 16
        %v2567 = vrot.slane %v2565, 4
        %v2568 = vshll.u32 %v2477, 16
        %v2570 = vrot.slane %v2568, 5
        %v2571 = vor.u32 %v2567, %v2570
        %v2572 = vrot.slane %v2571, 4
        %v2574 = vshll.u32 %v2478, 16
        %v2576 = vrot.slane %v2574, 5
        %v2577 = vsel %vm760, %v2572, %v2576
        %v2578 = vshrl.u32 %v2478, 16
        %v2580 = vrot.slane %v2578, 4
        %v2581 = vor.u32 %v2580, %v2576
        %v2582 = vrot.slane %v2581, 4
        %v2584 = vshll.u32 %v2479, 16
        %v2586 = vrot.slane %v2584, 5
        %v2587 = vsel %vm760, %v2582, %v2586
        %v2589 = vshrl.u32 %v2480, 16
        %v2591 = vrot.slane %v2589, 4
        %v2592 = vshll.u32 %v2480, 16
        %v2594 = vrot.slane %v2592, 5
        %v2595 = vor.u32 %v2591, %v2594
        %v2596 = vrot.slane %v2595, 4
        %v2598 = vshll.u32 %v2481, 16
        %v2600 = vrot.slane %v2598, 5
        %v2601 = vsel %vm760, %v2596, %v2600
        %v2602 = vshrl.u32 %v2481, 16
        %v2604 = vrot.slane %v2602, 4
        %v2605 = vor.u32 %v2604, %v2600
        %v2606 = vrot.slane %v2605, 4
        %v2608 = vshll.u32 %v2482, 16
        %v2610 = vrot.slane %v2608, 5
        %v2611 = vsel %vm760, %v2606, %v2610
        %v2613 = vshrl.u32 %v2483, 16
        %v2615 = vrot.slane %v2613, 4
        %v2616 = vshll.u32 %v2483, 16
        %v2618 = vrot.slane %v2616, 5
        %v2619 = vor.u32 %v2615, %v2618
        %v2620 = vrot.slane %v2619, 4
        %v2622 = vshll.u32 %v2484, 16
        %v2624 = vrot.slane %v2622, 5
        %v2625 = vsel %vm760, %v2620, %v2624
        %v2626 = vshrl.u32 %v2484, 16
        %v2628 = vrot.slane %v2626, 4
        %v2629 = vor.u32 %v2628, %v2624
        %v2630 = vrot.slane %v2629, 4
        %v2632 = vshll.u32 %v2485, 16
        %v2634 = vrot.slane %v2632, 5
        %v2635 = vsel %vm760, %v2630, %v2634
        %v2637 = vshrl.u32 %v2486, 16
        %v2639 = vrot.slane %v2637, 4
        %v2640 = vshll.u32 %v2486, 16
        %v2642 = vrot.slane %v2640, 5
        %v2643 = vor.u32 %v2639, %v2642
        %v2644 = vrot.slane %v2643, 4
        %v2646 = vshll.u32 %v2487, 16
        %v2648 = vrot.slane %v2646, 5
        %v2649 = vsel %vm760, %v2644, %v2648
        %v2650 = vshrl.u32 %v2487, 16
        %v2652 = vrot.slane %v2650, 4
        %v2653 = vor.u32 %v2652, %v2648
        %v2654 = vrot.slane %v2653, 4
        %v2656 = vshll.u32 %v2488, 16
        %v2658 = vrot.slane %v2656, 5
        %v2659 = vsel %vm760, %v2654, %v2658
        %v2661 = vshrl.u32 %v2489, 16
        %v2663 = vrot.slane %v2661, 4
        %v2664 = vshll.u32 %v2489, 16
        %v2666 = vrot.slane %v2664, 5
        %v2667 = vor.u32 %v2663, %v2666
        %v2668 = vrot.slane %v2667, 4
        %v2670 = vshll.u32 %v2490, 16
        %v2672 = vrot.slane %v2670, 5
        %v2673 = vsel %vm760, %v2668, %v2672
        %v2674 = vshrl.u32 %v2490, 16
        %v2676 = vrot.slane %v2674, 4
        %v2677 = vor.u32 %v2676, %v2672
        %v2678 = vrot.slane %v2677, 4
        %v2680 = vshll.u32 %v2491, 16
        %v2682 = vrot.slane %v2680, 5
        %v2683 = vsel %vm760, %v2678, %v2682
        %v2685 = vshrl.u32 %v2492, 16
        %v2687 = vrot.slane %v2685, 4
        %v2688 = vshll.u32 %v2492, 16
        %v2690 = vrot.slane %v2688, 5
        %v2691 = vor.u32 %v2687, %v2690
        %v2692 = vrot.slane %v2691, 4
        %v2694 = vshll.u32 %v2493, 16
        %v2696 = vrot.slane %v2694, 5
        %v2697 = vsel %vm760, %v2692, %v2696
        %v2698 = vshrl.u32 %v2493, 16
        %v2700 = vrot.slane %v2698, 4
        %v2701 = vor.u32 %v2700, %v2696
        %v2702 = vrot.slane %v2701, 4
        %v2704 = vshll.u32 %v2494, 16
        %v2706 = vrot.slane %v2704, 5
        %v2707 = vsel %vm760, %v2702, %v2706
        %v2709 = vshrl.u32 %v2495, 16
        %v2711 = vrot.slane %v2709, 4
        %v2712 = vshll.u32 %v2495, 16
        %v2714 = vrot.slane %v2712, 5
        %v2715 = vor.u32 %v2711, %v2714
        %v2716 = vrot.slane %v2715, 4
        %v2718 = vshll.u32 %v2496, 16
        %v2720 = vrot.slane %v2718, 5
        %v2721 = vsel %vm760, %v2716, %v2720
        %v2722 = vshrl.u32 %v2496, 16
        %v2724 = vrot.slane %v2722, 4
        %v2725 = vor.u32 %v2724, %v2720
        %v2726 = vrot.slane %v2725, 4
        %v2728 = vshll.u32 %v2497, 16
        %v2730 = vrot.slane %v2728, 5
        %v2731 = vsel %vm760, %v2726, %v2730
        %v2733 = vshrl.u32 %v2498, 16
        %v2735 = vrot.slane %v2733, 4
        %v2736 = vshll.u32 %v2498, 16
        %v2738 = vrot.slane %v2736, 5
        %v2739 = vor.u32 %v2735, %v2738
        %v2740 = vrot.slane %v2739, 4
        %v2742 = vshll.u32 %v2499, 16
        %v2744 = vrot.slane %v2742, 5
        %v2745 = vsel %vm760, %v2740, %v2744
        %v2746 = vshrl.u32 %v2499, 16
        %v2748 = vrot.slane %v2746, 4
        %v2749 = vor.u32 %v2748, %v2744
        %v2750 = vrot.slane %v2749, 4
        %v2752 = vshll.u32 %v2500, 16
        %v2754 = vrot.slane %v2752, 5
        %v2755 = vsel %vm760, %v2750, %v2754
        %v2757 = vshrl.u32 %v2501, 16
        %v2759 = vrot.slane %v2757, 4
        %v2760 = vshll.u32 %v2501, 16
        %v2762 = vrot.slane %v2760, 5
        %v2763 = vor.u32 %v2759, %v2762
        %v2764 = vrot.slane %v2763, 4
        %v2766 = vshll.u32 %v2502, 16
        %v2768 = vrot.slane %v2766, 5
        %v2769 = vsel %vm760, %v2764, %v2768
        %v2770 = vshrl.u32 %v2502, 16
        %v2772 = vrot.slane %v2770, 4
        %v2773 = vor.u32 %v2772, %v2768
        %v2774 = vrot.slane %v2773, 4
        %v2776 = vshll.u32 %v2503, 16
        %v2778 = vrot.slane %v2776, 5
        %v2779 = vsel %vm760, %v2774, %v2778
        %v2781 = vshrl.u32 %v2504, 16
        %v2783 = vrot.slane %v2781, 4
        %v2784 = vshll.u32 %v2504, 16
        %v2786 = vrot.slane %v2784, 5
        %v2787 = vor.u32 %v2783, %v2786
        %v2788 = vrot.slane %v2787, 4
        %v2790 = vshll.u32 %v2505, 16
        %v2792 = vrot.slane %v2790, 5
        %v2793 = vsel %vm760, %v2788, %v2792
        %v2794 = vshrl.u32 %v2505, 16
        %v2796 = vrot.slane %v2794, 4
        %v2797 = vor.u32 %v2796, %v2792
        %v2798 = vrot.slane %v2797, 4
        %v2800 = vshll.u32 %v2506, 16
        %v2802 = vrot.slane %v2800, 5
        %v2803 = vsel %vm760, %v2798, %v2802
        %v2805 = vshrl.u32 %v2507, 16
        %v2807 = vrot.slane %v2805, 4
        %v2808 = vshll.u32 %v2507, 16
        %v2810 = vrot.slane %v2808, 5
        %v2811 = vor.u32 %v2807, %v2810
        %v2812 = vrot.slane %v2811, 4
        %v2814 = vshll.u32 %v2508, 16
        %v2816 = vrot.slane %v2814, 5
        %v2817 = vsel %vm760, %v2812, %v2816
        %v2818 = vshrl.u32 %v2508, 16
        %v2820 = vrot.slane %v2818, 4
        %v2821 = vor.u32 %v2820, %v2816
        %v2822 = vrot.slane %v2821, 4
        %v2824 = vshll.u32 %v2509, 16
        %v2826 = vrot.slane %v2824, 5
        %v2827 = vsel %vm760, %v2822, %v2826
        %v2829 = vshrl.u32 %v2510, 16
        %v2831 = vrot.slane %v2829, 4
        %v2832 = vshll.u32 %v2510, 16
        %v2834 = vrot.slane %v2832, 5
        %v2835 = vor.u32 %v2831, %v2834
        %v2836 = vrot.slane %v2835, 4
        %v2838 = vshll.u32 %v2511, 16
        %v2840 = vrot.slane %v2838, 5
        %v2841 = vsel %vm760, %v2836, %v2840
        %v2842 = vshrl.u32 %v2511, 16
        %v2844 = vrot.slane %v2842, 4
        %v2845 = vor.u32 %v2844, %v2840
        %v2846 = vrot.slane %v2845, 4
        %v2848 = vshll.u32 %v2512, 16
        %v2850 = vrot.slane %v2848, 5
        %v2851 = vsel %vm760, %v2846, %v2850
        %v2853 = vshrl.u32 %v2513, 16
        %v2855 = vrot.slane %v2853, 4
        %v2856 = vshll.u32 %v2513, 16
        %v2858 = vrot.slane %v2856, 5
        %v2859 = vor.u32 %v2855, %v2858
        %v2860 = vrot.slane %v2859, 4
        %v2862 = vshll.u32 %v2514, 16
        %v2864 = vrot.slane %v2862, 5
        %v2865 = vsel %vm760, %v2860, %v2864
        %v2866 = vshrl.u32 %v2514, 16
        %v2868 = vrot.slane %v2866, 4
        %v2869 = vor.u32 %v2868, %v2864
        %v2870 = vrot.slane %v2869, 4
        %v2872 = vshll.u32 %v2515, 16
        %v2874 = vrot.slane %v2872, 5
        %v2875 = vsel %vm760, %v2870, %v2874
        %v2876 = vunpack.c.l.b16 %v2529
        %v2877 = vunpack.c.l.b16 %v2539
        %v2878 = vunpack.c.l.b16 %v2553
        %v2879 = vunpack.c.l.b16 %v2563
        %v2880 = vunpack.c.l.b16 %v2577
        %v2881 = vunpack.c.l.b16 %v2587
        %v2882 = vunpack.c.l.b16 %v2601
        %v2883 = vunpack.c.l.b16 %v2611
        %v2884 = vunpack.c.l.b16 %v2625
        %v2885 = vunpack.c.l.b16 %v2635
        %v2886 = vunpack.c.l.b16 %v2649
        %v2887 = vunpack.c.l.b16 %v2659
        %v2888 = vunpack.c.l.b16 %v2673
        %v2889 = vunpack.c.l.b16 %v2683
        %v2890 = vunpack.c.l.b16 %v2697
        %v2891 = vunpack.c.l.b16 %v2707
        %v2892 = vunpack.c.l.b16 %v2721
        %v2893 = vunpack.c.l.b16 %v2731
        %v2894 = vunpack.c.l.b16 %v2745
        %v2895 = vunpack.c.l.b16 %v2755
        %v2896 = vunpack.c.l.b16 %v2769
        %v2897 = vunpack.c.l.b16 %v2779
        %v2898 = vunpack.c.l.b16 %v2793
        %v2899 = vunpack.c.l.b16 %v2803
        %v2900 = vunpack.c.l.b16 %v2817
        %v2901 = vunpack.c.l.b16 %v2827
        %v2902 = vunpack.c.l.b16 %v2841
        %v2903 = vunpack.c.l.b16 %v2851
        %v2904 = vunpack.c.l.b16 %v2865
        %v2905 = vunpack.c.l.b16 %v2875
        %v2906 = vpack.c.b16 %v2877, %v2876
        %v2907 = vpack.c.b16 %v2879, %v2878
        %v2908 = vpack.c.b16 %v2881, %v2880
        %v2909 = vpack.c.b16 %v2883, %v2882
        %v2910 = vpack.c.b16 %v2885, %v2884
        %v2911 = vpack.c.b16 %v2887, %v2886
        %v2912 = vpack.c.b16 %v2889, %v2888
        %v2913 = vpack.c.b16 %v2891, %v2890
        %v2914 = vpack.c.b16 %v2893, %v2892
        %v2915 = vpack.c.b16 %v2895, %v2894
        %v2916 = vpack.c.b16 %v2897, %v2896
        %v2917 = vpack.c.b16 %v2899, %v2898
        %v2918 = vpack.c.b16 %v2901, %v2900
        %v2919 = vpack.c.b16 %v2903, %v2902
        %v2920 = vpack.c.b16 %v2905, %v2904
        %v2922 = vsel %vm462, %v2906, 0
        %v2925 = vsel %vm462, %v2907, 0
        %v2928 = vsel %vm462, %v2908, 0
        %v2931 = vsel %vm462, %v2909, 0
        %v2934 = vsel %vm462, %v2910, 0
        %v2937 = vsel %vm462, %v2911, 0
        %v2940 = vsel %vm462, %v2912, 0
        %v2943 = vsel %vm462, %v2913, 0
        %v2946 = vsel %vm462, %v2914, 0
        %v2949 = vsel %vm462, %v2915, 0
        %v2952 = vsel %vm462, %v2916, 0
        %v2955 = vsel %vm462, %v2917, 0
        %v2958 = vsel %vm462, %v2918, 0
        %v2961 = vsel %vm462, %v2919, 0
        %v2964 = vsel %vm462, %v2920, 0
        %v2967 = vsel %vm511, %v2470, 0
        %2969 = vmatprep.subr.bf16.mxu0 0
        %2970 = vmatpush1.bf16.msra.mxu0 0
        %2971 = vmatprep.subr.bf16.mxu0 0
        %2972 = vmatpush1.bf16.msra.mxu0 0
        %2973 = vmatprep.subr.bf16.mxu0 0
        %2974 = vmatpush1.bf16.msra.mxu0 0
        %2975 = vmatprep.subr.bf16.mxu0 0
        %2976 = vmatpush1.bf16.msra.mxu0 0
        %2977 = vmatprep.subr.bf16.mxu0 0
        %2978 = vmatpush1.bf16.msra.mxu0 0
        %2979 = vmatprep.subr.bf16.mxu0 0
        %2980 = vmatpush1.bf16.msra.mxu0 0
        %2981 = vmatprep.subr.bf16.mxu0 0
        %2982 = vmatpush1.bf16.msra.mxu0 0
        %2983 = vmatprep.subr.bf16.mxu0 0
        %2984 = vmatpush1.bf16.msra.mxu0 %v2967
        %2985 = vmatprep.subr.bf16.mxu0 0
        %2986 = vmatpush2.bf16.msra.mxu0 0
        %2987 = vmatprep.subr.bf16.mxu0 0
        %2988 = vmatpush2.bf16.msra.mxu0 0
        %2989 = vmatprep.subr.bf16.mxu0 0
        %2990 = vmatpush2.bf16.msra.mxu0 0
        %2991 = vmatprep.subr.bf16.mxu0 0
        %2992 = vmatpush2.bf16.msra.mxu0 0
        %2993 = vmatprep.subr.bf16.mxu0 0
        %2994 = vmatpush2.bf16.msra.mxu0 0
        %2995 = vmatprep.subr.bf16.mxu0 0
        %2996 = vmatpush2.bf16.msra.mxu0 0
        %2997 = vmatprep.subr.bf16.mxu0 0
        %2998 = vmatpush2.bf16.msra.mxu0 0
        %2999 = vmatprep.subr.bf16.mxu0 0
        %3000 = vmatpush2.bf16.msra.mxu0 0
        %3001 = vmatprep.mubr.bf16.mxu0 0
        %3002 = vmatmul.mubr.bf16.gmra.mxu0 %v2922
        %v3003 = vpop.f32.mrf.mxu0
        %v3004 = vadd.f32 0.0, %v3003
        %v3005 = vpop.f32.mrf.mxu0
        %v3006 = vpop.f32.mrf.mxu0
        %v3007 = vadd.f32 0.0, %v3006
        %v3008 = vpop.f32.mrf.mxu0
        %3009 = vmatprep.mubr.bf16.mxu0 0
        %3010 = vmatmul.mubr.bf16.gmra.mxu0 %v2925
        %v3011 = vpop.f32.mrf.mxu0
        %v3012 = vadd.f32 0.0, %v3011
        %v3013 = vpop.f32.mrf.mxu0
        %v3014 = vpop.f32.mrf.mxu0
        %v3015 = vadd.f32 0.0, %v3014
        %v3016 = vpop.f32.mrf.mxu0
        %3017 = vmatprep.mubr.bf16.mxu0 0
        %3018 = vmatmul.mubr.bf16.gmra.mxu0 %v2928
        %v3019 = vpop.f32.mrf.mxu0
        %v3020 = vadd.f32 0.0, %v3019
        %v3021 = vpop.f32.mrf.mxu0
        %v3022 = vpop.f32.mrf.mxu0
        %v3023 = vadd.f32 0.0, %v3022
        %v3024 = vpop.f32.mrf.mxu0
        %3025 = vmatprep.mubr.bf16.mxu0 0
        %3026 = vmatmul.mubr.bf16.gmra.mxu0 %v2931
        %v3027 = vpop.f32.mrf.mxu0
        %v3028 = vadd.f32 0.0, %v3027
        %v3029 = vpop.f32.mrf.mxu0
        %v3030 = vpop.f32.mrf.mxu0
        %v3031 = vadd.f32 0.0, %v3030
        %v3032 = vpop.f32.mrf.mxu0
        %3033 = vmatprep.mubr.bf16.mxu0 0
        %3034 = vmatmul.mubr.bf16.gmra.mxu0 %v2934
        %v3035 = vpop.f32.mrf.mxu0
        %v3036 = vadd.f32 0.0, %v3035
        %v3037 = vpop.f32.mrf.mxu0
        %v3038 = vpop.f32.mrf.mxu0
        %v3039 = vadd.f32 0.0, %v3038
        %v3040 = vpop.f32.mrf.mxu0
        %3041 = vmatprep.mubr.bf16.mxu0 0
        %3042 = vmatmul.mubr.bf16.gmra.mxu0 %v2937
        %v3043 = vpop.f32.mrf.mxu0
        %v3044 = vadd.f32 0.0, %v3043
        %v3045 = vpop.f32.mrf.mxu0
        %v3046 = vpop.f32.mrf.mxu0
        %v3047 = vadd.f32 0.0, %v3046
        %v3048 = vpop.f32.mrf.mxu0
        %3049 = vmatprep.mubr.bf16.mxu0 0
        %3050 = vmatmul.mubr.bf16.gmra.mxu0 %v2940
        %v3051 = vpop.f32.mrf.mxu0
        %v3052 = vadd.f32 0.0, %v3051
        %v3053 = vpop.f32.mrf.mxu0
        %v3054 = vpop.f32.mrf.mxu0
        %v3055 = vadd.f32 0.0, %v3054
        %v3056 = vpop.f32.mrf.mxu0
        %3057 = vmatprep.mubr.bf16.mxu0 0
        %3058 = vmatmul.mubr.bf16.gmra.mxu0 %v2943
        %v3059 = vpop.f32.mrf.mxu0
        %v3060 = vadd.f32 0.0, %v3059
        %v3061 = vpop.f32.mrf.mxu0
        %v3062 = vpop.f32.mrf.mxu0
        %v3063 = vadd.f32 0.0, %v3062
        %v3064 = vpop.f32.mrf.mxu0
        %3065 = vmatprep.mubr.bf16.mxu0 0
        %3066 = vmatmul.mubr.bf16.gmra.mxu0 %v2946
        %v3067 = vpop.f32.mrf.mxu0
        %v3068 = vadd.f32 0.0, %v3067
        %v3069 = vpop.f32.mrf.mxu0
        %v3070 = vpop.f32.mrf.mxu0
        %v3071 = vadd.f32 0.0, %v3070
        %v3072 = vpop.f32.mrf.mxu0
        %3073 = vmatprep.mubr.bf16.mxu0 0
        %3074 = vmatmul.mubr.bf16.gmra.mxu0 %v2949
        %v3075 = vpop.f32.mrf.mxu0
        %v3076 = vadd.f32 0.0, %v3075
        %v3077 = vpop.f32.mrf.mxu0
        %v3078 = vpop.f32.mrf.mxu0
        %v3079 = vadd.f32 0.0, %v3078
        %v3080 = vpop.f32.mrf.mxu0
        %3081 = vmatprep.mubr.bf16.mxu0 0
        %3082 = vmatmul.mubr.bf16.gmra.mxu0 %v2952
        %v3083 = vpop.f32.mrf.mxu0
        %v3084 = vadd.f32 0.0, %v3083
        %v3085 = vpop.f32.mrf.mxu0
        %v3086 = vpop.f32.mrf.mxu0
        %v3087 = vadd.f32 0.0, %v3086
        %v3088 = vpop.f32.mrf.mxu0
        %3089 = vmatprep.mubr.bf16.mxu0 0
        %3090 = vmatmul.mubr.bf16.gmra.mxu0 %v2955
        %v3091 = vpop.f32.mrf.mxu0
        %v3092 = vadd.f32 0.0, %v3091
        %v3093 = vpop.f32.mrf.mxu0
        %v3094 = vpop.f32.mrf.mxu0
        %v3095 = vadd.f32 0.0, %v3094
        %v3096 = vpop.f32.mrf.mxu0
        %3097 = vmatprep.mubr.bf16.mxu0 0
        %3098 = vmatmul.mubr.bf16.gmra.mxu0 %v2958
        %v3099 = vpop.f32.mrf.mxu0
        %v3100 = vadd.f32 0.0, %v3099
        %v3101 = vpop.f32.mrf.mxu0
        %v3102 = vpop.f32.mrf.mxu0
        %v3103 = vadd.f32 0.0, %v3102
        %v3104 = vpop.f32.mrf.mxu0
        %3105 = vmatprep.mubr.bf16.mxu0 0
        %3106 = vmatmul.mubr.bf16.gmra.mxu0 %v2961
        %v3107 = vpop.f32.mrf.mxu0
        %v3108 = vadd.f32 0.0, %v3107
        %v3109 = vpop.f32.mrf.mxu0
        %v3110 = vpop.f32.mrf.mxu0
        %v3111 = vadd.f32 0.0, %v3110
        %v3112 = vpop.f32.mrf.mxu0
        %3113 = vmatprep.mubr.bf16.mxu0 0
        %3114 = vmatmul.mubr.bf16.gmra.mxu0 %v2964
        %v3115 = vpop.f32.mrf.mxu0
        %v3116 = vadd.f32 0.0, %v3115
        %v3117 = vpop.f32.mrf.mxu0
        %v3118 = vpop.f32.mrf.mxu0
        %v3119 = vadd.f32 0.0, %v3118
        %v3120 = vpop.f32.mrf.mxu0
        %3121 = vdwg.mxu0
        %v3122 = vld [vmem:[#allocation2] sm:$0xff]
        %v3123 = vld [vmem:[#allocation2 + $0x8] sm:$0xff]
        %v3124 = vld [vmem:[#allocation2 + $0x10] sm:$0xff]
        %v3125 = vld [vmem:[#allocation2 + $0x18] sm:$0xff]
        %v3126 = vld [vmem:[#allocation2 + $0x20] sm:$0xff]
        %v3127 = vld [vmem:[#allocation2 + $0x28] sm:$0xff]
        %v3128 = vld [vmem:[#allocation2 + $0x30] sm:$0xff]
        %v3129 = vld [vmem:[#allocation2 + $0x38] sm:$0xff]
        %v3130 = vld [vmem:[#allocation2 + $0x40] sm:$0xff]
        %v3131 = vld [vmem:[#allocation2 + $0x48] sm:$0xff]
        %v3132 = vld [vmem:[#allocation2 + $0x50] sm:$0xff]
        %v3133 = vld [vmem:[#allocation2 + $0x58] sm:$0xff]
        %v3134 = vld [vmem:[#allocation2 + $0x60] sm:$0xff]
        %v3135 = vld [vmem:[#allocation2 + $0x68] sm:$0xff]
        %v3136 = vld [vmem:[#allocation2 + $0x70] sm:$0xff]
        %v3137 = vld [vmem:[#allocation2 + $0x78] sm:$0xff]
        %v3138 = vld [vmem:[#allocation2 + $0x80] sm:$0xff]
        %v3139 = vld [vmem:[#allocation2 + $0x88] sm:$0xff]
        %v3140 = vld [vmem:[#allocation2 + $0x90] sm:$0xff]
        %v3141 = vld [vmem:[#allocation2 + $0x98] sm:$0xff]
        %v3142 = vld [vmem:[#allocation2 + $0xa0] sm:$0xff]
        %v3143 = vld [vmem:[#allocation2 + $0xa8] sm:$0xff]
        %v3144 = vld [vmem:[#allocation2 + $0xb0] sm:$0xff]
        %v3145 = vld [vmem:[#allocation2 + $0xb8] sm:$0xff]
        %v3146 = vld [vmem:[#allocation2 + $0xc0] sm:$0xff]
        %v3147 = vld [vmem:[#allocation2 + $0xc8] sm:$0xff]
        %v3148 = vld [vmem:[#allocation2 + $0xd0] sm:$0xff]
        %v3149 = vld [vmem:[#allocation2 + $0xd8] sm:$0xff]
        %v3150 = vld [vmem:[#allocation2 + $0xe0] sm:$0xff]
        %v3151 = vld [vmem:[#allocation2 + $0xe8] sm:$0xff]
        %v3152 = vadd.f32 %v3122, %v3004
        %v3153 = vadd.f32 %v3123, %v3007
        %v3154 = vadd.f32 %v3124, %v3012
        %v3155 = vadd.f32 %v3125, %v3015
        %v3156 = vadd.f32 %v3126, %v3020
        %v3157 = vadd.f32 %v3127, %v3023
        %v3158 = vadd.f32 %v3128, %v3028
        %v3159 = vadd.f32 %v3129, %v3031
        %v3160 = vadd.f32 %v3130, %v3036
        %v3161 = vadd.f32 %v3131, %v3039
        %v3162 = vadd.f32 %v3132, %v3044
        %v3163 = vadd.f32 %v3133, %v3047
        %v3164 = vadd.f32 %v3134, %v3052
        %v3165 = vadd.f32 %v3135, %v3055
        %v3166 = vadd.f32 %v3136, %v3060
        %v3167 = vadd.f32 %v3137, %v3063
        %v3168 = vadd.f32 %v3138, %v3068
        %v3169 = vadd.f32 %v3139, %v3071
        %v3170 = vadd.f32 %v3140, %v3076
        %v3171 = vadd.f32 %v3141, %v3079
        %v3172 = vadd.f32 %v3142, %v3084
        %v3173 = vadd.f32 %v3143, %v3087
        %v3174 = vadd.f32 %v3144, %v3092
        %v3175 = vadd.f32 %v3145, %v3095
        %v3176 = vadd.f32 %v3146, %v3100
        %v3177 = vadd.f32 %v3147, %v3103
        %v3178 = vadd.f32 %v3148, %v3108
        %v3179 = vadd.f32 %v3149, %v3111
        %v3180 = vadd.f32 %v3150, %v3116
        %v3181 = vadd.f32 %v3151, %v3119
        %3182 = vst [vmem:[#allocation2] sm:$0xff] %v3152
        %3183 = vst [vmem:[#allocation2 + $0x8] sm:$0xff] %v3153
        %3184 = vst [vmem:[#allocation2 + $0x10] sm:$0xff] %v3154
        %3185 = vst [vmem:[#allocation2 + $0x18] sm:$0xff] %v3155
        %3186 = vst [vmem:[#allocation2 + $0x20] sm:$0xff] %v3156
        %3187 = vst [vmem:[#allocation2 + $0x28] sm:$0xff] %v3157
        %3188 = vst [vmem:[#allocation2 + $0x30] sm:$0xff] %v3158
        %3189 = vst [vmem:[#allocation2 + $0x38] sm:$0xff] %v3159
        %3190 = vst [vmem:[#allocation2 + $0x40] sm:$0xff] %v3160
        %3191 = vst [vmem:[#allocation2 + $0x48] sm:$0xff] %v3161
        %3192 = vst [vmem:[#allocation2 + $0x50] sm:$0xff] %v3162
        %3193 = vst [vmem:[#allocation2 + $0x58] sm:$0xff] %v3163
        %3194 = vst [vmem:[#allocation2 + $0x60] sm:$0xff] %v3164
        %3195 = vst [vmem:[#allocation2 + $0x68] sm:$0xff] %v3165
        %3196 = vst [vmem:[#allocation2 + $0x70] sm:$0xff] %v3166
        %3197 = vst [vmem:[#allocation2 + $0x78] sm:$0xff] %v3167
        %3198 = vst [vmem:[#allocation2 + $0x80] sm:$0xff] %v3168
        %3199 = vst [vmem:[#allocation2 + $0x88] sm:$0xff] %v3169
        %3200 = vst [vmem:[#allocation2 + $0x90] sm:$0xff] %v3170
        %3201 = vst [vmem:[#allocation2 + $0x98] sm:$0xff] %v3171
        %3202 = vst [vmem:[#allocation2 + $0xa0] sm:$0xff] %v3172
        %3203 = vst [vmem:[#allocation2 + $0xa8] sm:$0xff] %v3173
        %3204 = vst [vmem:[#allocation2 + $0xb0] sm:$0xff] %v3174
        %3205 = vst [vmem:[#allocation2 + $0xb8] sm:$0xff] %v3175
        %3206 = vst [vmem:[#allocation2 + $0xc0] sm:$0xff] %v3176
        %3207 = vst [vmem:[#allocation2 + $0xc8] sm:$0xff] %v3177
        %3208 = vst [vmem:[#allocation2 + $0xd0] sm:$0xff] %v3178
        %3209 = vst [vmem:[#allocation2 + $0xd8] sm:$0xff] %v3179
        %3210 = vst [vmem:[#allocation2 + $0xe0] sm:$0xff] %v3180
        %3211 = vst [vmem:[#allocation2 + $0xe8] sm:$0xff] %v3181
        %s3212 = scalar_lea.vmem %s343, 20
        %v3213 = vld [vmem:[%s3212] sm:$0xf]
        %v3214 = vld [vmem:[%s2072] sm:$0xe]
        %v3215 = vld [vmem:[%s2072 + $0x4] sm:$0xf]
        %v3216 = vld [vmem:[%s2072 + $0x8] sm:$0x1]
        %v3217 = vld [vmem:[%s2072 + $0xc] sm:$0xe]
        %v3218 = vld [vmem:[%s2072 + $0x10] sm:$0xf]
        %v3219 = vld [vmem:[%s2072 + $0x14] sm:$0x1]
        %v3220 = vld [vmem:[%s2072 + $0x18] sm:$0xe]
        %v3221 = vld [vmem:[%s2072 + $0x1c] sm:$0xf]
        %v3222 = vld [vmem:[%s2072 + $0x20] sm:$0x1]
        %v3223 = vld [vmem:[%s2072 + $0x24] sm:$0xe]
        %v3224 = vld [vmem:[%s2072 + $0x28] sm:$0xf]
        %v3225 = vld [vmem:[%s2072 + $0x2c] sm:$0x1]
        %v3226 = vld [vmem:[%s2072 + $0x30] sm:$0xe]
        %v3227 = vld [vmem:[%s2072 + $0x34] sm:$0xf]
        %v3228 = vld [vmem:[%s2072 + $0x38] sm:$0x1]
        %v3229 = vld [vmem:[%s2072 + $0x3c] sm:$0xe]
        %v3230 = vld [vmem:[%s2072 + $0x40] sm:$0xf]
        %v3231 = vld [vmem:[%s2072 + $0x44] sm:$0x1]
        %v3232 = vld [vmem:[%s2072 + $0x48] sm:$0xe]
        %v3233 = vld [vmem:[%s2072 + $0x4c] sm:$0xf]
        %v3234 = vld [vmem:[%s2072 + $0x50] sm:$0x1]
        %v3235 = vld [vmem:[%s2072 + $0x54] sm:$0xe]
        %v3236 = vld [vmem:[%s2072 + $0x58] sm:$0xf]
        %v3237 = vld [vmem:[%s2072 + $0x5c] sm:$0x1]
        %v3238 = vld [vmem:[%s2072 + $0x60] sm:$0xe]
        %v3239 = vld [vmem:[%s2072 + $0x64] sm:$0xf]
        %v3240 = vld [vmem:[%s2072 + $0x68] sm:$0x1]
        %v3241 = vld [vmem:[%s2072 + $0x6c] sm:$0xe]
        %v3242 = vld [vmem:[%s2072 + $0x70] sm:$0xf]
        %v3243 = vld [vmem:[%s2072 + $0x74] sm:$0x1]
        %v3244 = vld [vmem:[%s2072 + $0x78] sm:$0xe]
        %v3245 = vld [vmem:[%s2072 + $0x7c] sm:$0xf]
        %v3246 = vld [vmem:[%s2072 + $0x80] sm:$0x1]
        %v3247 = vld [vmem:[%s2072 + $0x84] sm:$0xe]
        %v3248 = vld [vmem:[%s2072 + $0x88] sm:$0xf]
        %v3249 = vld [vmem:[%s2072 + $0x8c] sm:$0x1]
        %v3250 = vld [vmem:[%s2072 + $0x90] sm:$0xe]
        %v3251 = vld [vmem:[%s2072 + $0x94] sm:$0xf]
        %v3252 = vld [vmem:[%s2072 + $0x98] sm:$0x1]
        %v3253 = vld [vmem:[%s2072 + $0x9c] sm:$0xe]
        %v3254 = vld [vmem:[%s2072 + $0xa0] sm:$0xf]
        %v3255 = vld [vmem:[%s2072 + $0xa4] sm:$0x1]
        %v3256 = vld [vmem:[%s2072 + $0xa8] sm:$0xe]
        %v3257 = vld [vmem:[%s2072 + $0xac] sm:$0xf]
        %v3258 = vld [vmem:[%s2072 + $0xb0] sm:$0x1]
        %v3304 = vrot.slane %v3214, 5
        %v3305 = vrot.slane %v3304, 4
        %v3306 = vrot.slane %v3215, 5
        %v3307 = vsel %vm1601, %v3305, %v3306
        %v3308 = vrot.slane %v3306, 4
        %v3309 = vrot.slane %v3216, 5
        %v3310 = vsel %vm1601, %v3308, %v3309
        %v3311 = vrot.slane %v3217, 5
        %v3312 = vrot.slane %v3311, 4
        %v3313 = vrot.slane %v3218, 5
        %v3314 = vsel %vm1601, %v3312, %v3313
        %v3315 = vrot.slane %v3313, 4
        %v3316 = vrot.slane %v3219, 5
        %v3317 = vsel %vm1601, %v3315, %v3316
        %v3318 = vrot.slane %v3220, 5
        %v3319 = vrot.slane %v3318, 4
        %v3320 = vrot.slane %v3221, 5
        %v3321 = vsel %vm1601, %v3319, %v3320
        %v3322 = vrot.slane %v3320, 4
        %v3323 = vrot.slane %v3222, 5
        %v3324 = vsel %vm1601, %v3322, %v3323
        %v3325 = vrot.slane %v3223, 5
        %v3326 = vrot.slane %v3325, 4
        %v3327 = vrot.slane %v3224, 5
        %v3328 = vsel %vm1601, %v3326, %v3327
        %v3329 = vrot.slane %v3327, 4
        %v3330 = vrot.slane %v3225, 5
        %v3331 = vsel %vm1601, %v3329, %v3330
        %v3332 = vrot.slane %v3226, 5
        %v3333 = vrot.slane %v3332, 4
        %v3334 = vrot.slane %v3227, 5
        %v3335 = vsel %vm1601, %v3333, %v3334
        %v3336 = vrot.slane %v3334, 4
        %v3337 = vrot.slane %v3228, 5
        %v3338 = vsel %vm1601, %v3336, %v3337
        %v3339 = vrot.slane %v3229, 5
        %v3340 = vrot.slane %v3339, 4
        %v3341 = vrot.slane %v3230, 5
        %v3342 = vsel %vm1601, %v3340, %v3341
        %v3343 = vrot.slane %v3341, 4
        %v3344 = vrot.slane %v3231, 5
        %v3345 = vsel %vm1601, %v3343, %v3344
        %v3346 = vrot.slane %v3232, 5
        %v3347 = vrot.slane %v3346, 4
        %v3348 = vrot.slane %v3233, 5
        %v3349 = vsel %vm1601, %v3347, %v3348
        %v3350 = vrot.slane %v3348, 4
        %v3351 = vrot.slane %v3234, 5
        %v3352 = vsel %vm1601, %v3350, %v3351
        %v3353 = vrot.slane %v3235, 5
        %v3354 = vrot.slane %v3353, 4
        %v3355 = vrot.slane %v3236, 5
        %v3356 = vsel %vm1601, %v3354, %v3355
        %v3357 = vrot.slane %v3355, 4
        %v3358 = vrot.slane %v3237, 5
        %v3359 = vsel %vm1601, %v3357, %v3358
        %v3360 = vrot.slane %v3238, 5
        %v3361 = vrot.slane %v3360, 4
        %v3362 = vrot.slane %v3239, 5
        %v3363 = vsel %vm1601, %v3361, %v3362
        %v3364 = vrot.slane %v3362, 4
        %v3365 = vrot.slane %v3240, 5
        %v3366 = vsel %vm1601, %v3364, %v3365
        %v3367 = vrot.slane %v3241, 5
        %v3368 = vrot.slane %v3367, 4
        %v3369 = vrot.slane %v3242, 5
        %v3370 = vsel %vm1601, %v3368, %v3369
        %v3371 = vrot.slane %v3369, 4
        %v3372 = vrot.slane %v3243, 5
        %v3373 = vsel %vm1601, %v3371, %v3372
        %v3374 = vrot.slane %v3244, 5
        %v3375 = vrot.slane %v3374, 4
        %v3376 = vrot.slane %v3245, 5
        %v3377 = vsel %vm1601, %v3375, %v3376
        %v3378 = vrot.slane %v3376, 4
        %v3379 = vrot.slane %v3246, 5
        %v3380 = vsel %vm1601, %v3378, %v3379
        %v3381 = vrot.slane %v3247, 5
        %v3382 = vrot.slane %v3381, 4
        %v3383 = vrot.slane %v3248, 5
        %v3384 = vsel %vm1601, %v3382, %v3383
        %v3385 = vrot.slane %v3383, 4
        %v3386 = vrot.slane %v3249, 5
        %v3387 = vsel %vm1601, %v3385, %v3386
        %v3388 = vrot.slane %v3250, 5
        %v3389 = vrot.slane %v3388, 4
        %v3390 = vrot.slane %v3251, 5
        %v3391 = vsel %vm1601, %v3389, %v3390
        %v3392 = vrot.slane %v3390, 4
        %v3393 = vrot.slane %v3252, 5
        %v3394 = vsel %vm1601, %v3392, %v3393
        %v3395 = vrot.slane %v3253, 5
        %v3396 = vrot.slane %v3395, 4
        %v3397 = vrot.slane %v3254, 5
        %v3398 = vsel %vm1601, %v3396, %v3397
        %v3399 = vrot.slane %v3397, 4
        %v3400 = vrot.slane %v3255, 5
        %v3401 = vsel %vm1601, %v3399, %v3400
        %v3402 = vrot.slane %v3256, 5
        %v3403 = vrot.slane %v3402, 4
        %v3404 = vrot.slane %v3257, 5
        %v3405 = vsel %vm1601, %v3403, %v3404
        %v3406 = vrot.slane %v3404, 4
        %v3407 = vrot.slane %v3258, 5
        %v3408 = vsel %vm1601, %v3406, %v3407
        %v3409 = vunpack.c.l.b16 %v3307
        %v3410 = vunpack.c.l.b16 %v3310
        %v3411 = vunpack.c.l.b16 %v3314
        %v3412 = vunpack.c.l.b16 %v3317
        %v3413 = vunpack.c.l.b16 %v3321
        %v3414 = vunpack.c.l.b16 %v3324
        %v3415 = vunpack.c.l.b16 %v3328
        %v3416 = vunpack.c.l.b16 %v3331
        %v3417 = vunpack.c.l.b16 %v3335
        %v3418 = vunpack.c.l.b16 %v3338
        %v3419 = vunpack.c.l.b16 %v3342
        %v3420 = vunpack.c.l.b16 %v3345
        %v3421 = vunpack.c.l.b16 %v3349
        %v3422 = vunpack.c.l.b16 %v3352
        %v3423 = vunpack.c.l.b16 %v3356
        %v3424 = vunpack.c.l.b16 %v3359
        %v3425 = vunpack.c.l.b16 %v3363
        %v3426 = vunpack.c.l.b16 %v3366
        %v3427 = vunpack.c.l.b16 %v3370
        %v3428 = vunpack.c.l.b16 %v3373
        %v3429 = vunpack.c.l.b16 %v3377
        %v3430 = vunpack.c.l.b16 %v3380
        %v3431 = vunpack.c.l.b16 %v3384
        %v3432 = vunpack.c.l.b16 %v3387
        %v3433 = vunpack.c.l.b16 %v3391
        %v3434 = vunpack.c.l.b16 %v3394
        %v3435 = vunpack.c.l.b16 %v3398
        %v3436 = vunpack.c.l.b16 %v3401
        %v3437 = vunpack.c.l.b16 %v3405
        %v3438 = vunpack.c.l.b16 %v3408
        %v3439 = vpack.c.b16 %v3410, %v3409
        %v3440 = vpack.c.b16 %v3412, %v3411
        %v3441 = vpack.c.b16 %v3414, %v3413
        %v3442 = vpack.c.b16 %v3416, %v3415
        %v3443 = vpack.c.b16 %v3418, %v3417
        %v3444 = vpack.c.b16 %v3420, %v3419
        %v3445 = vpack.c.b16 %v3422, %v3421
        %v3446 = vpack.c.b16 %v3424, %v3423
        %v3447 = vpack.c.b16 %v3426, %v3425
        %v3448 = vpack.c.b16 %v3428, %v3427
        %v3449 = vpack.c.b16 %v3430, %v3429
        %v3450 = vpack.c.b16 %v3432, %v3431
        %v3451 = vpack.c.b16 %v3434, %v3433
        %v3452 = vpack.c.b16 %v3436, %v3435
        %v3453 = vpack.c.b16 %v3438, %v3437
        %v3455 = vsel %vm462, %v3439, 0
        %v3458 = vsel %vm462, %v3440, 0
        %v3461 = vsel %vm462, %v3441, 0
        %v3464 = vsel %vm462, %v3442, 0
        %v3467 = vsel %vm462, %v3443, 0
        %v3470 = vsel %vm462, %v3444, 0
        %v3473 = vsel %vm462, %v3445, 0
        %v3476 = vsel %vm462, %v3446, 0
        %v3479 = vsel %vm462, %v3447, 0
        %v3482 = vsel %vm462, %v3448, 0
        %v3485 = vsel %vm462, %v3449, 0
        %v3488 = vsel %vm462, %v3450, 0
        %v3491 = vsel %vm462, %v3451, 0
        %v3494 = vsel %vm462, %v3452, 0
        %v3497 = vsel %vm462, %v3453, 0
        %v3500 = vsel %vm511, %v3213, 0
        %3502 = vmatprep.subr.bf16.mxu0 0
        %3503 = vmatpush1.bf16.msra.mxu0 0
        %3504 = vmatprep.subr.bf16.mxu0 0
        %3505 = vmatpush1.bf16.msra.mxu0 0
        %3506 = vmatprep.subr.bf16.mxu0 0
        %3507 = vmatpush1.bf16.msra.mxu0 0
        %3508 = vmatprep.subr.bf16.mxu0 0
        %3509 = vmatpush1.bf16.msra.mxu0 0
        %3510 = vmatprep.subr.bf16.mxu0 0
        %3511 = vmatpush1.bf16.msra.mxu0 0
        %3512 = vmatprep.subr.bf16.mxu0 0
        %3513 = vmatpush1.bf16.msra.mxu0 0
        %3514 = vmatprep.subr.bf16.mxu0 0
        %3515 = vmatpush1.bf16.msra.mxu0 0
        %3516 = vmatprep.subr.bf16.mxu0 0
        %3517 = vmatpush1.bf16.msra.mxu0 %v3500
        %3518 = vmatprep.subr.bf16.mxu0 0
        %3519 = vmatpush2.bf16.msra.mxu0 0
        %3520 = vmatprep.subr.bf16.mxu0 0
        %3521 = vmatpush2.bf16.msra.mxu0 0
        %3522 = vmatprep.subr.bf16.mxu0 0
        %3523 = vmatpush2.bf16.msra.mxu0 0
        %3524 = vmatprep.subr.bf16.mxu0 0
        %3525 = vmatpush2.bf16.msra.mxu0 0
        %3526 = vmatprep.subr.bf16.mxu0 0
        %3527 = vmatpush2.bf16.msra.mxu0 0
        %3528 = vmatprep.subr.bf16.mxu0 0
        %3529 = vmatpush2.bf16.msra.mxu0 0
        %3530 = vmatprep.subr.bf16.mxu0 0
        %3531 = vmatpush2.bf16.msra.mxu0 0
        %3532 = vmatprep.subr.bf16.mxu0 0
        %3533 = vmatpush2.bf16.msra.mxu0 0
        %3534 = vmatprep.mubr.bf16.mxu0 0
        %3535 = vmatmul.mubr.bf16.gmra.mxu0 %v3455
        %v3536 = vpop.f32.mrf.mxu0
        %v3537 = vadd.f32 0.0, %v3536
        %v3538 = vpop.f32.mrf.mxu0
        %v3539 = vpop.f32.mrf.mxu0
        %v3540 = vadd.f32 0.0, %v3539
        %v3541 = vpop.f32.mrf.mxu0
        %3542 = vmatprep.mubr.bf16.mxu0 0
        %3543 = vmatmul.mubr.bf16.gmra.mxu0 %v3458
        %v3544 = vpop.f32.mrf.mxu0
        %v3545 = vadd.f32 0.0, %v3544
        %v3546 = vpop.f32.mrf.mxu0
        %v3547 = vpop.f32.mrf.mxu0
        %v3548 = vadd.f32 0.0, %v3547
        %v3549 = vpop.f32.mrf.mxu0
        %3550 = vmatprep.mubr.bf16.mxu0 0
        %3551 = vmatmul.mubr.bf16.gmra.mxu0 %v3461
        %v3552 = vpop.f32.mrf.mxu0
        %v3553 = vadd.f32 0.0, %v3552
        %v3554 = vpop.f32.mrf.mxu0
        %v3555 = vpop.f32.mrf.mxu0
        %v3556 = vadd.f32 0.0, %v3555
        %v3557 = vpop.f32.mrf.mxu0
        %3558 = vmatprep.mubr.bf16.mxu0 0
        %3559 = vmatmul.mubr.bf16.gmra.mxu0 %v3464
        %v3560 = vpop.f32.mrf.mxu0
        %v3561 = vadd.f32 0.0, %v3560
        %v3562 = vpop.f32.mrf.mxu0
        %v3563 = vpop.f32.mrf.mxu0
        %v3564 = vadd.f32 0.0, %v3563
        %v3565 = vpop.f32.mrf.mxu0
        %3566 = vmatprep.mubr.bf16.mxu0 0
        %3567 = vmatmul.mubr.bf16.gmra.mxu0 %v3467
        %v3568 = vpop.f32.mrf.mxu0
        %v3569 = vadd.f32 0.0, %v3568
        %v3570 = vpop.f32.mrf.mxu0
        %v3571 = vpop.f32.mrf.mxu0
        %v3572 = vadd.f32 0.0, %v3571
        %v3573 = vpop.f32.mrf.mxu0
        %3574 = vmatprep.mubr.bf16.mxu0 0
        %3575 = vmatmul.mubr.bf16.gmra.mxu0 %v3470
        %v3576 = vpop.f32.mrf.mxu0
        %v3577 = vadd.f32 0.0, %v3576
        %v3578 = vpop.f32.mrf.mxu0
        %v3579 = vpop.f32.mrf.mxu0
        %v3580 = vadd.f32 0.0, %v3579
        %v3581 = vpop.f32.mrf.mxu0
        %3582 = vmatprep.mubr.bf16.mxu0 0
        %3583 = vmatmul.mubr.bf16.gmra.mxu0 %v3473
        %v3584 = vpop.f32.mrf.mxu0
        %v3585 = vadd.f32 0.0, %v3584
        %v3586 = vpop.f32.mrf.mxu0
        %v3587 = vpop.f32.mrf.mxu0
        %v3588 = vadd.f32 0.0, %v3587
        %v3589 = vpop.f32.mrf.mxu0
        %3590 = vmatprep.mubr.bf16.mxu0 0
        %3591 = vmatmul.mubr.bf16.gmra.mxu0 %v3476
        %v3592 = vpop.f32.mrf.mxu0
        %v3593 = vadd.f32 0.0, %v3592
        %v3594 = vpop.f32.mrf.mxu0
        %v3595 = vpop.f32.mrf.mxu0
        %v3596 = vadd.f32 0.0, %v3595
        %v3597 = vpop.f32.mrf.mxu0
        %3598 = vmatprep.mubr.bf16.mxu0 0
        %3599 = vmatmul.mubr.bf16.gmra.mxu0 %v3479
        %v3600 = vpop.f32.mrf.mxu0
        %v3601 = vadd.f32 0.0, %v3600
        %v3602 = vpop.f32.mrf.mxu0
        %v3603 = vpop.f32.mrf.mxu0
        %v3604 = vadd.f32 0.0, %v3603
        %v3605 = vpop.f32.mrf.mxu0
        %3606 = vmatprep.mubr.bf16.mxu0 0
        %3607 = vmatmul.mubr.bf16.gmra.mxu0 %v3482
        %v3608 = vpop.f32.mrf.mxu0
        %v3609 = vadd.f32 0.0, %v3608
        %v3610 = vpop.f32.mrf.mxu0
        %v3611 = vpop.f32.mrf.mxu0
        %v3612 = vadd.f32 0.0, %v3611
        %v3613 = vpop.f32.mrf.mxu0
        %3614 = vmatprep.mubr.bf16.mxu0 0
        %3615 = vmatmul.mubr.bf16.gmra.mxu0 %v3485
        %v3616 = vpop.f32.mrf.mxu0
        %v3617 = vadd.f32 0.0, %v3616
        %v3618 = vpop.f32.mrf.mxu0
        %v3619 = vpop.f32.mrf.mxu0
        %v3620 = vadd.f32 0.0, %v3619
        %v3621 = vpop.f32.mrf.mxu0
        %3622 = vmatprep.mubr.bf16.mxu0 0
        %3623 = vmatmul.mubr.bf16.gmra.mxu0 %v3488
        %v3624 = vpop.f32.mrf.mxu0
        %v3625 = vadd.f32 0.0, %v3624
        %v3626 = vpop.f32.mrf.mxu0
        %v3627 = vpop.f32.mrf.mxu0
        %v3628 = vadd.f32 0.0, %v3627
        %v3629 = vpop.f32.mrf.mxu0
        %3630 = vmatprep.mubr.bf16.mxu0 0
        %3631 = vmatmul.mubr.bf16.gmra.mxu0 %v3491
        %v3632 = vpop.f32.mrf.mxu0
        %v3633 = vadd.f32 0.0, %v3632
        %v3634 = vpop.f32.mrf.mxu0
        %v3635 = vpop.f32.mrf.mxu0
        %v3636 = vadd.f32 0.0, %v3635
        %v3637 = vpop.f32.mrf.mxu0
        %3638 = vmatprep.mubr.bf16.mxu0 0
        %3639 = vmatmul.mubr.bf16.gmra.mxu0 %v3494
        %v3640 = vpop.f32.mrf.mxu0
        %v3641 = vadd.f32 0.0, %v3640
        %v3642 = vpop.f32.mrf.mxu0
        %v3643 = vpop.f32.mrf.mxu0
        %v3644 = vadd.f32 0.0, %v3643
        %v3645 = vpop.f32.mrf.mxu0
        %3646 = vmatprep.mubr.bf16.mxu0 0
        %3647 = vmatmul.mubr.bf16.gmra.mxu0 %v3497
        %v3648 = vpop.f32.mrf.mxu0
        %v3649 = vadd.f32 0.0, %v3648
        %v3650 = vpop.f32.mrf.mxu0
        %v3651 = vpop.f32.mrf.mxu0
        %v3652 = vadd.f32 0.0, %v3651
        %v3653 = vpop.f32.mrf.mxu0
        %3654 = vdwg.mxu0
        %v3655 = vld [vmem:[#allocation2] sm:$0xff]
        %v3656 = vld [vmem:[#allocation2 + $0x8] sm:$0xff]
        %v3657 = vld [vmem:[#allocation2 + $0x10] sm:$0xff]
        %v3658 = vld [vmem:[#allocation2 + $0x18] sm:$0xff]
        %v3659 = vld [vmem:[#allocation2 + $0x20] sm:$0xff]
        %v3660 = vld [vmem:[#allocation2 + $0x28] sm:$0xff]
        %v3661 = vld [vmem:[#allocation2 + $0x30] sm:$0xff]
        %v3662 = vld [vmem:[#allocation2 + $0x38] sm:$0xff]
        %v3663 = vld [vmem:[#allocation2 + $0x40] sm:$0xff]
        %v3664 = vld [vmem:[#allocation2 + $0x48] sm:$0xff]
        %v3665 = vld [vmem:[#allocation2 + $0x50] sm:$0xff]
        %v3666 = vld [vmem:[#allocation2 + $0x58] sm:$0xff]
        %v3667 = vld [vmem:[#allocation2 + $0x60] sm:$0xff]
        %v3668 = vld [vmem:[#allocation2 + $0x68] sm:$0xff]
        %v3669 = vld [vmem:[#allocation2 + $0x70] sm:$0xff]
        %v3670 = vld [vmem:[#allocation2 + $0x78] sm:$0xff]
        %v3671 = vld [vmem:[#allocation2 + $0x80] sm:$0xff]
        %v3672 = vld [vmem:[#allocation2 + $0x88] sm:$0xff]
        %v3673 = vld [vmem:[#allocation2 + $0x90] sm:$0xff]
        %v3674 = vld [vmem:[#allocation2 + $0x98] sm:$0xff]
        %v3675 = vld [vmem:[#allocation2 + $0xa0] sm:$0xff]
        %v3676 = vld [vmem:[#allocation2 + $0xa8] sm:$0xff]
        %v3677 = vld [vmem:[#allocation2 + $0xb0] sm:$0xff]
        %v3678 = vld [vmem:[#allocation2 + $0xb8] sm:$0xff]
        %v3679 = vld [vmem:[#allocation2 + $0xc0] sm:$0xff]
        %v3680 = vld [vmem:[#allocation2 + $0xc8] sm:$0xff]
        %v3681 = vld [vmem:[#allocation2 + $0xd0] sm:$0xff]
        %v3682 = vld [vmem:[#allocation2 + $0xd8] sm:$0xff]
        %v3683 = vld [vmem:[#allocation2 + $0xe0] sm:$0xff]
        %v3684 = vld [vmem:[#allocation2 + $0xe8] sm:$0xff]
        %v3685 = vadd.f32 %v3655, %v3537
        %v3686 = vadd.f32 %v3656, %v3540
        %v3687 = vadd.f32 %v3657, %v3545
        %v3688 = vadd.f32 %v3658, %v3548
        %v3689 = vadd.f32 %v3659, %v3553
        %v3690 = vadd.f32 %v3660, %v3556
        %v3691 = vadd.f32 %v3661, %v3561
        %v3692 = vadd.f32 %v3662, %v3564
        %v3693 = vadd.f32 %v3663, %v3569
        %v3694 = vadd.f32 %v3664, %v3572
        %v3695 = vadd.f32 %v3665, %v3577
        %v3696 = vadd.f32 %v3666, %v3580
        %v3697 = vadd.f32 %v3667, %v3585
        %v3698 = vadd.f32 %v3668, %v3588
        %v3699 = vadd.f32 %v3669, %v3593
        %v3700 = vadd.f32 %v3670, %v3596
        %v3701 = vadd.f32 %v3671, %v3601
        %v3702 = vadd.f32 %v3672, %v3604
        %v3703 = vadd.f32 %v3673, %v3609
        %v3704 = vadd.f32 %v3674, %v3612
        %v3705 = vadd.f32 %v3675, %v3617
        %v3706 = vadd.f32 %v3676, %v3620
        %v3707 = vadd.f32 %v3677, %v3625
        %v3708 = vadd.f32 %v3678, %v3628
        %v3709 = vadd.f32 %v3679, %v3633
        %v3710 = vadd.f32 %v3680, %v3636
        %v3711 = vadd.f32 %v3681, %v3641
        %v3712 = vadd.f32 %v3682, %v3644
        %v3713 = vadd.f32 %v3683, %v3649
        %v3714 = vadd.f32 %v3684, %v3652
        %3715 = vst [vmem:[#allocation2] sm:$0xff] %v3685
        %3716 = vst [vmem:[#allocation2 + $0x8] sm:$0xff] %v3686
        %3717 = vst [vmem:[#allocation2 + $0x10] sm:$0xff] %v3687
        %3718 = vst [vmem:[#allocation2 + $0x18] sm:$0xff] %v3688
        %3719 = vst [vmem:[#allocation2 + $0x20] sm:$0xff] %v3689
        %3720 = vst [vmem:[#allocation2 + $0x28] sm:$0xff] %v3690
        %3721 = vst [vmem:[#allocation2 + $0x30] sm:$0xff] %v3691
        %3722 = vst [vmem:[#allocation2 + $0x38] sm:$0xff] %v3692
        %3723 = vst [vmem:[#allocation2 + $0x40] sm:$0xff] %v3693
        %3724 = vst [vmem:[#allocation2 + $0x48] sm:$0xff] %v3694
        %3725 = vst [vmem:[#allocation2 + $0x50] sm:$0xff] %v3695
        %3726 = vst [vmem:[#allocation2 + $0x58] sm:$0xff] %v3696
        %3727 = vst [vmem:[#allocation2 + $0x60] sm:$0xff] %v3697
        %3728 = vst [vmem:[#allocation2 + $0x68] sm:$0xff] %v3698
        %3729 = vst [vmem:[#allocation2 + $0x70] sm:$0xff] %v3699
        %3730 = vst [vmem:[#allocation2 + $0x78] sm:$0xff] %v3700
        %3731 = vst [vmem:[#allocation2 + $0x80] sm:$0xff] %v3701
        %3732 = vst [vmem:[#allocation2 + $0x88] sm:$0xff] %v3702
        %3733 = vst [vmem:[#allocation2 + $0x90] sm:$0xff] %v3703
        %3734 = vst [vmem:[#allocation2 + $0x98] sm:$0xff] %v3704
        %3735 = vst [vmem:[#allocation2 + $0xa0] sm:$0xff] %v3705
        %3736 = vst [vmem:[#allocation2 + $0xa8] sm:$0xff] %v3706
        %3737 = vst [vmem:[#allocation2 + $0xb0] sm:$0xff] %v3707
        %3738 = vst [vmem:[#allocation2 + $0xb8] sm:$0xff] %v3708
        %3739 = vst [vmem:[#allocation2 + $0xc0] sm:$0xff] %v3709
        %3740 = vst [vmem:[#allocation2 + $0xc8] sm:$0xff] %v3710
        %3741 = vst [vmem:[#allocation2 + $0xd0] sm:$0xff] %v3711
        %3742 = vst [vmem:[#allocation2 + $0xd8] sm:$0xff] %v3712
        %3743 = vst [vmem:[#allocation2 + $0xe0] sm:$0xff] %v3713
        %3744 = vst [vmem:[#allocation2 + $0xe8] sm:$0xff] %v3714
        %v3745 = vld [vmem:[%s2070] sm:$0xf]
        %v3746 = vld [vmem:[%s336] sm:$0xf]
        %v3747 = vld [vmem:[%s336 + $0x4] sm:$0xf]
        %v3750 = vunpack.c.l.b16 %v3746
        %v3751 = vunpack.c.l.b16 %v3747
        %v3752 = vpack.c.b16 %v3751, %v3750
        %v3754 = vsel %vm462, %v3752, 0
        %v3757 = vsel %vm511, %v3745, 0
        %3759 = vmatprep.subr.bf16.mxu0 0
        %3760 = vmatpush1.bf16.msra.mxu0 0
        %3761 = vmatprep.subr.bf16.mxu0 0
        %3762 = vmatpush1.bf16.msra.mxu0 0
        %3763 = vmatprep.subr.bf16.mxu0 0
        %3764 = vmatpush1.bf16.msra.mxu0 0
        %3765 = vmatprep.subr.bf16.mxu0 0
        %3766 = vmatpush1.bf16.msra.mxu0 0
        %3767 = vmatprep.subr.bf16.mxu0 0
        %3768 = vmatpush1.bf16.msra.mxu0 0
        %3769 = vmatprep.subr.bf16.mxu0 0
        %3770 = vmatpush1.bf16.msra.mxu0 0
        %3771 = vmatprep.subr.bf16.mxu0 0
        %3772 = vmatpush1.bf16.msra.mxu0 0
        %3773 = vmatprep.subr.bf16.mxu0 0
        %3774 = vmatpush1.bf16.msra.mxu0 %v3757
        %3775 = vmatprep.subr.bf16.mxu0 0
        %3776 = vmatpush2.bf16.msra.mxu0 0
        %3777 = vmatprep.subr.bf16.mxu0 0
        %3778 = vmatpush2.bf16.msra.mxu0 0
        %3779 = vmatprep.subr.bf16.mxu0 0
        %3780 = vmatpush2.bf16.msra.mxu0 0
        %3781 = vmatprep.subr.bf16.mxu0 0
        %3782 = vmatpush2.bf16.msra.mxu0 0
        %3783 = vmatprep.subr.bf16.mxu0 0
        %3784 = vmatpush2.bf16.msra.mxu0 0
        %3785 = vmatprep.subr.bf16.mxu0 0
        %3786 = vmatpush2.bf16.msra.mxu0 0
        %3787 = vmatprep.subr.bf16.mxu0 0
        %3788 = vmatpush2.bf16.msra.mxu0 0
        %3789 = vmatprep.subr.bf16.mxu0 0
        %3790 = vmatpush2.bf16.msra.mxu0 0
        %3791 = vmatprep.mubr.bf16.mxu0 0
        %3792 = vmatmul.mubr.bf16.gmra.mxu0 %v3754
        %v3793 = vpop.f32.mrf.mxu0
        %v3794 = vadd.f32 0.0, %v3793
        %v3795 = vpop.f32.mrf.mxu0
        %v3796 = vpop.f32.mrf.mxu0
        %v3797 = vadd.f32 0.0, %v3796
        %v3798 = vpop.f32.mrf.mxu0
        %3799 = vdwg.mxu0
        %v3800 = vld [vmem:[#allocation2 + $0xf0] sm:$0xff]
        %v3801 = vld [vmem:[#allocation2 + $0xf8] sm:$0xff]
        %v3802 = vadd.f32 %v3800, %v3794
        %v3803 = vadd.f32 %v3801, %v3797
        %3804 = vst [vmem:[#allocation2 + $0xf0] sm:$0xff] %v3802
        %3805 = vst [vmem:[#allocation2 + $0xf8] sm:$0xff] %v3803
        %v3806 = vld [vmem:[%s2469] sm:$0xf]
        %v3807 = vld [vmem:[%s336] sm:$0xf]
        %v3808 = vld [vmem:[%s336 + $0x4] sm:$0xf]
        %v3809 = vld [vmem:[%s336 + $0x8] sm:$0x1]
        %v3813 = vunpack.c.l.b16 %v3807
        %v3814 = vunpack.c.l.b16 %v3808
        %v3815 = vunpack.c.l.b16 %v3809
        %v3816 = vpack.c.b16 %v3814, %v3813
        %v3817 = vpack.c.b16 %v3815, %v3815
        %vm3818 = vsmask.f32 7424
        %v3820 = vshrl.u32 %v3816, 16
        %v3822 = vshll.u32 %v3816, 16
        %v3824 = vrot.slane %v3822, 1
        %v3825 = vor.u32 %v3820, %v3824
        %v3827 = vshll.u32 %v3817, 16
        %v3829 = vrot.slane %v3827, 1
        %v3830 = vsel %vm3818, %v3825, %v3829
        %v3832 = vsel %vm462, %v3830, 0
        %v3835 = vsel %vm511, %v3806, 0
        %3837 = vmatprep.subr.bf16.mxu0 0
        %3838 = vmatpush1.bf16.msra.mxu0 0
        %3839 = vmatprep.subr.bf16.mxu0 0
        %3840 = vmatpush1.bf16.msra.mxu0 0
        %3841 = vmatprep.subr.bf16.mxu0 0
        %3842 = vmatpush1.bf16.msra.mxu0 0
        %3843 = vmatprep.subr.bf16.mxu0 0
        %3844 = vmatpush1.bf16.msra.mxu0 0
        %3845 = vmatprep.subr.bf16.mxu0 0
        %3846 = vmatpush1.bf16.msra.mxu0 0
        %3847 = vmatprep.subr.bf16.mxu0 0
        %3848 = vmatpush1.bf16.msra.mxu0 0
        %3849 = vmatprep.subr.bf16.mxu0 0
        %3850 = vmatpush1.bf16.msra.mxu0 0
        %3851 = vmatprep.subr.bf16.mxu0 0
        %3852 = vmatpush1.bf16.msra.mxu0 %v3835
        %3853 = vmatprep.subr.bf16.mxu0 0
        %3854 = vmatpush2.bf16.msra.mxu0 0
        %3855 = vmatprep.subr.bf16.mxu0 0
        %3856 = vmatpush2.bf16.msra.mxu0 0
        %3857 = vmatprep.subr.bf16.mxu0 0
        %3858 = vmatpush2.bf16.msra.mxu0 0
        %3859 = vmatprep.subr.bf16.mxu0 0
        %3860 = vmatpush2.bf16.msra.mxu0 0
        %3861 = vmatprep.subr.bf16.mxu0 0
        %3862 = vmatpush2.bf16.msra.mxu0 0
        %3863 = vmatprep.subr.bf16.mxu0 0
        %3864 = vmatpush2.bf16.msra.mxu0 0
        %3865 = vmatprep.subr.bf16.mxu0 0
        %3866 = vmatpush2.bf16.msra.mxu0 0
        %3867 = vmatprep.subr.bf16.mxu0 0
        %3868 = vmatpush2.bf16.msra.mxu0 0
        %3869 = vmatprep.mubr.bf16.mxu0 0
        %3870 = vmatmul.mubr.bf16.gmra.mxu0 %v3832
        %v3871 = vpop.f32.mrf.mxu0
        %v3872 = vadd.f32 0.0, %v3871
        %v3873 = vpop.f32.mrf.mxu0
        %v3874 = vpop.f32.mrf.mxu0
        %v3875 = vadd.f32 0.0, %v3874
        %v3876 = vpop.f32.mrf.mxu0
        %3877 = vdwg.mxu0
        %v3878 = vld [vmem:[#allocation2 + $0xf0] sm:$0xff]
        %v3879 = vld [vmem:[#allocation2 + $0xf8] sm:$0xff]
        %v3880 = vadd.f32 %v3878, %v3872
        %v3881 = vadd.f32 %v3879, %v3875
        %3882 = vst [vmem:[#allocation2 + $0xf0] sm:$0xff] %v3880
        %3883 = vst [vmem:[#allocation2 + $0xf8] sm:$0xff] %v3881
        %v3884 = vld [vmem:[%s3212] sm:$0xf]
        %v3885 = vld [vmem:[%s336] sm:$0xe]
        %v3886 = vld [vmem:[%s336 + $0x4] sm:$0xf]
        %v3887 = vld [vmem:[%s336 + $0x8] sm:$0x1]
        %v3891 = vunpack.c.l.b16 %v3885
        %v3892 = vunpack.c.l.b16 %v3886
        %v3893 = vunpack.c.l.b16 %v3887
        %v3894 = vpack.c.b16 %v3892, %v3891
        %v3895 = vpack.c.b16 %v3893, %v3893
        %vm3896 = vcmask 1046528
        %v3897 = vrot.slane %v3894, 1
        %v3898 = vrot.slane %v3895, 1
        %v3899 = vsel %vm3896, %v3897, %v3898
        %v3901 = vsel %vm462, %v3899, 0
        %v3904 = vsel %vm511, %v3884, 0
        %3906 = vmatprep.subr.bf16.mxu0 0
        %3907 = vmatpush1.bf16.msra.mxu0 0
        %3908 = vmatprep.subr.bf16.mxu0 0
        %3909 = vmatpush1.bf16.msra.mxu0 0
        %3910 = vmatprep.subr.bf16.mxu0 0
        %3911 = vmatpush1.bf16.msra.mxu0 0
        %3912 = vmatprep.subr.bf16.mxu0 0
        %3913 = vmatpush1.bf16.msra.mxu0 0
        %3914 = vmatprep.subr.bf16.mxu0 0
        %3915 = vmatpush1.bf16.msra.mxu0 0
        %3916 = vmatprep.subr.bf16.mxu0 0
        %3917 = vmatpush1.bf16.msra.mxu0 0
        %3918 = vmatprep.subr.bf16.mxu0 0
        %3919 = vmatpush1.bf16.msra.mxu0 0
        %3920 = vmatprep.subr.bf16.mxu0 0
        %3921 = vmatpush1.bf16.msra.mxu0 %v3904
        %3922 = vmatprep.subr.bf16.mxu0 0
        %3923 = vmatpush2.bf16.msra.mxu0 0
        %3924 = vmatprep.subr.bf16.mxu0 0
        %3925 = vmatpush2.bf16.msra.mxu0 0
        %3926 = vmatprep.subr.bf16.mxu0 0
        %3927 = vmatpush2.bf16.msra.mxu0 0
        %3928 = vmatprep.subr.bf16.mxu0 0
        %3929 = vmatpush2.bf16.msra.mxu0 0
        %3930 = vmatprep.subr.bf16.mxu0 0
        %3931 = vmatpush2.bf16.msra.mxu0 0
        %3932 = vmatprep.subr.bf16.mxu0 0
        %3933 = vmatpush2.bf16.msra.mxu0 0
        %3934 = vmatprep.subr.bf16.mxu0 0
        %3935 = vmatpush2.bf16.msra.mxu0 0
        %3936 = vmatprep.subr.bf16.mxu0 0
        %3937 = vmatpush2.bf16.msra.mxu0 0
        %3938 = vmatprep.mubr.bf16.mxu0 0
        %3939 = vmatmul.mubr.bf16.gmra.mxu0 %v3901
        %v3940 = vpop.f32.mrf.mxu0
        %v3941 = vadd.f32 0.0, %v3940
        %v3942 = vpop.f32.mrf.mxu0
        %v3943 = vpop.f32.mrf.mxu0
        %v3944 = vadd.f32 0.0, %v3943
        %v3945 = vpop.f32.mrf.mxu0
        %3946 = vdwg.mxu0
        %v3947 = vld [vmem:[#allocation2 + $0xf0] sm:$0xff]
        %v3948 = vld [vmem:[#allocation2 + $0xf8] sm:$0xff]
        %v3949 = vadd.f32 %v3947, %v3941
        %v3950 = vadd.f32 %v3948, %v3944
        %3951 = vst [vmem:[#allocation2 + $0xf0] sm:$0xff] %v3949
        %3952 = vst [vmem:[#allocation2 + $0xf8] sm:$0xff] %v3950
        %s3953 = scalar_lea.vmem %s343, 24
        %v3954 = vld [vmem:[%s3953] sm:$0xf]
        %s3955 = scalar_lea.vmem %s318, 24
        %v3956 = vld [vmem:[%s3955] sm:$0xf]
        %v3957 = vld [vmem:[%s3955 + $0x4] sm:$0xf]
        %v3958 = vld [vmem:[%s3955 + $0xc] sm:$0xf]
        %v3959 = vld [vmem:[%s3955 + $0x10] sm:$0xf]
        %v3960 = vld [vmem:[%s3955 + $0x18] sm:$0xf]
        %v3961 = vld [vmem:[%s3955 + $0x1c] sm:$0xf]
        %v3962 = vld [vmem:[%s3955 + $0x24] sm:$0xf]
        %v3963 = vld [vmem:[%s3955 + $0x28] sm:$0xf]
        %v3964 = vld [vmem:[%s3955 + $0x30] sm:$0xf]
        %v3965 = vld [vmem:[%s3955 + $0x34] sm:$0xf]
        %v3966 = vld [vmem:[%s3955 + $0x3c] sm:$0xf]
        %v3967 = vld [vmem:[%s3955 + $0x40] sm:$0xf]
        %v3968 = vld [vmem:[%s3955 + $0x48] sm:$0xf]
        %v3969 = vld [vmem:[%s3955 + $0x4c] sm:$0xf]
        %v3970 = vld [vmem:[%s3955 + $0x54] sm:$0xf]
        %v3971 = vld [vmem:[%s3955 + $0x58] sm:$0xf]
        %v3972 = vld [vmem:[%s3955 + $0x60] sm:$0xf]
        %v3973 = vld [vmem:[%s3955 + $0x64] sm:$0xf]
        %v3974 = vld [vmem:[%s3955 + $0x6c] sm:$0xf]
        %v3975 = vld [vmem:[%s3955 + $0x70] sm:$0xf]
        %v3976 = vld [vmem:[%s3955 + $0x78] sm:$0xf]
        %v3977 = vld [vmem:[%s3955 + $0x7c] sm:$0xf]
        %v3978 = vld [vmem:[%s3955 + $0x84] sm:$0xf]
        %v3979 = vld [vmem:[%s3955 + $0x88] sm:$0xf]
        %v3980 = vld [vmem:[%s3955 + $0x90] sm:$0xf]
        %v3981 = vld [vmem:[%s3955 + $0x94] sm:$0xf]
        %v3982 = vld [vmem:[%s3955 + $0x9c] sm:$0xf]
        %v3983 = vld [vmem:[%s3955 + $0xa0] sm:$0xf]
        %v4012 = vunpack.c.l.b16 %v3956
        %v4013 = vunpack.c.l.b16 %v3957
        %v4014 = vunpack.c.l.b16 %v3958
        %v4015 = vunpack.c.l.b16 %v3959
        %v4016 = vunpack.c.l.b16 %v3960
        %v4017 = vunpack.c.l.b16 %v3961
        %v4018 = vunpack.c.l.b16 %v3962
        %v4019 = vunpack.c.l.b16 %v3963
        %v4020 = vunpack.c.l.b16 %v3964
        %v4021 = vunpack.c.l.b16 %v3965
        %v4022 = vunpack.c.l.b16 %v3966
        %v4023 = vunpack.c.l.b16 %v3967
        %v4024 = vunpack.c.l.b16 %v3968
        %v4025 = vunpack.c.l.b16 %v3969
        %v4026 = vunpack.c.l.b16 %v3970
        %v4027 = vunpack.c.l.b16 %v3971
        %v4028 = vunpack.c.l.b16 %v3972
        %v4029 = vunpack.c.l.b16 %v3973
        %v4030 = vunpack.c.l.b16 %v3974
        %v4031 = vunpack.c.l.b16 %v3975
        %v4032 = vunpack.c.l.b16 %v3976
        %v4033 = vunpack.c.l.b16 %v3977
        %v4034 = vunpack.c.l.b16 %v3978
        %v4035 = vunpack.c.l.b16 %v3979
        %v4036 = vunpack.c.l.b16 %v3980
        %v4037 = vunpack.c.l.b16 %v3981
        %v4038 = vunpack.c.l.b16 %v3982
        %v4039 = vunpack.c.l.b16 %v3983
        %v4040 = vpack.c.b16 %v4013, %v4012
        %v4041 = vpack.c.b16 %v4015, %v4014
        %v4042 = vpack.c.b16 %v4017, %v4016
        %v4043 = vpack.c.b16 %v4019, %v4018
        %v4044 = vpack.c.b16 %v4021, %v4020
        %v4045 = vpack.c.b16 %v4023, %v4022
        %v4046 = vpack.c.b16 %v4025, %v4024
        %v4047 = vpack.c.b16 %v4027, %v4026
        %v4048 = vpack.c.b16 %v4029, %v4028
        %v4049 = vpack.c.b16 %v4031, %v4030
        %v4050 = vpack.c.b16 %v4033, %v4032
        %v4051 = vpack.c.b16 %v4035, %v4034
        %v4052 = vpack.c.b16 %v4037, %v4036
        %v4053 = vpack.c.b16 %v4039, %v4038
        %v4055 = vsel %vm462, %v4040, 0
        %v4058 = vsel %vm462, %v4041, 0
        %v4061 = vsel %vm462, %v4042, 0
        %v4064 = vsel %vm462, %v4043, 0
        %v4067 = vsel %vm462, %v4044, 0
        %v4070 = vsel %vm462, %v4045, 0
        %v4073 = vsel %vm462, %v4046, 0
        %v4076 = vsel %vm462, %v4047, 0
        %v4079 = vsel %vm462, %v4048, 0
        %v4082 = vsel %vm462, %v4049, 0
        %v4085 = vsel %vm462, %v4050, 0
        %v4088 = vsel %vm462, %v4051, 0
        %v4091 = vsel %vm462, %v4052, 0
        %v4094 = vsel %vm462, %v4053, 0
        %v4097 = vsel %vm511, %v3954, 0
        %4099 = vmatprep.subr.bf16.mxu0 0
        %4100 = vmatpush1.bf16.msra.mxu0 0
        %4101 = vmatprep.subr.bf16.mxu0 0
        %4102 = vmatpush1.bf16.msra.mxu0 0
        %4103 = vmatprep.subr.bf16.mxu0 0
        %4104 = vmatpush1.bf16.msra.mxu0 0
        %4105 = vmatprep.subr.bf16.mxu0 0
        %4106 = vmatpush1.bf16.msra.mxu0 0
        %4107 = vmatprep.subr.bf16.mxu0 0
        %4108 = vmatpush1.bf16.msra.mxu0 0
        %4109 = vmatprep.subr.bf16.mxu0 0
        %4110 = vmatpush1.bf16.msra.mxu0 0
        %4111 = vmatprep.subr.bf16.mxu0 0
        %4112 = vmatpush1.bf16.msra.mxu0 0
        %4113 = vmatprep.subr.bf16.mxu0 0
        %4114 = vmatpush1.bf16.msra.mxu0 %v4097
        %4115 = vmatprep.subr.bf16.mxu0 0
        %4116 = vmatpush2.bf16.msra.mxu0 0
        %4117 = vmatprep.subr.bf16.mxu0 0
        %4118 = vmatpush2.bf16.msra.mxu0 0
        %4119 = vmatprep.subr.bf16.mxu0 0
        %4120 = vmatpush2.bf16.msra.mxu0 0
        %4121 = vmatprep.subr.bf16.mxu0 0
        %4122 = vmatpush2.bf16.msra.mxu0 0
        %4123 = vmatprep.subr.bf16.mxu0 0
        %4124 = vmatpush2.bf16.msra.mxu0 0
        %4125 = vmatprep.subr.bf16.mxu0 0
        %4126 = vmatpush2.bf16.msra.mxu0 0
        %4127 = vmatprep.subr.bf16.mxu0 0
        %4128 = vmatpush2.bf16.msra.mxu0 0
        %4129 = vmatprep.subr.bf16.mxu0 0
        %4130 = vmatpush2.bf16.msra.mxu0 0
        %4131 = vmatprep.mubr.bf16.mxu0 0
        %4132 = vmatmul.mubr.bf16.gmra.mxu0 %v4055
        %v4133 = vpop.f32.mrf.mxu0
        %v4134 = vadd.f32 0.0, %v4133
        %v4135 = vpop.f32.mrf.mxu0
        %v4136 = vpop.f32.mrf.mxu0
        %v4137 = vadd.f32 0.0, %v4136
        %v4138 = vpop.f32.mrf.mxu0
        %4139 = vmatprep.mubr.bf16.mxu0 0
        %4140 = vmatmul.mubr.bf16.gmra.mxu0 %v4058
        %v4141 = vpop.f32.mrf.mxu0
        %v4142 = vadd.f32 0.0, %v4141
        %v4143 = vpop.f32.mrf.mxu0
        %v4144 = vpop.f32.mrf.mxu0
        %v4145 = vadd.f32 0.0, %v4144
        %v4146 = vpop.f32.mrf.mxu0
        %4147 = vmatprep.mubr.bf16.mxu0 0
        %4148 = vmatmul.mubr.bf16.gmra.mxu0 %v4061
        %v4149 = vpop.f32.mrf.mxu0
        %v4150 = vadd.f32 0.0, %v4149
        %v4151 = vpop.f32.mrf.mxu0
        %v4152 = vpop.f32.mrf.mxu0
        %v4153 = vadd.f32 0.0, %v4152
        %v4154 = vpop.f32.mrf.mxu0
        %4155 = vmatprep.mubr.bf16.mxu0 0
        %4156 = vmatmul.mubr.bf16.gmra.mxu0 %v4064
        %v4157 = vpop.f32.mrf.mxu0
        %v4158 = vadd.f32 0.0, %v4157
        %v4159 = vpop.f32.mrf.mxu0
        %v4160 = vpop.f32.mrf.mxu0
        %v4161 = vadd.f32 0.0, %v4160
        %v4162 = vpop.f32.mrf.mxu0
        %4163 = vmatprep.mubr.bf16.mxu0 0
        %4164 = vmatmul.mubr.bf16.gmra.mxu0 %v4067
        %v4165 = vpop.f32.mrf.mxu0
        %v4166 = vadd.f32 0.0, %v4165
        %v4167 = vpop.f32.mrf.mxu0
        %v4168 = vpop.f32.mrf.mxu0
        %v4169 = vadd.f32 0.0, %v4168
        %v4170 = vpop.f32.mrf.mxu0
        %4171 = vmatprep.mubr.bf16.mxu0 0
        %4172 = vmatmul.mubr.bf16.gmra.mxu0 %v4070
        %v4173 = vpop.f32.mrf.mxu0
        %v4174 = vadd.f32 0.0, %v4173
        %v4175 = vpop.f32.mrf.mxu0
        %v4176 = vpop.f32.mrf.mxu0
        %v4177 = vadd.f32 0.0, %v4176
        %v4178 = vpop.f32.mrf.mxu0
        %4179 = vmatprep.mubr.bf16.mxu0 0
        %4180 = vmatmul.mubr.bf16.gmra.mxu0 %v4073
        %v4181 = vpop.f32.mrf.mxu0
        %v4182 = vadd.f32 0.0, %v4181
        %v4183 = vpop.f32.mrf.mxu0
        %v4184 = vpop.f32.mrf.mxu0
        %v4185 = vadd.f32 0.0, %v4184
        %v4186 = vpop.f32.mrf.mxu0
        %4187 = vmatprep.mubr.bf16.mxu0 0
        %4188 = vmatmul.mubr.bf16.gmra.mxu0 %v4076
        %v4189 = vpop.f32.mrf.mxu0
        %v4190 = vadd.f32 0.0, %v4189
        %v4191 = vpop.f32.mrf.mxu0
        %v4192 = vpop.f32.mrf.mxu0
        %v4193 = vadd.f32 0.0, %v4192
        %v4194 = vpop.f32.mrf.mxu0
        %4195 = vmatprep.mubr.bf16.mxu0 0
        %4196 = vmatmul.mubr.bf16.gmra.mxu0 %v4079
        %v4197 = vpop.f32.mrf.mxu0
        %v4198 = vadd.f32 0.0, %v4197
        %v4199 = vpop.f32.mrf.mxu0
        %v4200 = vpop.f32.mrf.mxu0
        %v4201 = vadd.f32 0.0, %v4200
        %v4202 = vpop.f32.mrf.mxu0
        %4203 = vmatprep.mubr.bf16.mxu0 0
        %4204 = vmatmul.mubr.bf16.gmra.mxu0 %v4082
        %v4205 = vpop.f32.mrf.mxu0
        %v4206 = vadd.f32 0.0, %v4205
        %v4207 = vpop.f32.mrf.mxu0
        %v4208 = vpop.f32.mrf.mxu0
        %v4209 = vadd.f32 0.0, %v4208
        %v4210 = vpop.f32.mrf.mxu0
        %4211 = vmatprep.mubr.bf16.mxu0 0
        %4212 = vmatmul.mubr.bf16.gmra.mxu0 %v4085
        %v4213 = vpop.f32.mrf.mxu0
        %v4214 = vadd.f32 0.0, %v4213
        %v4215 = vpop.f32.mrf.mxu0
        %v4216 = vpop.f32.mrf.mxu0
        %v4217 = vadd.f32 0.0, %v4216
        %v4218 = vpop.f32.mrf.mxu0
        %4219 = vmatprep.mubr.bf16.mxu0 0
        %4220 = vmatmul.mubr.bf16.gmra.mxu0 %v4088
        %v4221 = vpop.f32.mrf.mxu0
        %v4222 = vadd.f32 0.0, %v4221
        %v4223 = vpop.f32.mrf.mxu0
        %v4224 = vpop.f32.mrf.mxu0
        %v4225 = vadd.f32 0.0, %v4224
        %v4226 = vpop.f32.mrf.mxu0
        %4227 = vmatprep.mubr.bf16.mxu0 0
        %4228 = vmatmul.mubr.bf16.gmra.mxu0 %v4091
        %v4229 = vpop.f32.mrf.mxu0
        %v4230 = vadd.f32 0.0, %v4229
        %v4231 = vpop.f32.mrf.mxu0
        %v4232 = vpop.f32.mrf.mxu0
        %v4233 = vadd.f32 0.0, %v4232
        %v4234 = vpop.f32.mrf.mxu0
        %4235 = vmatprep.mubr.bf16.mxu0 0
        %4236 = vmatmul.mubr.bf16.gmra.mxu0 %v4094
        %v4237 = vpop.f32.mrf.mxu0
        %v4238 = vadd.f32 0.0, %v4237
        %v4239 = vpop.f32.mrf.mxu0
        %v4240 = vpop.f32.mrf.mxu0
        %v4241 = vadd.f32 0.0, %v4240
        %v4242 = vpop.f32.mrf.mxu0
        %4243 = vdwg.mxu0
        %v4244 = vld [vmem:[#allocation2] sm:$0xff]
        %v4245 = vld [vmem:[#allocation2 + $0x8] sm:$0xff]
        %v4246 = vld [vmem:[#allocation2 + $0x10] sm:$0xff]
        %v4247 = vld [vmem:[#allocation2 + $0x18] sm:$0xff]
        %v4248 = vld [vmem:[#allocation2 + $0x20] sm:$0xff]
        %v4249 = vld [vmem:[#allocation2 + $0x28] sm:$0xff]
        %v4250 = vld [vmem:[#allocation2 + $0x30] sm:$0xff]
        %v4251 = vld [vmem:[#allocation2 + $0x38] sm:$0xff]
        %v4252 = vld [vmem:[#allocation2 + $0x40] sm:$0xff]
        %v4253 = vld [vmem:[#allocation2 + $0x48] sm:$0xff]
        %v4254 = vld [vmem:[#allocation2 + $0x50] sm:$0xff]
        %v4255 = vld [vmem:[#allocation2 + $0x58] sm:$0xff]
        %v4256 = vld [vmem:[#allocation2 + $0x60] sm:$0xff]
        %v4257 = vld [vmem:[#allocation2 + $0x68] sm:$0xff]
        %v4258 = vld [vmem:[#allocation2 + $0x70] sm:$0xff]
        %v4259 = vld [vmem:[#allocation2 + $0x78] sm:$0xff]
        %v4260 = vld [vmem:[#allocation2 + $0x80] sm:$0xff]
        %v4261 = vld [vmem:[#allocation2 + $0x88] sm:$0xff]
        %v4262 = vld [vmem:[#allocation2 + $0x90] sm:$0xff]
        %v4263 = vld [vmem:[#allocation2 + $0x98] sm:$0xff]
        %v4264 = vld [vmem:[#allocation2 + $0xa0] sm:$0xff]
        %v4265 = vld [vmem:[#allocation2 + $0xa8] sm:$0xff]
        %v4266 = vld [vmem:[#allocation2 + $0xb0] sm:$0xff]
        %v4267 = vld [vmem:[#allocation2 + $0xb8] sm:$0xff]
        %v4268 = vld [vmem:[#allocation2 + $0xc0] sm:$0xff]
        %v4269 = vld [vmem:[#allocation2 + $0xc8] sm:$0xff]
        %v4270 = vld [vmem:[#allocation2 + $0xd0] sm:$0xff]
        %v4271 = vld [vmem:[#allocation2 + $0xd8] sm:$0xff]
        %v4272 = vadd.f32 %v4244, %v4134
        %v4273 = vadd.f32 %v4245, %v4137
        %v4274 = vadd.f32 %v4246, %v4142
        %v4275 = vadd.f32 %v4247, %v4145
        %v4276 = vadd.f32 %v4248, %v4150
        %v4277 = vadd.f32 %v4249, %v4153
        %v4278 = vadd.f32 %v4250, %v4158
        %v4279 = vadd.f32 %v4251, %v4161
        %v4280 = vadd.f32 %v4252, %v4166
        %v4281 = vadd.f32 %v4253, %v4169
        %v4282 = vadd.f32 %v4254, %v4174
        %v4283 = vadd.f32 %v4255, %v4177
        %v4284 = vadd.f32 %v4256, %v4182
        %v4285 = vadd.f32 %v4257, %v4185
        %v4286 = vadd.f32 %v4258, %v4190
        %v4287 = vadd.f32 %v4259, %v4193
        %v4288 = vadd.f32 %v4260, %v4198
        %v4289 = vadd.f32 %v4261, %v4201
        %v4290 = vadd.f32 %v4262, %v4206
        %v4291 = vadd.f32 %v4263, %v4209
        %v4292 = vadd.f32 %v4264, %v4214
        %v4293 = vadd.f32 %v4265, %v4217
        %v4294 = vadd.f32 %v4266, %v4222
        %v4295 = vadd.f32 %v4267, %v4225
        %v4296 = vadd.f32 %v4268, %v4230
        %v4297 = vadd.f32 %v4269, %v4233
        %v4298 = vadd.f32 %v4270, %v4238
        %v4299 = vadd.f32 %v4271, %v4241
        %4300 = vst [vmem:[#allocation2] sm:$0xff] %v4272
        %4301 = vst [vmem:[#allocation2 + $0x8] sm:$0xff] %v4273
        %4302 = vst [vmem:[#allocation2 + $0x10] sm:$0xff] %v4274
        %4303 = vst [vmem:[#allocation2 + $0x18] sm:$0xff] %v4275
        %4304 = vst [vmem:[#allocation2 + $0x20] sm:$0xff] %v4276
        %4305 = vst [vmem:[#allocation2 + $0x28] sm:$0xff] %v4277
        %4306 = vst [vmem:[#allocation2 + $0x30] sm:$0xff] %v4278
        %4307 = vst [vmem:[#allocation2 + $0x38] sm:$0xff] %v4279
        %4308 = vst [vmem:[#allocation2 + $0x40] sm:$0xff] %v4280
        %4309 = vst [vmem:[#allocation2 + $0x48] sm:$0xff] %v4281
        %4310 = vst [vmem:[#allocation2 + $0x50] sm:$0xff] %v4282
        %4311 = vst [vmem:[#allocation2 + $0x58] sm:$0xff] %v4283
        %4312 = vst [vmem:[#allocation2 + $0x60] sm:$0xff] %v4284
        %4313 = vst [vmem:[#allocation2 + $0x68] sm:$0xff] %v4285
        %4314 = vst [vmem:[#allocation2 + $0x70] sm:$0xff] %v4286
        %4315 = vst [vmem:[#allocation2 + $0x78] sm:$0xff] %v4287
        %4316 = vst [vmem:[#allocation2 + $0x80] sm:$0xff] %v4288
        %4317 = vst [vmem:[#allocation2 + $0x88] sm:$0xff] %v4289
        %4318 = vst [vmem:[#allocation2 + $0x90] sm:$0xff] %v4290
        %4319 = vst [vmem:[#allocation2 + $0x98] sm:$0xff] %v4291
        %4320 = vst [vmem:[#allocation2 + $0xa0] sm:$0xff] %v4292
        %4321 = vst [vmem:[#allocation2 + $0xa8] sm:$0xff] %v4293
        %4322 = vst [vmem:[#allocation2 + $0xb0] sm:$0xff] %v4294
        %4323 = vst [vmem:[#allocation2 + $0xb8] sm:$0xff] %v4295
        %4324 = vst [vmem:[#allocation2 + $0xc0] sm:$0xff] %v4296
        %4325 = vst [vmem:[#allocation2 + $0xc8] sm:$0xff] %v4297
        %4326 = vst [vmem:[#allocation2 + $0xd0] sm:$0xff] %v4298
        %4327 = vst [vmem:[#allocation2 + $0xd8] sm:$0xff] %v4299
        %s4328 = scalar_lea.vmem %s343, 28
        %v4329 = vld [vmem:[%s4328] sm:$0xf]
        %v4330 = vld [vmem:[%s3955] sm:$0xf]
        %v4331 = vld [vmem:[%s3955 + $0x4] sm:$0xf]
        %v4332 = vld [vmem:[%s3955 + $0x8] sm:$0x1]
        %v4333 = vld [vmem:[%s3955 + $0xc] sm:$0xf]
        %v4334 = vld [vmem:[%s3955 + $0x10] sm:$0xf]
        %v4335 = vld [vmem:[%s3955 + $0x14] sm:$0x1]
        %v4336 = vld [vmem:[%s3955 + $0x18] sm:$0xf]
        %v4337 = vld [vmem:[%s3955 + $0x1c] sm:$0xf]
        %v4338 = vld [vmem:[%s3955 + $0x20] sm:$0x1]
        %v4339 = vld [vmem:[%s3955 + $0x24] sm:$0xf]
        %v4340 = vld [vmem:[%s3955 + $0x28] sm:$0xf]
        %v4341 = vld [vmem:[%s3955 + $0x2c] sm:$0x1]
        %v4342 = vld [vmem:[%s3955 + $0x30] sm:$0xf]
        %v4343 = vld [vmem:[%s3955 + $0x34] sm:$0xf]
        %v4344 = vld [vmem:[%s3955 + $0x38] sm:$0x1]
        %v4345 = vld [vmem:[%s3955 + $0x3c] sm:$0xf]
        %v4346 = vld [vmem:[%s3955 + $0x40] sm:$0xf]
        %v4347 = vld [vmem:[%s3955 + $0x44] sm:$0x1]
        %v4348 = vld [vmem:[%s3955 + $0x48] sm:$0xf]
        %v4349 = vld [vmem:[%s3955 + $0x4c] sm:$0xf]
        %v4350 = vld [vmem:[%s3955 + $0x50] sm:$0x1]
        %v4351 = vld [vmem:[%s3955 + $0x54] sm:$0xf]
        %v4352 = vld [vmem:[%s3955 + $0x58] sm:$0xf]
        %v4353 = vld [vmem:[%s3955 + $0x5c] sm:$0x1]
        %v4354 = vld [vmem:[%s3955 + $0x60] sm:$0xf]
        %v4355 = vld [vmem:[%s3955 + $0x64] sm:$0xf]
        %v4356 = vld [vmem:[%s3955 + $0x68] sm:$0x1]
        %v4357 = vld [vmem:[%s3955 + $0x6c] sm:$0xf]
        %v4358 = vld [vmem:[%s3955 + $0x70] sm:$0xf]
        %v4359 = vld [vmem:[%s3955 + $0x74] sm:$0x1]
        %v4360 = vld [vmem:[%s3955 + $0x78] sm:$0xf]
        %v4361 = vld [vmem:[%s3955 + $0x7c] sm:$0xf]
        %v4362 = vld [vmem:[%s3955 + $0x80] sm:$0x1]
        %v4363 = vld [vmem:[%s3955 + $0x84] sm:$0xf]
        %v4364 = vld [vmem:[%s3955 + $0x88] sm:$0xf]
        %v4365 = vld [vmem:[%s3955 + $0x8c] sm:$0x1]
        %v4366 = vld [vmem:[%s3955 + $0x90] sm:$0xf]
        %v4367 = vld [vmem:[%s3955 + $0x94] sm:$0xf]
        %v4368 = vld [vmem:[%s3955 + $0x98] sm:$0x1]
        %v4369 = vld [vmem:[%s3955 + $0x9c] sm:$0xf]
        %v4370 = vld [vmem:[%s3955 + $0xa0] sm:$0xf]
        %v4371 = vld [vmem:[%s3955 + $0xa4] sm:$0x1]
        %v4373 = vshrl.u32 %v4330, 16
        %v4375 = vrot.slane %v4373, 4
        %v4376 = vshll.u32 %v4330, 16
        %v4378 = vrot.slane %v4376, 5
        %v4379 = vor.u32 %v4375, %v4378
        %v4380 = vrot.slane %v4379, 4
        %v4382 = vshll.u32 %v4331, 16
        %v4384 = vrot.slane %v4382, 5
        %v4385 = vsel %vm760, %v4380, %v4384
        %v4386 = vshrl.u32 %v4331, 16
        %v4388 = vrot.slane %v4386, 4
        %v4389 = vor.u32 %v4388, %v4384
        %v4390 = vrot.slane %v4389, 4
        %v4392 = vshll.u32 %v4332, 16
        %v4394 = vrot.slane %v4392, 5
        %v4395 = vsel %vm760, %v4390, %v4394
        %v4397 = vshrl.u32 %v4333, 16
        %v4399 = vrot.slane %v4397, 4
        %v4400 = vshll.u32 %v4333, 16
        %v4402 = vrot.slane %v4400, 5
        %v4403 = vor.u32 %v4399, %v4402
        %v4404 = vrot.slane %v4403, 4
        %v4406 = vshll.u32 %v4334, 16
        %v4408 = vrot.slane %v4406, 5
        %v4409 = vsel %vm760, %v4404, %v4408
        %v4410 = vshrl.u32 %v4334, 16
        %v4412 = vrot.slane %v4410, 4
        %v4413 = vor.u32 %v4412, %v4408
        %v4414 = vrot.slane %v4413, 4
        %v4416 = vshll.u32 %v4335, 16
        %v4418 = vrot.slane %v4416, 5
        %v4419 = vsel %vm760, %v4414, %v4418
        %v4421 = vshrl.u32 %v4336, 16
        %v4423 = vrot.slane %v4421, 4
        %v4424 = vshll.u32 %v4336, 16
        %v4426 = vrot.slane %v4424, 5
        %v4427 = vor.u32 %v4423, %v4426
        %v4428 = vrot.slane %v4427, 4
        %v4430 = vshll.u32 %v4337, 16
        %v4432 = vrot.slane %v4430, 5
        %v4433 = vsel %vm760, %v4428, %v4432
        %v4434 = vshrl.u32 %v4337, 16
        %v4436 = vrot.slane %v4434, 4
        %v4437 = vor.u32 %v4436, %v4432
        %v4438 = vrot.slane %v4437, 4
        %v4440 = vshll.u32 %v4338, 16
        %v4442 = vrot.slane %v4440, 5
        %v4443 = vsel %vm760, %v4438, %v4442
        %v4445 = vshrl.u32 %v4339, 16
        %v4447 = vrot.slane %v4445, 4
        %v4448 = vshll.u32 %v4339, 16
        %v4450 = vrot.slane %v4448, 5
        %v4451 = vor.u32 %v4447, %v4450
        %v4452 = vrot.slane %v4451, 4
        %v4454 = vshll.u32 %v4340, 16
        %v4456 = vrot.slane %v4454, 5
        %v4457 = vsel %vm760, %v4452, %v4456
        %v4458 = vshrl.u32 %v4340, 16
        %v4460 = vrot.slane %v4458, 4
        %v4461 = vor.u32 %v4460, %v4456
        %v4462 = vrot.slane %v4461, 4
        %v4464 = vshll.u32 %v4341, 16
        %v4466 = vrot.slane %v4464, 5
        %v4467 = vsel %vm760, %v4462, %v4466
        %v4469 = vshrl.u32 %v4342, 16
        %v4471 = vrot.slane %v4469, 4
        %v4472 = vshll.u32 %v4342, 16
        %v4474 = vrot.slane %v4472, 5
        %v4475 = vor.u32 %v4471, %v4474
        %v4476 = vrot.slane %v4475, 4
        %v4478 = vshll.u32 %v4343, 16
        %v4480 = vrot.slane %v4478, 5
        %v4481 = vsel %vm760, %v4476, %v4480
        %v4482 = vshrl.u32 %v4343, 16
        %v4484 = vrot.slane %v4482, 4
        %v4485 = vor.u32 %v4484, %v4480
        %v4486 = vrot.slane %v4485, 4
        %v4488 = vshll.u32 %v4344, 16
        %v4490 = vrot.slane %v4488, 5
        %v4491 = vsel %vm760, %v4486, %v4490
        %v4493 = vshrl.u32 %v4345, 16
        %v4495 = vrot.slane %v4493, 4
        %v4496 = vshll.u32 %v4345, 16
        %v4498 = vrot.slane %v4496, 5
        %v4499 = vor.u32 %v4495, %v4498
        %v4500 = vrot.slane %v4499, 4
        %v4502 = vshll.u32 %v4346, 16
        %v4504 = vrot.slane %v4502, 5
        %v4505 = vsel %vm760, %v4500, %v4504
        %v4506 = vshrl.u32 %v4346, 16
        %v4508 = vrot.slane %v4506, 4
        %v4509 = vor.u32 %v4508, %v4504
        %v4510 = vrot.slane %v4509, 4
        %v4512 = vshll.u32 %v4347, 16
        %v4514 = vrot.slane %v4512, 5
        %v4515 = vsel %vm760, %v4510, %v4514
        %v4517 = vshrl.u32 %v4348, 16
        %v4519 = vrot.slane %v4517, 4
        %v4520 = vshll.u32 %v4348, 16
        %v4522 = vrot.slane %v4520, 5
        %v4523 = vor.u32 %v4519, %v4522
        %v4524 = vrot.slane %v4523, 4
        %v4526 = vshll.u32 %v4349, 16
        %v4528 = vrot.slane %v4526, 5
        %v4529 = vsel %vm760, %v4524, %v4528
        %v4530 = vshrl.u32 %v4349, 16
        %v4532 = vrot.slane %v4530, 4
        %v4533 = vor.u32 %v4532, %v4528
        %v4534 = vrot.slane %v4533, 4
        %v4536 = vshll.u32 %v4350, 16
        %v4538 = vrot.slane %v4536, 5
        %v4539 = vsel %vm760, %v4534, %v4538
        %v4541 = vshrl.u32 %v4351, 16
        %v4543 = vrot.slane %v4541, 4
        %v4544 = vshll.u32 %v4351, 16
        %v4546 = vrot.slane %v4544, 5
        %v4547 = vor.u32 %v4543, %v4546
        %v4548 = vrot.slane %v4547, 4
        %v4550 = vshll.u32 %v4352, 16
        %v4552 = vrot.slane %v4550, 5
        %v4553 = vsel %vm760, %v4548, %v4552
        %v4554 = vshrl.u32 %v4352, 16
        %v4556 = vrot.slane %v4554, 4
        %v4557 = vor.u32 %v4556, %v4552
        %v4558 = vrot.slane %v4557, 4
        %v4560 = vshll.u32 %v4353, 16
        %v4562 = vrot.slane %v4560, 5
        %v4563 = vsel %vm760, %v4558, %v4562
        %v4565 = vshrl.u32 %v4354, 16
        %v4567 = vrot.slane %v4565, 4
        %v4568 = vshll.u32 %v4354, 16
        %v4570 = vrot.slane %v4568, 5
        %v4571 = vor.u32 %v4567, %v4570
        %v4572 = vrot.slane %v4571, 4
        %v4574 = vshll.u32 %v4355, 16
        %v4576 = vrot.slane %v4574, 5
        %v4577 = vsel %vm760, %v4572, %v4576
        %v4578 = vshrl.u32 %v4355, 16
        %v4580 = vrot.slane %v4578, 4
        %v4581 = vor.u32 %v4580, %v4576
        %v4582 = vrot.slane %v4581, 4
        %v4584 = vshll.u32 %v4356, 16
        %v4586 = vrot.slane %v4584, 5
        %v4587 = vsel %vm760, %v4582, %v4586
        %v4589 = vshrl.u32 %v4357, 16
        %v4591 = vrot.slane %v4589, 4
        %v4592 = vshll.u32 %v4357, 16
        %v4594 = vrot.slane %v4592, 5
        %v4595 = vor.u32 %v4591, %v4594
        %v4596 = vrot.slane %v4595, 4
        %v4598 = vshll.u32 %v4358, 16
        %v4600 = vrot.slane %v4598, 5
        %v4601 = vsel %vm760, %v4596, %v4600
        %v4602 = vshrl.u32 %v4358, 16
        %v4604 = vrot.slane %v4602, 4
        %v4605 = vor.u32 %v4604, %v4600
        %v4606 = vrot.slane %v4605, 4
        %v4608 = vshll.u32 %v4359, 16
        %v4610 = vrot.slane %v4608, 5
        %v4611 = vsel %vm760, %v4606, %v4610
        %v4613 = vshrl.u32 %v4360, 16
        %v4615 = vrot.slane %v4613, 4
        %v4616 = vshll.u32 %v4360, 16
        %v4618 = vrot.slane %v4616, 5
        %v4619 = vor.u32 %v4615, %v4618
        %v4620 = vrot.slane %v4619, 4
        %v4622 = vshll.u32 %v4361, 16
        %v4624 = vrot.slane %v4622, 5
        %v4625 = vsel %vm760, %v4620, %v4624
        %v4626 = vshrl.u32 %v4361, 16
        %v4628 = vrot.slane %v4626, 4
        %v4629 = vor.u32 %v4628, %v4624
        %v4630 = vrot.slane %v4629, 4
        %v4632 = vshll.u32 %v4362, 16
        %v4634 = vrot.slane %v4632, 5
        %v4635 = vsel %vm760, %v4630, %v4634
        %v4637 = vshrl.u32 %v4363, 16
        %v4639 = vrot.slane %v4637, 4
        %v4640 = vshll.u32 %v4363, 16
        %v4642 = vrot.slane %v4640, 5
        %v4643 = vor.u32 %v4639, %v4642
        %v4644 = vrot.slane %v4643, 4
        %v4646 = vshll.u32 %v4364, 16
        %v4648 = vrot.slane %v4646, 5
        %v4649 = vsel %vm760, %v4644, %v4648
        %v4650 = vshrl.u32 %v4364, 16
        %v4652 = vrot.slane %v4650, 4
        %v4653 = vor.u32 %v4652, %v4648
        %v4654 = vrot.slane %v4653, 4
        %v4656 = vshll.u32 %v4365, 16
        %v4658 = vrot.slane %v4656, 5
        %v4659 = vsel %vm760, %v4654, %v4658
        %v4661 = vshrl.u32 %v4366, 16
        %v4663 = vrot.slane %v4661, 4
        %v4664 = vshll.u32 %v4366, 16
        %v4666 = vrot.slane %v4664, 5
        %v4667 = vor.u32 %v4663, %v4666
        %v4668 = vrot.slane %v4667, 4
        %v4670 = vshll.u32 %v4367, 16
        %v4672 = vrot.slane %v4670, 5
        %v4673 = vsel %vm760, %v4668, %v4672
        %v4674 = vshrl.u32 %v4367, 16
        %v4676 = vrot.slane %v4674, 4
        %v4677 = vor.u32 %v4676, %v4672
        %v4678 = vrot.slane %v4677, 4
        %v4680 = vshll.u32 %v4368, 16
        %v4682 = vrot.slane %v4680, 5
        %v4683 = vsel %vm760, %v4678, %v4682
        %v4685 = vshrl.u32 %v4369, 16
        %v4687 = vrot.slane %v4685, 4
        %v4688 = vshll.u32 %v4369, 16
        %v4690 = vrot.slane %v4688, 5
        %v4691 = vor.u32 %v4687, %v4690
        %v4692 = vrot.slane %v4691, 4
        %v4694 = vshll.u32 %v4370, 16
        %v4696 = vrot.slane %v4694, 5
        %v4697 = vsel %vm760, %v4692, %v4696
        %v4698 = vshrl.u32 %v4370, 16
        %v4700 = vrot.slane %v4698, 4
        %v4701 = vor.u32 %v4700, %v4696
        %v4702 = vrot.slane %v4701, 4
        %v4704 = vshll.u32 %v4371, 16
        %v4706 = vrot.slane %v4704, 5
        %v4707 = vsel %vm760, %v4702, %v4706
        %v4708 = vunpack.c.l.b16 %v4385
        %v4709 = vunpack.c.l.b16 %v4395
        %v4710 = vunpack.c.l.b16 %v4409
        %v4711 = vunpack.c.l.b16 %v4419
        %v4712 = vunpack.c.l.b16 %v4433
        %v4713 = vunpack.c.l.b16 %v4443
        %v4714 = vunpack.c.l.b16 %v4457
        %v4715 = vunpack.c.l.b16 %v4467
        %v4716 = vunpack.c.l.b16 %v4481
        %v4717 = vunpack.c.l.b16 %v4491
        %v4718 = vunpack.c.l.b16 %v4505
        %v4719 = vunpack.c.l.b16 %v4515
        %v4720 = vunpack.c.l.b16 %v4529
        %v4721 = vunpack.c.l.b16 %v4539
        %v4722 = vunpack.c.l.b16 %v4553
        %v4723 = vunpack.c.l.b16 %v4563
        %v4724 = vunpack.c.l.b16 %v4577
        %v4725 = vunpack.c.l.b16 %v4587
        %v4726 = vunpack.c.l.b16 %v4601
        %v4727 = vunpack.c.l.b16 %v4611
        %v4728 = vunpack.c.l.b16 %v4625
        %v4729 = vunpack.c.l.b16 %v4635
        %v4730 = vunpack.c.l.b16 %v4649
        %v4731 = vunpack.c.l.b16 %v4659
        %v4732 = vunpack.c.l.b16 %v4673
        %v4733 = vunpack.c.l.b16 %v4683
        %v4734 = vunpack.c.l.b16 %v4697
        %v4735 = vunpack.c.l.b16 %v4707
        %v4736 = vpack.c.b16 %v4709, %v4708
        %v4737 = vpack.c.b16 %v4711, %v4710
        %v4738 = vpack.c.b16 %v4713, %v4712
        %v4739 = vpack.c.b16 %v4715, %v4714
        %v4740 = vpack.c.b16 %v4717, %v4716
        %v4741 = vpack.c.b16 %v4719, %v4718
        %v4742 = vpack.c.b16 %v4721, %v4720
        %v4743 = vpack.c.b16 %v4723, %v4722
        %v4744 = vpack.c.b16 %v4725, %v4724
        %v4745 = vpack.c.b16 %v4727, %v4726
        %v4746 = vpack.c.b16 %v4729, %v4728
        %v4747 = vpack.c.b16 %v4731, %v4730
        %v4748 = vpack.c.b16 %v4733, %v4732
        %v4749 = vpack.c.b16 %v4735, %v4734
        %v4751 = vsel %vm462, %v4736, 0
        %v4754 = vsel %vm462, %v4737, 0
        %v4757 = vsel %vm462, %v4738, 0
        %v4760 = vsel %vm462, %v4739, 0
        %v4763 = vsel %vm462, %v4740, 0
        %v4766 = vsel %vm462, %v4741, 0
        %v4769 = vsel %vm462, %v4742, 0
        %v4772 = vsel %vm462, %v4743, 0
        %v4775 = vsel %vm462, %v4744, 0
        %v4778 = vsel %vm462, %v4745, 0
        %v4781 = vsel %vm462, %v4746, 0
        %v4784 = vsel %vm462, %v4747, 0
        %v4787 = vsel %vm462, %v4748, 0
        %v4790 = vsel %vm462, %v4749, 0
        %v4793 = vsel %vm511, %v4329, 0
        %4795 = vmatprep.subr.bf16.mxu0 0
        %4796 = vmatpush1.bf16.msra.mxu0 0
        %4797 = vmatprep.subr.bf16.mxu0 0
        %4798 = vmatpush1.bf16.msra.mxu0 0
        %4799 = vmatprep.subr.bf16.mxu0 0
        %4800 = vmatpush1.bf16.msra.mxu0 0
        %4801 = vmatprep.subr.bf16.mxu0 0
        %4802 = vmatpush1.bf16.msra.mxu0 0
        %4803 = vmatprep.subr.bf16.mxu0 0
        %4804 = vmatpush1.bf16.msra.mxu0 0
        %4805 = vmatprep.subr.bf16.mxu0 0
        %4806 = vmatpush1.bf16.msra.mxu0 0
        %4807 = vmatprep.subr.bf16.mxu0 0
        %4808 = vmatpush1.bf16.msra.mxu0 0
        %4809 = vmatprep.subr.bf16.mxu0 0
        %4810 = vmatpush1.bf16.msra.mxu0 %v4793
        %4811 = vmatprep.subr.bf16.mxu0 0
        %4812 = vmatpush2.bf16.msra.mxu0 0
        %4813 = vmatprep.subr.bf16.mxu0 0
        %4814 = vmatpush2.bf16.msra.mxu0 0
        %4815 = vmatprep.subr.bf16.mxu0 0
        %4816 = vmatpush2.bf16.msra.mxu0 0
        %4817 = vmatprep.subr.bf16.mxu0 0
        %4818 = vmatpush2.bf16.msra.mxu0 0
        %4819 = vmatprep.subr.bf16.mxu0 0
        %4820 = vmatpush2.bf16.msra.mxu0 0
        %4821 = vmatprep.subr.bf16.mxu0 0
        %4822 = vmatpush2.bf16.msra.mxu0 0
        %4823 = vmatprep.subr.bf16.mxu0 0
        %4824 = vmatpush2.bf16.msra.mxu0 0
        %4825 = vmatprep.subr.bf16.mxu0 0
        %4826 = vmatpush2.bf16.msra.mxu0 0
        %4827 = vmatprep.mubr.bf16.mxu0 0
        %4828 = vmatmul.mubr.bf16.gmra.mxu0 %v4751
        %v4829 = vpop.f32.mrf.mxu0
        %v4830 = vadd.f32 0.0, %v4829
        %v4831 = vpop.f32.mrf.mxu0
        %v4832 = vpop.f32.mrf.mxu0
        %v4833 = vadd.f32 0.0, %v4832
        %v4834 = vpop.f32.mrf.mxu0
        %4835 = vmatprep.mubr.bf16.mxu0 0
        %4836 = vmatmul.mubr.bf16.gmra.mxu0 %v4754
        %v4837 = vpop.f32.mrf.mxu0
        %v4838 = vadd.f32 0.0, %v4837
        %v4839 = vpop.f32.mrf.mxu0
        %v4840 = vpop.f32.mrf.mxu0
        %v4841 = vadd.f32 0.0, %v4840
        %v4842 = vpop.f32.mrf.mxu0
        %4843 = vmatprep.mubr.bf16.mxu0 0
        %4844 = vmatmul.mubr.bf16.gmra.mxu0 %v4757
        %v4845 = vpop.f32.mrf.mxu0
        %v4846 = vadd.f32 0.0, %v4845
        %v4847 = vpop.f32.mrf.mxu0
        %v4848 = vpop.f32.mrf.mxu0
        %v4849 = vadd.f32 0.0, %v4848
        %v4850 = vpop.f32.mrf.mxu0
        %4851 = vmatprep.mubr.bf16.mxu0 0
        %4852 = vmatmul.mubr.bf16.gmra.mxu0 %v4760
        %v4853 = vpop.f32.mrf.mxu0
        %v4854 = vadd.f32 0.0, %v4853
        %v4855 = vpop.f32.mrf.mxu0
        %v4856 = vpop.f32.mrf.mxu0
        %v4857 = vadd.f32 0.0, %v4856
        %v4858 = vpop.f32.mrf.mxu0
        %4859 = vmatprep.mubr.bf16.mxu0 0
        %4860 = vmatmul.mubr.bf16.gmra.mxu0 %v4763
        %v4861 = vpop.f32.mrf.mxu0
        %v4862 = vadd.f32 0.0, %v4861
        %v4863 = vpop.f32.mrf.mxu0
        %v4864 = vpop.f32.mrf.mxu0
        %v4865 = vadd.f32 0.0, %v4864
        %v4866 = vpop.f32.mrf.mxu0
        %4867 = vmatprep.mubr.bf16.mxu0 0
        %4868 = vmatmul.mubr.bf16.gmra.mxu0 %v4766
        %v4869 = vpop.f32.mrf.mxu0
        %v4870 = vadd.f32 0.0, %v4869
        %v4871 = vpop.f32.mrf.mxu0
        %v4872 = vpop.f32.mrf.mxu0
        %v4873 = vadd.f32 0.0, %v4872
        %v4874 = vpop.f32.mrf.mxu0
        %4875 = vmatprep.mubr.bf16.mxu0 0
        %4876 = vmatmul.mubr.bf16.gmra.mxu0 %v4769
        %v4877 = vpop.f32.mrf.mxu0
        %v4878 = vadd.f32 0.0, %v4877
        %v4879 = vpop.f32.mrf.mxu0
        %v4880 = vpop.f32.mrf.mxu0
        %v4881 = vadd.f32 0.0, %v4880
        %v4882 = vpop.f32.mrf.mxu0
        %4883 = vmatprep.mubr.bf16.mxu0 0
        %4884 = vmatmul.mubr.bf16.gmra.mxu0 %v4772
        %v4885 = vpop.f32.mrf.mxu0
        %v4886 = vadd.f32 0.0, %v4885
        %v4887 = vpop.f32.mrf.mxu0
        %v4888 = vpop.f32.mrf.mxu0
        %v4889 = vadd.f32 0.0, %v4888
        %v4890 = vpop.f32.mrf.mxu0
        %4891 = vmatprep.mubr.bf16.mxu0 0
        %4892 = vmatmul.mubr.bf16.gmra.mxu0 %v4775
        %v4893 = vpop.f32.mrf.mxu0
        %v4894 = vadd.f32 0.0, %v4893
        %v4895 = vpop.f32.mrf.mxu0
        %v4896 = vpop.f32.mrf.mxu0
        %v4897 = vadd.f32 0.0, %v4896
        %v4898 = vpop.f32.mrf.mxu0
        %4899 = vmatprep.mubr.bf16.mxu0 0
        %4900 = vmatmul.mubr.bf16.gmra.mxu0 %v4778
        %v4901 = vpop.f32.mrf.mxu0
        %v4902 = vadd.f32 0.0, %v4901
        %v4903 = vpop.f32.mrf.mxu0
        %v4904 = vpop.f32.mrf.mxu0
        %v4905 = vadd.f32 0.0, %v4904
        %v4906 = vpop.f32.mrf.mxu0
        %4907 = vmatprep.mubr.bf16.mxu0 0
        %4908 = vmatmul.mubr.bf16.gmra.mxu0 %v4781
        %v4909 = vpop.f32.mrf.mxu0
        %v4910 = vadd.f32 0.0, %v4909
        %v4911 = vpop.f32.mrf.mxu0
        %v4912 = vpop.f32.mrf.mxu0
        %v4913 = vadd.f32 0.0, %v4912
        %v4914 = vpop.f32.mrf.mxu0
        %4915 = vmatprep.mubr.bf16.mxu0 0
        %4916 = vmatmul.mubr.bf16.gmra.mxu0 %v4784
        %v4917 = vpop.f32.mrf.mxu0
        %v4918 = vadd.f32 0.0, %v4917
        %v4919 = vpop.f32.mrf.mxu0
        %v4920 = vpop.f32.mrf.mxu0
        %v4921 = vadd.f32 0.0, %v4920
        %v4922 = vpop.f32.mrf.mxu0
        %4923 = vmatprep.mubr.bf16.mxu0 0
        %4924 = vmatmul.mubr.bf16.gmra.mxu0 %v4787
        %v4925 = vpop.f32.mrf.mxu0
        %v4926 = vadd.f32 0.0, %v4925
        %v4927 = vpop.f32.mrf.mxu0
        %v4928 = vpop.f32.mrf.mxu0
        %v4929 = vadd.f32 0.0, %v4928
        %v4930 = vpop.f32.mrf.mxu0
        %4931 = vmatprep.mubr.bf16.mxu0 0
        %4932 = vmatmul.mubr.bf16.gmra.mxu0 %v4790
        %v4933 = vpop.f32.mrf.mxu0
        %v4934 = vadd.f32 0.0, %v4933
        %v4935 = vpop.f32.mrf.mxu0
        %v4936 = vpop.f32.mrf.mxu0
        %v4937 = vadd.f32 0.0, %v4936
        %v4938 = vpop.f32.mrf.mxu0
        %4939 = vdwg.mxu0
        %v4940 = vld [vmem:[#allocation2] sm:$0xff]
        %v4941 = vld [vmem:[#allocation2 + $0x8] sm:$0xff]
        %v4942 = vld [vmem:[#allocation2 + $0x10] sm:$0xff]
        %v4943 = vld [vmem:[#allocation2 + $0x18] sm:$0xff]
        %v4944 = vld [vmem:[#allocation2 + $0x20] sm:$0xff]
        %v4945 = vld [vmem:[#allocation2 + $0x28] sm:$0xff]
        %v4946 = vld [vmem:[#allocation2 + $0x30] sm:$0xff]
        %v4947 = vld [vmem:[#allocation2 + $0x38] sm:$0xff]
        %v4948 = vld [vmem:[#allocation2 + $0x40] sm:$0xff]
        %v4949 = vld [vmem:[#allocation2 + $0x48] sm:$0xff]
        %v4950 = vld [vmem:[#allocation2 + $0x50] sm:$0xff]
        %v4951 = vld [vmem:[#allocation2 + $0x58] sm:$0xff]
        %v4952 = vld [vmem:[#allocation2 + $0x60] sm:$0xff]
        %v4953 = vld [vmem:[#allocation2 + $0x68] sm:$0xff]
        %v4954 = vld [vmem:[#allocation2 + $0x70] sm:$0xff]
        %v4955 = vld [vmem:[#allocation2 + $0x78] sm:$0xff]
        %v4956 = vld [vmem:[#allocation2 + $0x80] sm:$0xff]
        %v4957 = vld [vmem:[#allocation2 + $0x88] sm:$0xff]
        %v4958 = vld [vmem:[#allocation2 + $0x90] sm:$0xff]
        %v4959 = vld [vmem:[#allocation2 + $0x98] sm:$0xff]
        %v4960 = vld [vmem:[#allocation2 + $0xa0] sm:$0xff]
        %v4961 = vld [vmem:[#allocation2 + $0xa8] sm:$0xff]
        %v4962 = vld [vmem:[#allocation2 + $0xb0] sm:$0xff]
        %v4963 = vld [vmem:[#allocation2 + $0xb8] sm:$0xff]
        %v4964 = vld [vmem:[#allocation2 + $0xc0] sm:$0xff]
        %v4965 = vld [vmem:[#allocation2 + $0xc8] sm:$0xff]
        %v4966 = vld [vmem:[#allocation2 + $0xd0] sm:$0xff]
        %v4967 = vld [vmem:[#allocation2 + $0xd8] sm:$0xff]
        %v4968 = vadd.f32 %v4940, %v4830
        %v4969 = vadd.f32 %v4941, %v4833
        %v4970 = vadd.f32 %v4942, %v4838
        %v4971 = vadd.f32 %v4943, %v4841
        %v4972 = vadd.f32 %v4944, %v4846
        %v4973 = vadd.f32 %v4945, %v4849
        %v4974 = vadd.f32 %v4946, %v4854
        %v4975 = vadd.f32 %v4947, %v4857
        %v4976 = vadd.f32 %v4948, %v4862
        %v4977 = vadd.f32 %v4949, %v4865
        %v4978 = vadd.f32 %v4950, %v4870
        %v4979 = vadd.f32 %v4951, %v4873
        %v4980 = vadd.f32 %v4952, %v4878
        %v4981 = vadd.f32 %v4953, %v4881
        %v4982 = vadd.f32 %v4954, %v4886
        %v4983 = vadd.f32 %v4955, %v4889
        %v4984 = vadd.f32 %v4956, %v4894
        %v4985 = vadd.f32 %v4957, %v4897
        %v4986 = vadd.f32 %v4958, %v4902
        %v4987 = vadd.f32 %v4959, %v4905
        %v4988 = vadd.f32 %v4960, %v4910
        %v4989 = vadd.f32 %v4961, %v4913
        %v4990 = vadd.f32 %v4962, %v4918
        %v4991 = vadd.f32 %v4963, %v4921
        %v4992 = vadd.f32 %v4964, %v4926
        %v4993 = vadd.f32 %v4965, %v4929
        %v4994 = vadd.f32 %v4966, %v4934
        %v4995 = vadd.f32 %v4967, %v4937
        %4996 = vst [vmem:[#allocation2] sm:$0xff] %v4968
        %4997 = vst [vmem:[#allocation2 + $0x8] sm:$0xff] %v4969
        %4998 = vst [vmem:[#allocation2 + $0x10] sm:$0xff] %v4970
        %4999 = vst [vmem:[#allocation2 + $0x18] sm:$0xff] %v4971
        %5000 = vst [vmem:[#allocation2 + $0x20] sm:$0xff] %v4972
        %5001 = vst [vmem:[#allocation2 + $0x28] sm:$0xff] %v4973
        %5002 = vst [vmem:[#allocation2 + $0x30] sm:$0xff] %v4974
        %5003 = vst [vmem:[#allocation2 + $0x38] sm:$0xff] %v4975
        %5004 = vst [vmem:[#allocation2 + $0x40] sm:$0xff] %v4976
        %5005 = vst [vmem:[#allocation2 + $0x48] sm:$0xff] %v4977
        %5006 = vst [vmem:[#allocation2 + $0x50] sm:$0xff] %v4978
        %5007 = vst [vmem:[#allocation2 + $0x58] sm:$0xff] %v4979
        %5008 = vst [vmem:[#allocation2 + $0x60] sm:$0xff] %v4980
        %5009 = vst [vmem:[#allocation2 + $0x68] sm:$0xff] %v4981
        %5010 = vst [vmem:[#allocation2 + $0x70] sm:$0xff] %v4982
        %5011 = vst [vmem:[#allocation2 + $0x78] sm:$0xff] %v4983
        %5012 = vst [vmem:[#allocation2 + $0x80] sm:$0xff] %v4984
        %5013 = vst [vmem:[#allocation2 + $0x88] sm:$0xff] %v4985
        %5014 = vst [vmem:[#allocation2 + $0x90] sm:$0xff] %v4986
        %5015 = vst [vmem:[#allocation2 + $0x98] sm:$0xff] %v4987
        %5016 = vst [vmem:[#allocation2 + $0xa0] sm:$0xff] %v4988
        %5017 = vst [vmem:[#allocation2 + $0xa8] sm:$0xff] %v4989
        %5018 = vst [vmem:[#allocation2 + $0xb0] sm:$0xff] %v4990
        %5019 = vst [vmem:[#allocation2 + $0xb8] sm:$0xff] %v4991
        %5020 = vst [vmem:[#allocation2 + $0xc0] sm:$0xff] %v4992
        %5021 = vst [vmem:[#allocation2 + $0xc8] sm:$0xff] %v4993
        %5022 = vst [vmem:[#allocation2 + $0xd0] sm:$0xff] %v4994
        %5023 = vst [vmem:[#allocation2 + $0xd8] sm:$0xff] %v4995
        %s5024 = scalar_lea.vmem %s343, 32
        %v5025 = vld [vmem:[%s5024] sm:$0xf]
        %v5026 = vld [vmem:[%s3955] sm:$0xe]
        %v5027 = vld [vmem:[%s3955 + $0x4] sm:$0xf]
        %v5028 = vld [vmem:[%s3955 + $0x8] sm:$0x1]
        %v5029 = vld [vmem:[%s3955 + $0xc] sm:$0xe]
        %v5030 = vld [vmem:[%s3955 + $0x10] sm:$0xf]
        %v5031 = vld [vmem:[%s3955 + $0x14] sm:$0x1]
        %v5032 = vld [vmem:[%s3955 + $0x18] sm:$0xe]
        %v5033 = vld [vmem:[%s3955 + $0x1c] sm:$0xf]
        %v5034 = vld [vmem:[%s3955 + $0x20] sm:$0x1]
        %v5035 = vld [vmem:[%s3955 + $0x24] sm:$0xe]
        %v5036 = vld [vmem:[%s3955 + $0x28] sm:$0xf]
        %v5037 = vld [vmem:[%s3955 + $0x2c] sm:$0x1]
        %v5038 = vld [vmem:[%s3955 + $0x30] sm:$0xe]
        %v5039 = vld [vmem:[%s3955 + $0x34] sm:$0xf]
        %v5040 = vld [vmem:[%s3955 + $0x38] sm:$0x1]
        %v5041 = vld [vmem:[%s3955 + $0x3c] sm:$0xe]
        %v5042 = vld [vmem:[%s3955 + $0x40] sm:$0xf]
        %v5043 = vld [vmem:[%s3955 + $0x44] sm:$0x1]
        %v5044 = vld [vmem:[%s3955 + $0x48] sm:$0xe]
        %v5045 = vld [vmem:[%s3955 + $0x4c] sm:$0xf]
        %v5046 = vld [vmem:[%s3955 + $0x50] sm:$0x1]
        %v5047 = vld [vmem:[%s3955 + $0x54] sm:$0xe]
        %v5048 = vld [vmem:[%s3955 + $0x58] sm:$0xf]
        %v5049 = vld [vmem:[%s3955 + $0x5c] sm:$0x1]
        %v5050 = vld [vmem:[%s3955 + $0x60] sm:$0xe]
        %v5051 = vld [vmem:[%s3955 + $0x64] sm:$0xf]
        %v5052 = vld [vmem:[%s3955 + $0x68] sm:$0x1]
        %v5053 = vld [vmem:[%s3955 + $0x6c] sm:$0xe]
        %v5054 = vld [vmem:[%s3955 + $0x70] sm:$0xf]
        %v5055 = vld [vmem:[%s3955 + $0x74] sm:$0x1]
        %v5056 = vld [vmem:[%s3955 + $0x78] sm:$0xe]
        %v5057 = vld [vmem:[%s3955 + $0x7c] sm:$0xf]
        %v5058 = vld [vmem:[%s3955 + $0x80] sm:$0x1]
        %v5059 = vld [vmem:[%s3955 + $0x84] sm:$0xe]
        %v5060 = vld [vmem:[%s3955 + $0x88] sm:$0xf]
        %v5061 = vld [vmem:[%s3955 + $0x8c] sm:$0x1]
        %v5062 = vld [vmem:[%s3955 + $0x90] sm:$0xe]
        %v5063 = vld [vmem:[%s3955 + $0x94] sm:$0xf]
        %v5064 = vld [vmem:[%s3955 + $0x98] sm:$0x1]
        %v5065 = vld [vmem:[%s3955 + $0x9c] sm:$0xe]
        %v5066 = vld [vmem:[%s3955 + $0xa0] sm:$0xf]
        %v5067 = vld [vmem:[%s3955 + $0xa4] sm:$0x1]
        %v5110 = vrot.slane %v5026, 5
        %v5111 = vrot.slane %v5110, 4
        %v5112 = vrot.slane %v5027, 5
        %v5113 = vsel %vm1601, %v5111, %v5112
        %v5114 = vrot.slane %v5112, 4
        %v5115 = vrot.slane %v5028, 5
        %v5116 = vsel %vm1601, %v5114, %v5115
        %v5117 = vrot.slane %v5029, 5
        %v5118 = vrot.slane %v5117, 4
        %v5119 = vrot.slane %v5030, 5
        %v5120 = vsel %vm1601, %v5118, %v5119
        %v5121 = vrot.slane %v5119, 4
        %v5122 = vrot.slane %v5031, 5
        %v5123 = vsel %vm1601, %v5121, %v5122
        %v5124 = vrot.slane %v5032, 5
        %v5125 = vrot.slane %v5124, 4
        %v5126 = vrot.slane %v5033, 5
        %v5127 = vsel %vm1601, %v5125, %v5126
        %v5128 = vrot.slane %v5126, 4
        %v5129 = vrot.slane %v5034, 5
        %v5130 = vsel %vm1601, %v5128, %v5129
        %v5131 = vrot.slane %v5035, 5
        %v5132 = vrot.slane %v5131, 4
        %v5133 = vrot.slane %v5036, 5
        %v5134 = vsel %vm1601, %v5132, %v5133
        %v5135 = vrot.slane %v5133, 4
        %v5136 = vrot.slane %v5037, 5
        %v5137 = vsel %vm1601, %v5135, %v5136
        %v5138 = vrot.slane %v5038, 5
        %v5139 = vrot.slane %v5138, 4
        %v5140 = vrot.slane %v5039, 5
        %v5141 = vsel %vm1601, %v5139, %v5140
        %v5142 = vrot.slane %v5140, 4
        %v5143 = vrot.slane %v5040, 5
        %v5144 = vsel %vm1601, %v5142, %v5143
        %v5145 = vrot.slane %v5041, 5
        %v5146 = vrot.slane %v5145, 4
        %v5147 = vrot.slane %v5042, 5
        %v5148 = vsel %vm1601, %v5146, %v5147
        %v5149 = vrot.slane %v5147, 4
        %v5150 = vrot.slane %v5043, 5
        %v5151 = vsel %vm1601, %v5149, %v5150
        %v5152 = vrot.slane %v5044, 5
        %v5153 = vrot.slane %v5152, 4
        %v5154 = vrot.slane %v5045, 5
        %v5155 = vsel %vm1601, %v5153, %v5154
        %v5156 = vrot.slane %v5154, 4
        %v5157 = vrot.slane %v5046, 5
        %v5158 = vsel %vm1601, %v5156, %v5157
        %v5159 = vrot.slane %v5047, 5
        %v5160 = vrot.slane %v5159, 4
        %v5161 = vrot.slane %v5048, 5
        %v5162 = vsel %vm1601, %v5160, %v5161
        %v5163 = vrot.slane %v5161, 4
        %v5164 = vrot.slane %v5049, 5
        %v5165 = vsel %vm1601, %v5163, %v5164
        %v5166 = vrot.slane %v5050, 5
        %v5167 = vrot.slane %v5166, 4
        %v5168 = vrot.slane %v5051, 5
        %v5169 = vsel %vm1601, %v5167, %v5168
        %v5170 = vrot.slane %v5168, 4
        %v5171 = vrot.slane %v5052, 5
        %v5172 = vsel %vm1601, %v5170, %v5171
        %v5173 = vrot.slane %v5053, 5
        %v5174 = vrot.slane %v5173, 4
        %v5175 = vrot.slane %v5054, 5
        %v5176 = vsel %vm1601, %v5174, %v5175
        %v5177 = vrot.slane %v5175, 4
        %v5178 = vrot.slane %v5055, 5
        %v5179 = vsel %vm1601, %v5177, %v5178
        %v5180 = vrot.slane %v5056, 5
        %v5181 = vrot.slane %v5180, 4
        %v5182 = vrot.slane %v5057, 5
        %v5183 = vsel %vm1601, %v5181, %v5182
        %v5184 = vrot.slane %v5182, 4
        %v5185 = vrot.slane %v5058, 5
        %v5186 = vsel %vm1601, %v5184, %v5185
        %v5187 = vrot.slane %v5059, 5
        %v5188 = vrot.slane %v5187, 4
        %v5189 = vrot.slane %v5060, 5
        %v5190 = vsel %vm1601, %v5188, %v5189
        %v5191 = vrot.slane %v5189, 4
        %v5192 = vrot.slane %v5061, 5
        %v5193 = vsel %vm1601, %v5191, %v5192
        %v5194 = vrot.slane %v5062, 5
        %v5195 = vrot.slane %v5194, 4
        %v5196 = vrot.slane %v5063, 5
        %v5197 = vsel %vm1601, %v5195, %v5196
        %v5198 = vrot.slane %v5196, 4
        %v5199 = vrot.slane %v5064, 5
        %v5200 = vsel %vm1601, %v5198, %v5199
        %v5201 = vrot.slane %v5065, 5
        %v5202 = vrot.slane %v5201, 4
        %v5203 = vrot.slane %v5066, 5
        %v5204 = vsel %vm1601, %v5202, %v5203
        %v5205 = vrot.slane %v5203, 4
        %v5206 = vrot.slane %v5067, 5
        %v5207 = vsel %vm1601, %v5205, %v5206
        %v5208 = vunpack.c.l.b16 %v5113
        %v5209 = vunpack.c.l.b16 %v5116
        %v5210 = vunpack.c.l.b16 %v5120
        %v5211 = vunpack.c.l.b16 %v5123
        %v5212 = vunpack.c.l.b16 %v5127
        %v5213 = vunpack.c.l.b16 %v5130
        %v5214 = vunpack.c.l.b16 %v5134
        %v5215 = vunpack.c.l.b16 %v5137
        %v5216 = vunpack.c.l.b16 %v5141
        %v5217 = vunpack.c.l.b16 %v5144
        %v5218 = vunpack.c.l.b16 %v5148
        %v5219 = vunpack.c.l.b16 %v5151
        %v5220 = vunpack.c.l.b16 %v5155
        %v5221 = vunpack.c.l.b16 %v5158
        %v5222 = vunpack.c.l.b16 %v5162
        %v5223 = vunpack.c.l.b16 %v5165
        %v5224 = vunpack.c.l.b16 %v5169
        %v5225 = vunpack.c.l.b16 %v5172
        %v5226 = vunpack.c.l.b16 %v5176
        %v5227 = vunpack.c.l.b16 %v5179
        %v5228 = vunpack.c.l.b16 %v5183
        %v5229 = vunpack.c.l.b16 %v5186
        %v5230 = vunpack.c.l.b16 %v5190
        %v5231 = vunpack.c.l.b16 %v5193
        %v5232 = vunpack.c.l.b16 %v5197
        %v5233 = vunpack.c.l.b16 %v5200
        %v5234 = vunpack.c.l.b16 %v5204
        %v5235 = vunpack.c.l.b16 %v5207
        %v5236 = vpack.c.b16 %v5209, %v5208
        %v5237 = vpack.c.b16 %v5211, %v5210
        %v5238 = vpack.c.b16 %v5213, %v5212
        %v5239 = vpack.c.b16 %v5215, %v5214
        %v5240 = vpack.c.b16 %v5217, %v5216
        %v5241 = vpack.c.b16 %v5219, %v5218
        %v5242 = vpack.c.b16 %v5221, %v5220
        %v5243 = vpack.c.b16 %v5223, %v5222
        %v5244 = vpack.c.b16 %v5225, %v5224
        %v5245 = vpack.c.b16 %v5227, %v5226
        %v5246 = vpack.c.b16 %v5229, %v5228
        %v5247 = vpack.c.b16 %v5231, %v5230
        %v5248 = vpack.c.b16 %v5233, %v5232
        %v5249 = vpack.c.b16 %v5235, %v5234
        %v5251 = vsel %vm462, %v5236, 0
        %v5254 = vsel %vm462, %v5237, 0
        %v5257 = vsel %vm462, %v5238, 0
        %v5260 = vsel %vm462, %v5239, 0
        %v5263 = vsel %vm462, %v5240, 0
        %v5266 = vsel %vm462, %v5241, 0
        %v5269 = vsel %vm462, %v5242, 0
        %v5272 = vsel %vm462, %v5243, 0
        %v5275 = vsel %vm462, %v5244, 0
        %v5278 = vsel %vm462, %v5245, 0
        %v5281 = vsel %vm462, %v5246, 0
        %v5284 = vsel %vm462, %v5247, 0
        %v5287 = vsel %vm462, %v5248, 0
        %v5290 = vsel %vm462, %v5249, 0
        %v5293 = vsel %vm511, %v5025, 0
        %5295 = vmatprep.subr.bf16.mxu0 0
        %5296 = vmatpush1.bf16.msra.mxu0 0
        %5297 = vmatprep.subr.bf16.mxu0 0
        %5298 = vmatpush1.bf16.msra.mxu0 0
        %5299 = vmatprep.subr.bf16.mxu0 0
        %5300 = vmatpush1.bf16.msra.mxu0 0
        %5301 = vmatprep.subr.bf16.mxu0 0
        %5302 = vmatpush1.bf16.msra.mxu0 0
        %5303 = vmatprep.subr.bf16.mxu0 0
        %5304 = vmatpush1.bf16.msra.mxu0 0
        %5305 = vmatprep.subr.bf16.mxu0 0
        %5306 = vmatpush1.bf16.msra.mxu0 0
        %5307 = vmatprep.subr.bf16.mxu0 0
        %5308 = vmatpush1.bf16.msra.mxu0 0
        %5309 = vmatprep.subr.bf16.mxu0 0
        %5310 = vmatpush1.bf16.msra.mxu0 %v5293
        %5311 = vmatprep.subr.bf16.mxu0 0
        %5312 = vmatpush2.bf16.msra.mxu0 0
        %5313 = vmatprep.subr.bf16.mxu0 0
        %5314 = vmatpush2.bf16.msra.mxu0 0
        %5315 = vmatprep.subr.bf16.mxu0 0
        %5316 = vmatpush2.bf16.msra.mxu0 0
        %5317 = vmatprep.subr.bf16.mxu0 0
        %5318 = vmatpush2.bf16.msra.mxu0 0
        %5319 = vmatprep.subr.bf16.mxu0 0
        %5320 = vmatpush2.bf16.msra.mxu0 0
        %5321 = vmatprep.subr.bf16.mxu0 0
        %5322 = vmatpush2.bf16.msra.mxu0 0
        %5323 = vmatprep.subr.bf16.mxu0 0
        %5324 = vmatpush2.bf16.msra.mxu0 0
        %5325 = vmatprep.subr.bf16.mxu0 0
        %5326 = vmatpush2.bf16.msra.mxu0 0
        %5327 = vmatprep.mubr.bf16.mxu0 0
        %5328 = vmatmul.mubr.bf16.gmra.mxu0 %v5251
        %v5329 = vpop.f32.mrf.mxu0
        %v5330 = vadd.f32 0.0, %v5329
        %v5331 = vpop.f32.mrf.mxu0
        %v5332 = vpop.f32.mrf.mxu0
        %v5333 = vadd.f32 0.0, %v5332
        %v5334 = vpop.f32.mrf.mxu0
        %5335 = vmatprep.mubr.bf16.mxu0 0
        %5336 = vmatmul.mubr.bf16.gmra.mxu0 %v5254
        %v5337 = vpop.f32.mrf.mxu0
        %v5338 = vadd.f32 0.0, %v5337
        %v5339 = vpop.f32.mrf.mxu0
        %v5340 = vpop.f32.mrf.mxu0
        %v5341 = vadd.f32 0.0, %v5340
        %v5342 = vpop.f32.mrf.mxu0
        %5343 = vmatprep.mubr.bf16.mxu0 0
        %5344 = vmatmul.mubr.bf16.gmra.mxu0 %v5257
        %v5345 = vpop.f32.mrf.mxu0
        %v5346 = vadd.f32 0.0, %v5345
        %v5347 = vpop.f32.mrf.mxu0
        %v5348 = vpop.f32.mrf.mxu0
        %v5349 = vadd.f32 0.0, %v5348
        %v5350 = vpop.f32.mrf.mxu0
        %5351 = vmatprep.mubr.bf16.mxu0 0
        %5352 = vmatmul.mubr.bf16.gmra.mxu0 %v5260
        %v5353 = vpop.f32.mrf.mxu0
        %v5354 = vadd.f32 0.0, %v5353
        %v5355 = vpop.f32.mrf.mxu0
        %v5356 = vpop.f32.mrf.mxu0
        %v5357 = vadd.f32 0.0, %v5356
        %v5358 = vpop.f32.mrf.mxu0
        %5359 = vmatprep.mubr.bf16.mxu0 0
        %5360 = vmatmul.mubr.bf16.gmra.mxu0 %v5263
        %v5361 = vpop.f32.mrf.mxu0
        %v5362 = vadd.f32 0.0, %v5361
        %v5363 = vpop.f32.mrf.mxu0
        %v5364 = vpop.f32.mrf.mxu0
        %v5365 = vadd.f32 0.0, %v5364
        %v5366 = vpop.f32.mrf.mxu0
        %5367 = vmatprep.mubr.bf16.mxu0 0
        %5368 = vmatmul.mubr.bf16.gmra.mxu0 %v5266
        %v5369 = vpop.f32.mrf.mxu0
        %v5370 = vadd.f32 0.0, %v5369
        %v5371 = vpop.f32.mrf.mxu0
        %v5372 = vpop.f32.mrf.mxu0
        %v5373 = vadd.f32 0.0, %v5372
        %v5374 = vpop.f32.mrf.mxu0
        %5375 = vmatprep.mubr.bf16.mxu0 0
        %5376 = vmatmul.mubr.bf16.gmra.mxu0 %v5269
        %v5377 = vpop.f32.mrf.mxu0
        %v5378 = vadd.f32 0.0, %v5377
        %v5379 = vpop.f32.mrf.mxu0
        %v5380 = vpop.f32.mrf.mxu0
        %v5381 = vadd.f32 0.0, %v5380
        %v5382 = vpop.f32.mrf.mxu0
        %5383 = vmatprep.mubr.bf16.mxu0 0
        %5384 = vmatmul.mubr.bf16.gmra.mxu0 %v5272
        %v5385 = vpop.f32.mrf.mxu0
        %v5386 = vadd.f32 0.0, %v5385
        %v5387 = vpop.f32.mrf.mxu0
        %v5388 = vpop.f32.mrf.mxu0
        %v5389 = vadd.f32 0.0, %v5388
        %v5390 = vpop.f32.mrf.mxu0
        %5391 = vmatprep.mubr.bf16.mxu0 0
        %5392 = vmatmul.mubr.bf16.gmra.mxu0 %v5275
        %v5393 = vpop.f32.mrf.mxu0
        %v5394 = vadd.f32 0.0, %v5393
        %v5395 = vpop.f32.mrf.mxu0
        %v5396 = vpop.f32.mrf.mxu0
        %v5397 = vadd.f32 0.0, %v5396
        %v5398 = vpop.f32.mrf.mxu0
        %5399 = vmatprep.mubr.bf16.mxu0 0
        %5400 = vmatmul.mubr.bf16.gmra.mxu0 %v5278
        %v5401 = vpop.f32.mrf.mxu0
        %v5402 = vadd.f32 0.0, %v5401
        %v5403 = vpop.f32.mrf.mxu0
        %v5404 = vpop.f32.mrf.mxu0
        %v5405 = vadd.f32 0.0, %v5404
        %v5406 = vpop.f32.mrf.mxu0
        %5407 = vmatprep.mubr.bf16.mxu0 0
        %5408 = vmatmul.mubr.bf16.gmra.mxu0 %v5281
        %v5409 = vpop.f32.mrf.mxu0
        %v5410 = vadd.f32 0.0, %v5409
        %v5411 = vpop.f32.mrf.mxu0
        %v5412 = vpop.f32.mrf.mxu0
        %v5413 = vadd.f32 0.0, %v5412
        %v5414 = vpop.f32.mrf.mxu0
        %5415 = vmatprep.mubr.bf16.mxu0 0
        %5416 = vmatmul.mubr.bf16.gmra.mxu0 %v5284
        %v5417 = vpop.f32.mrf.mxu0
        %v5418 = vadd.f32 0.0, %v5417
        %v5419 = vpop.f32.mrf.mxu0
        %v5420 = vpop.f32.mrf.mxu0
        %v5421 = vadd.f32 0.0, %v5420
        %v5422 = vpop.f32.mrf.mxu0
        %5423 = vmatprep.mubr.bf16.mxu0 0
        %5424 = vmatmul.mubr.bf16.gmra.mxu0 %v5287
        %v5425 = vpop.f32.mrf.mxu0
        %v5426 = vadd.f32 0.0, %v5425
        %v5427 = vpop.f32.mrf.mxu0
        %v5428 = vpop.f32.mrf.mxu0
        %v5429 = vadd.f32 0.0, %v5428
        %v5430 = vpop.f32.mrf.mxu0
        %5431 = vmatprep.mubr.bf16.mxu0 0
        %5432 = vmatmul.mubr.bf16.gmra.mxu0 %v5290
        %v5433 = vpop.f32.mrf.mxu0
        %v5434 = vadd.f32 0.0, %v5433
        %v5435 = vpop.f32.mrf.mxu0
        %v5436 = vpop.f32.mrf.mxu0
        %v5437 = vadd.f32 0.0, %v5436
        %v5438 = vpop.f32.mrf.mxu0
        %5439 = vdwg.mxu0
        %v5440 = vld [vmem:[#allocation2] sm:$0xff]
        %v5441 = vld [vmem:[#allocation2 + $0x8] sm:$0xff]
        %v5442 = vld [vmem:[#allocation2 + $0x10] sm:$0xff]
        %v5443 = vld [vmem:[#allocation2 + $0x18] sm:$0xff]
        %v5444 = vld [vmem:[#allocation2 + $0x20] sm:$0xff]
        %v5445 = vld [vmem:[#allocation2 + $0x28] sm:$0xff]
        %v5446 = vld [vmem:[#allocation2 + $0x30] sm:$0xff]
        %v5447 = vld [vmem:[#allocation2 + $0x38] sm:$0xff]
        %v5448 = vld [vmem:[#allocation2 + $0x40] sm:$0xff]
        %v5449 = vld [vmem:[#allocation2 + $0x48] sm:$0xff]
        %v5450 = vld [vmem:[#allocation2 + $0x50] sm:$0xff]
        %v5451 = vld [vmem:[#allocation2 + $0x58] sm:$0xff]
        %v5452 = vld [vmem:[#allocation2 + $0x60] sm:$0xff]
        %v5453 = vld [vmem:[#allocation2 + $0x68] sm:$0xff]
        %v5454 = vld [vmem:[#allocation2 + $0x70] sm:$0xff]
        %v5455 = vld [vmem:[#allocation2 + $0x78] sm:$0xff]
        %v5456 = vld [vmem:[#allocation2 + $0x80] sm:$0xff]
        %v5457 = vld [vmem:[#allocation2 + $0x88] sm:$0xff]
        %v5458 = vld [vmem:[#allocation2 + $0x90] sm:$0xff]
        %v5459 = vld [vmem:[#allocation2 + $0x98] sm:$0xff]
        %v5460 = vld [vmem:[#allocation2 + $0xa0] sm:$0xff]
        %v5461 = vld [vmem:[#allocation2 + $0xa8] sm:$0xff]
        %v5462 = vld [vmem:[#allocation2 + $0xb0] sm:$0xff]
        %v5463 = vld [vmem:[#allocation2 + $0xb8] sm:$0xff]
        %v5464 = vld [vmem:[#allocation2 + $0xc0] sm:$0xff]
        %v5465 = vld [vmem:[#allocation2 + $0xc8] sm:$0xff]
        %v5466 = vld [vmem:[#allocation2 + $0xd0] sm:$0xff]
        %v5467 = vld [vmem:[#allocation2 + $0xd8] sm:$0xff]
        %v5468 = vadd.f32 %v5440, %v5330
        %v5469 = vadd.f32 %v5441, %v5333
        %v5470 = vadd.f32 %v5442, %v5338
        %v5471 = vadd.f32 %v5443, %v5341
        %v5472 = vadd.f32 %v5444, %v5346
        %v5473 = vadd.f32 %v5445, %v5349
        %v5474 = vadd.f32 %v5446, %v5354
        %v5475 = vadd.f32 %v5447, %v5357
        %v5476 = vadd.f32 %v5448, %v5362
        %v5477 = vadd.f32 %v5449, %v5365
        %v5478 = vadd.f32 %v5450, %v5370
        %v5479 = vadd.f32 %v5451, %v5373
        %v5480 = vadd.f32 %v5452, %v5378
        %v5481 = vadd.f32 %v5453, %v5381
        %v5482 = vadd.f32 %v5454, %v5386
        %v5483 = vadd.f32 %v5455, %v5389
        %v5484 = vadd.f32 %v5456, %v5394
        %v5485 = vadd.f32 %v5457, %v5397
        %v5486 = vadd.f32 %v5458, %v5402
        %v5487 = vadd.f32 %v5459, %v5405
        %v5488 = vadd.f32 %v5460, %v5410
        %v5489 = vadd.f32 %v5461, %v5413
        %v5490 = vadd.f32 %v5462, %v5418
        %v5491 = vadd.f32 %v5463, %v5421
        %v5492 = vadd.f32 %v5464, %v5426
        %v5493 = vadd.f32 %v5465, %v5429
        %v5494 = vadd.f32 %v5466, %v5434
        %v5495 = vadd.f32 %v5467, %v5437
        %5496 = vst [vmem:[#allocation2] sm:$0xff] %v5468
        %5497 = vst [vmem:[#allocation2 + $0x8] sm:$0xff] %v5469
        %5498 = vst [vmem:[#allocation2 + $0x10] sm:$0xff] %v5470
        %5499 = vst [vmem:[#allocation2 + $0x18] sm:$0xff] %v5471
        %5500 = vst [vmem:[#allocation2 + $0x20] sm:$0xff] %v5472
        %5501 = vst [vmem:[#allocation2 + $0x28] sm:$0xff] %v5473
        %5502 = vst [vmem:[#allocation2 + $0x30] sm:$0xff] %v5474
        %5503 = vst [vmem:[#allocation2 + $0x38] sm:$0xff] %v5475
        %5504 = vst [vmem:[#allocation2 + $0x40] sm:$0xff] %v5476
        %5505 = vst [vmem:[#allocation2 + $0x48] sm:$0xff] %v5477
        %5506 = vst [vmem:[#allocation2 + $0x50] sm:$0xff] %v5478
        %5507 = vst [vmem:[#allocation2 + $0x58] sm:$0xff] %v5479
        %5508 = vst [vmem:[#allocation2 + $0x60] sm:$0xff] %v5480
        %5509 = vst [vmem:[#allocation2 + $0x68] sm:$0xff] %v5481
        %5510 = vst [vmem:[#allocation2 + $0x70] sm:$0xff] %v5482
        %5511 = vst [vmem:[#allocation2 + $0x78] sm:$0xff] %v5483
        %5512 = vst [vmem:[#allocation2 + $0x80] sm:$0xff] %v5484
        %5513 = vst [vmem:[#allocation2 + $0x88] sm:$0xff] %v5485
        %5514 = vst [vmem:[#allocation2 + $0x90] sm:$0xff] %v5486
        %5515 = vst [vmem:[#allocation2 + $0x98] sm:$0xff] %v5487
        %5516 = vst [vmem:[#allocation2 + $0xa0] sm:$0xff] %v5488
        %5517 = vst [vmem:[#allocation2 + $0xa8] sm:$0xff] %v5489
        %5518 = vst [vmem:[#allocation2 + $0xb0] sm:$0xff] %v5490
        %5519 = vst [vmem:[#allocation2 + $0xb8] sm:$0xff] %v5491
        %5520 = vst [vmem:[#allocation2 + $0xc0] sm:$0xff] %v5492
        %5521 = vst [vmem:[#allocation2 + $0xc8] sm:$0xff] %v5493
        %5522 = vst [vmem:[#allocation2 + $0xd0] sm:$0xff] %v5494
        %5523 = vst [vmem:[#allocation2 + $0xd8] sm:$0xff] %v5495
        %v5524 = vld [vmem:[%s3953] sm:$0xf]
        %v5525 = vld [vmem:[%s336] sm:$0xf]
        %v5526 = vld [vmem:[%s336 + $0x4] sm:$0xf]
        %v5527 = vld [vmem:[%s336 + $0xc] sm:$0xf]
        %v5528 = vld [vmem:[%s336 + $0x10] sm:$0xf]
        %v5533 = vunpack.c.l.b16 %v5525
        %v5534 = vunpack.c.l.b16 %v5526
        %v5535 = vunpack.c.l.b16 %v5527
        %v5536 = vunpack.c.l.b16 %v5528
        %v5537 = vpack.c.b16 %v5534, %v5533
        %v5538 = vpack.c.b16 %v5536, %v5535
        %v5540 = vsel %vm462, %v5537, 0
        %v5543 = vsel %vm462, %v5538, 0
        %v5546 = vsel %vm511, %v5524, 0
        %5548 = vmatprep.subr.bf16.mxu0 0
        %5549 = vmatpush1.bf16.msra.mxu0 0
        %5550 = vmatprep.subr.bf16.mxu0 0
        %5551 = vmatpush1.bf16.msra.mxu0 0
        %5552 = vmatprep.subr.bf16.mxu0 0
        %5553 = vmatpush1.bf16.msra.mxu0 0
        %5554 = vmatprep.subr.bf16.mxu0 0
        %5555 = vmatpush1.bf16.msra.mxu0 0
        %5556 = vmatprep.subr.bf16.mxu0 0
        %5557 = vmatpush1.bf16.msra.mxu0 0
        %5558 = vmatprep.subr.bf16.mxu0 0
        %5559 = vmatpush1.bf16.msra.mxu0 0
        %5560 = vmatprep.subr.bf16.mxu0 0
        %5561 = vmatpush1.bf16.msra.mxu0 0
        %5562 = vmatprep.subr.bf16.mxu0 0
        %5563 = vmatpush1.bf16.msra.mxu0 %v5546
        %5564 = vmatprep.subr.bf16.mxu0 0
        %5565 = vmatpush2.bf16.msra.mxu0 0
        %5566 = vmatprep.subr.bf16.mxu0 0
        %5567 = vmatpush2.bf16.msra.mxu0 0
        %5568 = vmatprep.subr.bf16.mxu0 0
        %5569 = vmatpush2.bf16.msra.mxu0 0
        %5570 = vmatprep.subr.bf16.mxu0 0
        %5571 = vmatpush2.bf16.msra.mxu0 0
        %5572 = vmatprep.subr.bf16.mxu0 0
        %5573 = vmatpush2.bf16.msra.mxu0 0
        %5574 = vmatprep.subr.bf16.mxu0 0
        %5575 = vmatpush2.bf16.msra.mxu0 0
        %5576 = vmatprep.subr.bf16.mxu0 0
        %5577 = vmatpush2.bf16.msra.mxu0 0
        %5578 = vmatprep.subr.bf16.mxu0 0
        %5579 = vmatpush2.bf16.msra.mxu0 0
        %5580 = vmatprep.mubr.bf16.mxu0 0
        %5581 = vmatmul.mubr.bf16.gmra.mxu0 %v5540
        %v5582 = vpop.f32.mrf.mxu0
        %v5583 = vadd.f32 0.0, %v5582
        %v5584 = vpop.f32.mrf.mxu0
        %v5585 = vpop.f32.mrf.mxu0
        %v5586 = vadd.f32 0.0, %v5585
        %v5587 = vpop.f32.mrf.mxu0
        %5588 = vmatprep.mubr.bf16.mxu0 0
        %5589 = vmatmul.mubr.bf16.gmra.mxu0 %v5543
        %v5590 = vpop.f32.mrf.mxu0
        %v5591 = vadd.f32 0.0, %v5590
        %v5592 = vpop.f32.mrf.mxu0
        %v5593 = vpop.f32.mrf.mxu0
        %v5594 = vadd.f32 0.0, %v5593
        %v5595 = vpop.f32.mrf.mxu0
        %5596 = vdwg.mxu0
        %v5597 = vld [vmem:[#allocation2 + $0xe0] sm:$0xff]
        %v5598 = vld [vmem:[#allocation2 + $0xe8] sm:$0xff]
        %v5599 = vld [vmem:[#allocation2 + $0xf0] sm:$0xff]
        %v5600 = vld [vmem:[#allocation2 + $0xf8] sm:$0xff]
        %v5601 = vadd.f32 %v5597, %v5583
        %v5602 = vadd.f32 %v5598, %v5586
        %v5603 = vadd.f32 %v5599, %v5591
        %v5604 = vadd.f32 %v5600, %v5594
        %5605 = vst [vmem:[#allocation2 + $0xe0] sm:$0xff] %v5601
        %5606 = vst [vmem:[#allocation2 + $0xe8] sm:$0xff] %v5602
        %5607 = vst [vmem:[#allocation2 + $0xf0] sm:$0xff] %v5603
        %5608 = vst [vmem:[#allocation2 + $0xf8] sm:$0xff] %v5604
        %v5609 = vld [vmem:[%s4328] sm:$0xf]
        %v5610 = vld [vmem:[%s336] sm:$0xf]
        %v5611 = vld [vmem:[%s336 + $0x4] sm:$0xf]
        %v5612 = vld [vmem:[%s336 + $0x8] sm:$0x1]
        %v5613 = vld [vmem:[%s336 + $0xc] sm:$0xf]
        %v5614 = vld [vmem:[%s336 + $0x10] sm:$0xf]
        %v5615 = vld [vmem:[%s336 + $0x14] sm:$0x1]
        %v5617 = vshrl.u32 %v5610, 16
        %v5619 = vrot.slane %v5617, 4
        %v5620 = vshll.u32 %v5610, 16
        %v5622 = vrot.slane %v5620, 5
        %v5623 = vor.u32 %v5619, %v5622
        %v5624 = vrot.slane %v5623, 4
        %v5626 = vshll.u32 %v5611, 16
        %v5628 = vrot.slane %v5626, 5
        %v5629 = vsel %vm760, %v5624, %v5628
        %v5630 = vshrl.u32 %v5611, 16
        %v5632 = vrot.slane %v5630, 4
        %v5633 = vor.u32 %v5632, %v5628
        %v5634 = vrot.slane %v5633, 4
        %v5636 = vshll.u32 %v5612, 16
        %v5638 = vrot.slane %v5636, 5
        %v5639 = vsel %vm760, %v5634, %v5638
        %v5641 = vshrl.u32 %v5613, 16
        %v5643 = vrot.slane %v5641, 4
        %v5644 = vshll.u32 %v5613, 16
        %v5646 = vrot.slane %v5644, 5
        %v5647 = vor.u32 %v5643, %v5646
        %v5648 = vrot.slane %v5647, 4
        %v5650 = vshll.u32 %v5614, 16
        %v5652 = vrot.slane %v5650, 5
        %v5653 = vsel %vm760, %v5648, %v5652
        %v5654 = vshrl.u32 %v5614, 16
        %v5656 = vrot.slane %v5654, 4
        %v5657 = vor.u32 %v5656, %v5652
        %v5658 = vrot.slane %v5657, 4
        %v5660 = vshll.u32 %v5615, 16
        %v5662 = vrot.slane %v5660, 5
        %v5663 = vsel %vm760, %v5658, %v5662
        %v5664 = vunpack.c.l.b16 %v5629
        %v5665 = vunpack.c.l.b16 %v5639
        %v5666 = vunpack.c.l.b16 %v5653
        %v5667 = vunpack.c.l.b16 %v5663
        %v5668 = vpack.c.b16 %v5665, %v5664
        %v5669 = vpack.c.b16 %v5667, %v5666
        %v5671 = vsel %vm462, %v5668, 0
        %v5674 = vsel %vm462, %v5669, 0
        %v5677 = vsel %vm511, %v5609, 0
        %5679 = vmatprep.subr.bf16.mxu0 0
        %5680 = vmatpush1.bf16.msra.mxu0 0
        %5681 = vmatprep.subr.bf16.mxu0 0
        %5682 = vmatpush1.bf16.msra.mxu0 0
        %5683 = vmatprep.subr.bf16.mxu0 0
        %5684 = vmatpush1.bf16.msra.mxu0 0
        %5685 = vmatprep.subr.bf16.mxu0 0
        %5686 = vmatpush1.bf16.msra.mxu0 0
        %5687 = vmatprep.subr.bf16.mxu0 0
        %5688 = vmatpush1.bf16.msra.mxu0 0
        %5689 = vmatprep.subr.bf16.mxu0 0
        %5690 = vmatpush1.bf16.msra.mxu0 0
        %5691 = vmatprep.subr.bf16.mxu0 0
        %5692 = vmatpush1.bf16.msra.mxu0 0
        %5693 = vmatprep.subr.bf16.mxu0 0
        %5694 = vmatpush1.bf16.msra.mxu0 %v5677
        %5695 = vmatprep.subr.bf16.mxu0 0
        %5696 = vmatpush2.bf16.msra.mxu0 0
        %5697 = vmatprep.subr.bf16.mxu0 0
        %5698 = vmatpush2.bf16.msra.mxu0 0
        %5699 = vmatprep.subr.bf16.mxu0 0
        %5700 = vmatpush2.bf16.msra.mxu0 0
        %5701 = vmatprep.subr.bf16.mxu0 0
        %5702 = vmatpush2.bf16.msra.mxu0 0
        %5703 = vmatprep.subr.bf16.mxu0 0
        %5704 = vmatpush2.bf16.msra.mxu0 0
        %5705 = vmatprep.subr.bf16.mxu0 0
        %5706 = vmatpush2.bf16.msra.mxu0 0
        %5707 = vmatprep.subr.bf16.mxu0 0
        %5708 = vmatpush2.bf16.msra.mxu0 0
        %5709 = vmatprep.subr.bf16.mxu0 0
        %5710 = vmatpush2.bf16.msra.mxu0 0
        %5711 = vmatprep.mubr.bf16.mxu0 0
        %5712 = vmatmul.mubr.bf16.gmra.mxu0 %v5671
        %v5713 = vpop.f32.mrf.mxu0
        %v5714 = vadd.f32 0.0, %v5713
        %v5715 = vpop.f32.mrf.mxu0
        %v5716 = vpop.f32.mrf.mxu0
        %v5717 = vadd.f32 0.0, %v5716
        %v5718 = vpop.f32.mrf.mxu0
        %5719 = vmatprep.mubr.bf16.mxu0 0
        %5720 = vmatmul.mubr.bf16.gmra.mxu0 %v5674
        %v5721 = vpop.f32.mrf.mxu0
        %v5722 = vadd.f32 0.0, %v5721
        %v5723 = vpop.f32.mrf.mxu0
        %v5724 = vpop.f32.mrf.mxu0
        %v5725 = vadd.f32 0.0, %v5724
        %v5726 = vpop.f32.mrf.mxu0
        %5727 = vdwg.mxu0
        %v5728 = vld [vmem:[#allocation2 + $0xe0] sm:$0xff]
        %v5729 = vld [vmem:[#allocation2 + $0xe8] sm:$0xff]
        %v5730 = vld [vmem:[#allocation2 + $0xf0] sm:$0xff]
        %v5731 = vld [vmem:[#allocation2 + $0xf8] sm:$0xff]
        %v5732 = vadd.f32 %v5728, %v5714
        %v5733 = vadd.f32 %v5729, %v5717
        %v5734 = vadd.f32 %v5730, %v5722
        %v5735 = vadd.f32 %v5731, %v5725
        %5736 = vst [vmem:[#allocation2 + $0xe0] sm:$0xff] %v5732
        %5737 = vst [vmem:[#allocation2 + $0xe8] sm:$0xff] %v5733
        %5738 = vst [vmem:[#allocation2 + $0xf0] sm:$0xff] %v5734
        %5739 = vst [vmem:[#allocation2 + $0xf8] sm:$0xff] %v5735
        %v5740 = vld [vmem:[%s5024] sm:$0xf]
        %v5741 = vld [vmem:[%s336] sm:$0xe]
        %v5742 = vld [vmem:[%s336 + $0x4] sm:$0xf]
        %v5743 = vld [vmem:[%s336 + $0x8] sm:$0x1]
        %v5744 = vld [vmem:[%s336 + $0xc] sm:$0xe]
        %v5745 = vld [vmem:[%s336 + $0x10] sm:$0xf]
        %v5746 = vld [vmem:[%s336 + $0x14] sm:$0x1]
        %v5753 = vrot.slane %v5741, 5
        %v5754 = vrot.slane %v5753, 4
        %v5755 = vrot.slane %v5742, 5
        %v5756 = vsel %vm1601, %v5754, %v5755
        %v5757 = vrot.slane %v5755, 4
        %v5758 = vrot.slane %v5743, 5
        %v5759 = vsel %vm1601, %v5757, %v5758
        %v5760 = vrot.slane %v5744, 5
        %v5761 = vrot.slane %v5760, 4
        %v5762 = vrot.slane %v5745, 5
        %v5763 = vsel %vm1601, %v5761, %v5762
        %v5764 = vrot.slane %v5762, 4
        %v5765 = vrot.slane %v5746, 5
        %v5766 = vsel %vm1601, %v5764, %v5765
        %v5767 = vunpack.c.l.b16 %v5756
        %v5768 = vunpack.c.l.b16 %v5759
        %v5769 = vunpack.c.l.b16 %v5763
        %v5770 = vunpack.c.l.b16 %v5766
        %v5771 = vpack.c.b16 %v5768, %v5767
        %v5772 = vpack.c.b16 %v5770, %v5769
        %v5774 = vsel %vm462, %v5771, 0
        %v5777 = vsel %vm462, %v5772, 0
        %v5780 = vsel %vm511, %v5740, 0
        %5782 = vmatprep.subr.bf16.mxu0 0
        %5783 = vmatpush1.bf16.msra.mxu0 0
        %5784 = vmatprep.subr.bf16.mxu0 0
        %5785 = vmatpush1.bf16.msra.mxu0 0
        %5786 = vmatprep.subr.bf16.mxu0 0
        %5787 = vmatpush1.bf16.msra.mxu0 0
        %5788 = vmatprep.subr.bf16.mxu0 0
        %5789 = vmatpush1.bf16.msra.mxu0 0
        %5790 = vmatprep.subr.bf16.mxu0 0
        %5791 = vmatpush1.bf16.msra.mxu0 0
        %5792 = vmatprep.subr.bf16.mxu0 0
        %5793 = vmatpush1.bf16.msra.mxu0 0
        %5794 = vmatprep.subr.bf16.mxu0 0
        %5795 = vmatpush1.bf16.msra.mxu0 0
        %5796 = vmatprep.subr.bf16.mxu0 0
        %5797 = vmatpush1.bf16.msra.mxu0 %v5780
        %5798 = vmatprep.subr.bf16.mxu0 0
        %5799 = vmatpush2.bf16.msra.mxu0 0
        %5800 = vmatprep.subr.bf16.mxu0 0
        %5801 = vmatpush2.bf16.msra.mxu0 0
        %5802 = vmatprep.subr.bf16.mxu0 0
        %5803 = vmatpush2.bf16.msra.mxu0 0
        %5804 = vmatprep.subr.bf16.mxu0 0
        %5805 = vmatpush2.bf16.msra.mxu0 0
        %5806 = vmatprep.subr.bf16.mxu0 0
        %5807 = vmatpush2.bf16.msra.mxu0 0
        %5808 = vmatprep.subr.bf16.mxu0 0
        %5809 = vmatpush2.bf16.msra.mxu0 0
        %5810 = vmatprep.subr.bf16.mxu0 0
        %5811 = vmatpush2.bf16.msra.mxu0 0
        %5812 = vmatprep.subr.bf16.mxu0 0
        %5813 = vmatpush2.bf16.msra.mxu0 0
        %5814 = vmatprep.mubr.bf16.mxu0 0
        %5815 = vmatmul.mubr.bf16.gmra.mxu0 %v5774
        %v5816 = vpop.f32.mrf.mxu0
        %v5817 = vadd.f32 0.0, %v5816
        %v5818 = vpop.f32.mrf.mxu0
        %v5819 = vpop.f32.mrf.mxu0
        %v5820 = vadd.f32 0.0, %v5819
        %v5821 = vpop.f32.mrf.mxu0
        %5822 = vmatprep.mubr.bf16.mxu0 0
        %5823 = vmatmul.mubr.bf16.gmra.mxu0 %v5777
        %v5824 = vpop.f32.mrf.mxu0
        %v5825 = vadd.f32 0.0, %v5824
        %v5826 = vpop.f32.mrf.mxu0
        %v5827 = vpop.f32.mrf.mxu0
        %v5828 = vadd.f32 0.0, %v5827
        %v5829 = vpop.f32.mrf.mxu0
        %5830 = vdwg.mxu0
        %v5831 = vld [vmem:[#allocation2 + $0xe0] sm:$0xff]
        %v5832 = vld [vmem:[#allocation2 + $0xe8] sm:$0xff]
        %v5833 = vld [vmem:[#allocation2 + $0xf0] sm:$0xff]
        %v5834 = vld [vmem:[#allocation2 + $0xf8] sm:$0xff]
        %v5835 = vadd.f32 %v5831, %v5817
        %v5836 = vadd.f32 %v5832, %v5820
        %v5837 = vadd.f32 %v5833, %v5825
        %v5838 = vadd.f32 %v5834, %v5828
        %5839 = vst [vmem:[#allocation2 + $0xe0] sm:$0xff] %v5835
        %5840 = vst [vmem:[#allocation2 + $0xe8] sm:$0xff] %v5836
        %5841 = vst [vmem:[#allocation2 + $0xf0] sm:$0xff] %v5837
        %5842 = vst [vmem:[#allocation2 + $0xf8] sm:$0xff] %v5838
        %v5843 = vld [vmem:[#allocation2] sm:$0xff]
        %v5844 = vld [vmem:[#allocation2 + $0x8] sm:$0xff]
        %v5845 = vld [vmem:[#allocation2 + $0x10] sm:$0xff]
        %v5846 = vld [vmem:[#allocation2 + $0x18] sm:$0xff]
        %v5847 = vld [vmem:[#allocation2 + $0x20] sm:$0xff]
        %v5848 = vld [vmem:[#allocation2 + $0x28] sm:$0xff]
        %v5849 = vld [vmem:[#allocation2 + $0x30] sm:$0xff]
        %v5850 = vld [vmem:[#allocation2 + $0x38] sm:$0xff]
        %v5851 = vld [vmem:[#allocation2 + $0x40] sm:$0xff]
        %v5852 = vld [vmem:[#allocation2 + $0x48] sm:$0xff]
        %v5853 = vld [vmem:[#allocation2 + $0x50] sm:$0xff]
        %v5854 = vld [vmem:[#allocation2 + $0x58] sm:$0xff]
        %v5855 = vld [vmem:[#allocation2 + $0x60] sm:$0xff]
        %v5856 = vld [vmem:[#allocation2 + $0x68] sm:$0xff]
        %v5857 = vld [vmem:[#allocation2 + $0x70] sm:$0xff]
        %v5858 = vld [vmem:[#allocation2 + $0x78] sm:$0xff]
        %v5859 = vld [vmem:[#allocation2 + $0x80] sm:$0xff]
        %v5860 = vld [vmem:[#allocation2 + $0x88] sm:$0xff]
        %v5861 = vld [vmem:[#allocation2 + $0x90] sm:$0xff]
        %v5862 = vld [vmem:[#allocation2 + $0x98] sm:$0xff]
        %v5863 = vld [vmem:[#allocation2 + $0xa0] sm:$0xff]
        %v5864 = vld [vmem:[#allocation2 + $0xa8] sm:$0xff]
        %v5865 = vld [vmem:[#allocation2 + $0xb0] sm:$0xff]
        %v5866 = vld [vmem:[#allocation2 + $0xb8] sm:$0xff]
        %v5867 = vld [vmem:[#allocation2 + $0xc0] sm:$0xff]
        %v5868 = vld [vmem:[#allocation2 + $0xc8] sm:$0xff]
        %v5869 = vld [vmem:[#allocation2 + $0xd0] sm:$0xff]
        %v5870 = vld [vmem:[#allocation2 + $0xd8] sm:$0xff]
        %v5871 = vld [vmem:[#allocation2 + $0xe0] sm:$0xff]
        %v5872 = vld [vmem:[#allocation2 + $0xe8] sm:$0xff]
        %v5873 = vld [vmem:[#allocation2 + $0xf0] sm:$0xff]
        %v5874 = vld [vmem:[#allocation2 + $0xf8] sm:$0xff]
        %v5875 = vld [vmem:[%s346] sm:$0x1]
        %v5877 = vlaneseq
        %v5878 = vshrl.u32 %v5877, 7
        %v5879 = vsub.s32 0, %v5878
        %v5880 = vrot.slane %v5875, %v5879
        %v5882 = vadd.f32 %v5843, %v5880
        %v5883 = vadd.f32 %v5844, %v5880
        %v5884 = vadd.f32 %v5845, %v5880
        %v5885 = vadd.f32 %v5846, %v5880
        %v5886 = vadd.f32 %v5847, %v5880
        %v5887 = vadd.f32 %v5848, %v5880
        %v5888 = vadd.f32 %v5849, %v5880
        %v5889 = vadd.f32 %v5850, %v5880
        %v5890 = vadd.f32 %v5851, %v5880
        %v5891 = vadd.f32 %v5852, %v5880
        %v5892 = vadd.f32 %v5853, %v5880
        %v5893 = vadd.f32 %v5854, %v5880
        %v5894 = vadd.f32 %v5855, %v5880
        %v5895 = vadd.f32 %v5856, %v5880
        %v5896 = vadd.f32 %v5857, %v5880
        %v5897 = vadd.f32 %v5858, %v5880
        %v5898 = vadd.f32 %v5859, %v5880
        %v5899 = vadd.f32 %v5860, %v5880
        %v5900 = vadd.f32 %v5861, %v5880
        %v5901 = vadd.f32 %v5862, %v5880
        %v5902 = vadd.f32 %v5863, %v5880
        %v5903 = vadd.f32 %v5864, %v5880
        %v5904 = vadd.f32 %v5865, %v5880
        %v5905 = vadd.f32 %v5866, %v5880
        %v5906 = vadd.f32 %v5867, %v5880
        %v5907 = vadd.f32 %v5868, %v5880
        %v5908 = vadd.f32 %v5869, %v5880
        %v5909 = vadd.f32 %v5870, %v5880
        %v5910 = vadd.f32 %v5871, %v5880
        %v5911 = vadd.f32 %v5872, %v5880
        %v5912 = vadd.f32 %v5873, %v5880
        %v5913 = vadd.f32 %v5874, %v5880
        %v5914 = vsub.f32 0.0, %v5882
        %v5915 = vsub.f32 0.0, %v5883
        %v5916 = vsub.f32 0.0, %v5884
        %v5917 = vsub.f32 0.0, %v5885
        %v5918 = vsub.f32 0.0, %v5886
        %v5919 = vsub.f32 0.0, %v5887
        %v5920 = vsub.f32 0.0, %v5888
        %v5921 = vsub.f32 0.0, %v5889
        %v5922 = vsub.f32 0.0, %v5890
        %v5923 = vsub.f32 0.0, %v5891
        %v5924 = vsub.f32 0.0, %v5892
        %v5925 = vsub.f32 0.0, %v5893
        %v5926 = vsub.f32 0.0, %v5894
        %v5927 = vsub.f32 0.0, %v5895
        %v5928 = vsub.f32 0.0, %v5896
        %v5929 = vsub.f32 0.0, %v5897
        %v5930 = vsub.f32 0.0, %v5898
        %v5931 = vsub.f32 0.0, %v5899
        %v5932 = vsub.f32 0.0, %v5900
        %v5933 = vsub.f32 0.0, %v5901
        %v5934 = vsub.f32 0.0, %v5902
        %v5935 = vsub.f32 0.0, %v5903
        %v5936 = vsub.f32 0.0, %v5904
        %v5937 = vsub.f32 0.0, %v5905
        %v5938 = vsub.f32 0.0, %v5906
        %v5939 = vsub.f32 0.0, %v5907
        %v5940 = vsub.f32 0.0, %v5908
        %v5941 = vsub.f32 0.0, %v5909
        %v5942 = vsub.f32 0.0, %v5910
        %v5943 = vsub.f32 0.0, %v5911
        %v5944 = vsub.f32 0.0, %v5912
        %v5945 = vsub.f32 0.0, %v5913
        %v5946 = vmul.f32 %v5914, 1.442695
        %v5947 = vpow.pop %v5946
        %v5948 = vmul.f32 %v5915, 1.442695
        %v5949 = vpow.pop %v5948
        %v5950 = vmul.f32 %v5916, 1.442695
        %v5951 = vpow.pop %v5950
        %v5952 = vmul.f32 %v5917, 1.442695
        %v5953 = vpow.pop %v5952
        %v5954 = vmul.f32 %v5918, 1.442695
        %v5955 = vpow.pop %v5954
        %v5956 = vmul.f32 %v5919, 1.442695
        %v5957 = vpow.pop %v5956
        %v5958 = vmul.f32 %v5920, 1.442695
        %v5959 = vpow.pop %v5958
        %v5960 = vmul.f32 %v5921, 1.442695
        %v5961 = vpow.pop %v5960
        %v5962 = vmul.f32 %v5922, 1.442695
        %v5963 = vpow.pop %v5962
        %v5964 = vmul.f32 %v5923, 1.442695
        %v5965 = vpow.pop %v5964
        %v5966 = vmul.f32 %v5924, 1.442695
        %v5967 = vpow.pop %v5966
        %v5968 = vmul.f32 %v5925, 1.442695
        %v5969 = vpow.pop %v5968
        %v5970 = vmul.f32 %v5926, 1.442695
        %v5971 = vpow.pop %v5970
        %v5972 = vmul.f32 %v5927, 1.442695
        %v5973 = vpow.pop %v5972
        %v5974 = vmul.f32 %v5928, 1.442695
        %v5975 = vpow.pop %v5974
        %v5976 = vmul.f32 %v5929, 1.442695
        %v5977 = vpow.pop %v5976
        %v5978 = vmul.f32 %v5930, 1.442695
        %v5979 = vpow.pop %v5978
        %v5980 = vmul.f32 %v5931, 1.442695
        %v5981 = vpow.pop %v5980
        %v5982 = vmul.f32 %v5932, 1.442695
        %v5983 = vpow.pop %v5982
        %v5984 = vmul.f32 %v5933, 1.442695
        %v5985 = vpow.pop %v5984
        %v5986 = vmul.f32 %v5934, 1.442695
        %v5987 = vpow.pop %v5986
        %v5988 = vmul.f32 %v5935, 1.442695
        %v5989 = vpow.pop %v5988
        %v5990 = vmul.f32 %v5936, 1.442695
        %v5991 = vpow.pop %v5990
        %v5992 = vmul.f32 %v5937, 1.442695
        %v5993 = vpow.pop %v5992
        %v5994 = vmul.f32 %v5938, 1.442695
        %v5995 = vpow.pop %v5994
        %v5996 = vmul.f32 %v5939, 1.442695
        %v5997 = vpow.pop %v5996
        %v5998 = vmul.f32 %v5940, 1.442695
        %v5999 = vpow.pop %v5998
        %v6000 = vmul.f32 %v5941, 1.442695
        %v6001 = vpow.pop %v6000
        %v6002 = vmul.f32 %v5942, 1.442695
        %v6003 = vpow.pop %v6002
        %v6004 = vmul.f32 %v5943, 1.442695
        %v6005 = vpow.pop %v6004
        %v6006 = vmul.f32 %v5944, 1.442695
        %v6007 = vpow.pop %v6006
        %v6008 = vmul.f32 %v5945, 1.442695
        %v6009 = vpow.pop %v6008
        %v6010 = vadd.f32 %v5947, 1.0
        %v6011 = vadd.f32 %v5949, 1.0
        %v6012 = vadd.f32 %v5951, 1.0
        %v6013 = vadd.f32 %v5953, 1.0
        %v6014 = vadd.f32 %v5955, 1.0
        %v6015 = vadd.f32 %v5957, 1.0
        %v6016 = vadd.f32 %v5959, 1.0
        %v6017 = vadd.f32 %v5961, 1.0
        %v6018 = vadd.f32 %v5963, 1.0
        %v6019 = vadd.f32 %v5965, 1.0
        %v6020 = vadd.f32 %v5967, 1.0
        %v6021 = vadd.f32 %v5969, 1.0
        %v6022 = vadd.f32 %v5971, 1.0
        %v6023 = vadd.f32 %v5973, 1.0
        %v6024 = vadd.f32 %v5975, 1.0
        %v6025 = vadd.f32 %v5977, 1.0
        %v6026 = vadd.f32 %v5979, 1.0
        %v6027 = vadd.f32 %v5981, 1.0
        %v6028 = vadd.f32 %v5983, 1.0
        %v6029 = vadd.f32 %v5985, 1.0
        %v6030 = vadd.f32 %v5987, 1.0
        %v6031 = vadd.f32 %v5989, 1.0
        %v6032 = vadd.f32 %v5991, 1.0
        %v6033 = vadd.f32 %v5993, 1.0
        %v6034 = vadd.f32 %v5995, 1.0
        %v6035 = vadd.f32 %v5997, 1.0
        %v6036 = vadd.f32 %v5999, 1.0
        %v6037 = vadd.f32 %v6001, 1.0
        %v6038 = vadd.f32 %v6003, 1.0
        %v6039 = vadd.f32 %v6005, 1.0
        %v6040 = vadd.f32 %v6007, 1.0
        %v6041 = vadd.f32 %v6009, 1.0
        %v6042 = vrcp.pop %v6010
        %v6043 = vrcp.pop %v6011
        %v6044 = vrcp.pop %v6012
        %v6045 = vrcp.pop %v6013
        %v6046 = vrcp.pop %v6014
        %v6047 = vrcp.pop %v6015
        %v6048 = vrcp.pop %v6016
        %v6049 = vrcp.pop %v6017
        %v6050 = vrcp.pop %v6018
        %v6051 = vrcp.pop %v6019
        %v6052 = vrcp.pop %v6020
        %v6053 = vrcp.pop %v6021
        %v6054 = vrcp.pop %v6022
        %v6055 = vrcp.pop %v6023
        %v6056 = vrcp.pop %v6024
        %v6057 = vrcp.pop %v6025
        %v6058 = vrcp.pop %v6026
        %v6059 = vrcp.pop %v6027
        %v6060 = vrcp.pop %v6028
        %v6061 = vrcp.pop %v6029
        %v6062 = vrcp.pop %v6030
        %v6063 = vrcp.pop %v6031
        %v6064 = vrcp.pop %v6032
        %v6065 = vrcp.pop %v6033
        %v6066 = vrcp.pop %v6034
        %v6067 = vrcp.pop %v6035
        %v6068 = vrcp.pop %v6036
        %v6069 = vrcp.pop %v6037
        %v6070 = vrcp.pop %v6038
        %v6071 = vrcp.pop %v6039
        %v6072 = vrcp.pop %v6040
        %v6073 = vrcp.pop %v6041
        %v6074 = vmul.f32 %v5882, %v6042
        %v6075 = vmul.f32 %v5883, %v6043
        %v6076 = vmul.f32 %v5884, %v6044
        %v6077 = vmul.f32 %v5885, %v6045
        %v6078 = vmul.f32 %v5886, %v6046
        %v6079 = vmul.f32 %v5887, %v6047
        %v6080 = vmul.f32 %v5888, %v6048
        %v6081 = vmul.f32 %v5889, %v6049
        %v6082 = vmul.f32 %v5890, %v6050
        %v6083 = vmul.f32 %v5891, %v6051
        %v6084 = vmul.f32 %v5892, %v6052
        %v6085 = vmul.f32 %v5893, %v6053
        %v6086 = vmul.f32 %v5894, %v6054
        %v6087 = vmul.f32 %v5895, %v6055
        %v6088 = vmul.f32 %v5896, %v6056
        %v6089 = vmul.f32 %v5897, %v6057
        %v6090 = vmul.f32 %v5898, %v6058
        %v6091 = vmul.f32 %v5899, %v6059
        %v6092 = vmul.f32 %v5900, %v6060
        %v6093 = vmul.f32 %v5901, %v6061
        %v6094 = vmul.f32 %v5902, %v6062
        %v6095 = vmul.f32 %v5903, %v6063
        %v6096 = vmul.f32 %v5904, %v6064
        %v6097 = vmul.f32 %v5905, %v6065
        %v6098 = vmul.f32 %v5906, %v6066
        %v6099 = vmul.f32 %v5907, %v6067
        %v6100 = vmul.f32 %v5908, %v6068
        %v6101 = vmul.f32 %v5909, %v6069
        %v6102 = vmul.f32 %v5910, %v6070
        %v6103 = vmul.f32 %v5911, %v6071
        %v6104 = vmul.f32 %v5912, %v6072
        %v6105 = vmul.f32 %v5913, %v6073
        %v6106 = vpack.c.bf16 %v6075, %v6074
        %v6107 = vpack.c.bf16 %v6077, %v6076
        %v6108 = vpack.c.bf16 %v6079, %v6078
        %v6109 = vpack.c.bf16 %v6081, %v6080
        %v6110 = vpack.c.bf16 %v6083, %v6082
        %v6111 = vpack.c.bf16 %v6085, %v6084
        %v6112 = vpack.c.bf16 %v6087, %v6086
        %v6113 = vpack.c.bf16 %v6089, %v6088
        %v6114 = vpack.c.bf16 %v6091, %v6090
        %v6115 = vpack.c.bf16 %v6093, %v6092
        %v6116 = vpack.c.bf16 %v6095, %v6094
        %v6117 = vpack.c.bf16 %v6097, %v6096
        %v6118 = vpack.c.bf16 %v6099, %v6098
        %v6119 = vpack.c.bf16 %v6101, %v6100
        %v6120 = vpack.c.bf16 %v6103, %v6102
        %v6121 = vpack.c.bf16 %v6105, %v6104
        %v6138 = vunpack.c.l.b16 %v6106
        %v6139 = vunpack.c.h.b16 %v6106
        %v6140 = vunpack.c.l.b16 %v6107
        %v6141 = vunpack.c.h.b16 %v6107
        %v6142 = vunpack.c.l.b16 %v6108
        %v6143 = vunpack.c.h.b16 %v6108
        %v6144 = vunpack.c.l.b16 %v6109
        %v6145 = vunpack.c.h.b16 %v6109
        %v6146 = vunpack.c.l.b16 %v6110
        %v6147 = vunpack.c.h.b16 %v6110
        %v6148 = vunpack.c.l.b16 %v6111
        %v6149 = vunpack.c.h.b16 %v6111
        %v6150 = vunpack.c.l.b16 %v6112
        %v6151 = vunpack.c.h.b16 %v6112
        %v6152 = vunpack.c.l.b16 %v6113
        %v6153 = vunpack.c.h.b16 %v6113
        %v6154 = vunpack.c.l.b16 %v6114
        %v6155 = vunpack.c.h.b16 %v6114
        %v6156 = vunpack.c.l.b16 %v6115
        %v6157 = vunpack.c.h.b16 %v6115
        %v6158 = vunpack.c.l.b16 %v6116
        %v6159 = vunpack.c.h.b16 %v6116
        %v6160 = vunpack.c.l.b16 %v6117
        %v6161 = vunpack.c.h.b16 %v6117
        %v6162 = vunpack.c.l.b16 %v6118
        %v6163 = vunpack.c.h.b16 %v6118
        %v6164 = vunpack.c.l.b16 %v6119
        %v6165 = vunpack.c.h.b16 %v6119
        %v6166 = vunpack.c.l.b16 %v6120
        %v6167 = vunpack.c.h.b16 %v6120
        %v6168 = vunpack.c.l.b16 %v6121
        %v6169 = vunpack.c.h.b16 %v6121
        %v6170 = vpack.c.b16 %v6138, %v6138
        %v6171 = vpack.c.b16 %v6139, %v6139
        %v6172 = vpack.c.b16 %v6140, %v6140
        %v6173 = vpack.c.b16 %v6141, %v6141
        %v6174 = vpack.c.b16 %v6142, %v6142
        %v6175 = vpack.c.b16 %v6143, %v6143
        %v6176 = vpack.c.b16 %v6144, %v6144
        %v6177 = vpack.c.b16 %v6145, %v6145
        %v6178 = vpack.c.b16 %v6146, %v6146
        %v6179 = vpack.c.b16 %v6147, %v6147
        %v6180 = vpack.c.b16 %v6148, %v6148
        %v6181 = vpack.c.b16 %v6149, %v6149
        %v6182 = vpack.c.b16 %v6150, %v6150
        %v6183 = vpack.c.b16 %v6151, %v6151
        %v6184 = vpack.c.b16 %v6152, %v6152
        %v6185 = vpack.c.b16 %v6153, %v6153
        %v6186 = vpack.c.b16 %v6154, %v6154
        %v6187 = vpack.c.b16 %v6155, %v6155
        %v6188 = vpack.c.b16 %v6156, %v6156
        %v6189 = vpack.c.b16 %v6157, %v6157
        %v6190 = vpack.c.b16 %v6158, %v6158
        %v6191 = vpack.c.b16 %v6159, %v6159
        %v6192 = vpack.c.b16 %v6160, %v6160
        %v6193 = vpack.c.b16 %v6161, %v6161
        %v6194 = vpack.c.b16 %v6162, %v6162
        %v6195 = vpack.c.b16 %v6163, %v6163
        %v6196 = vpack.c.b16 %v6164, %v6164
        %v6197 = vpack.c.b16 %v6165, %v6165
        %v6198 = vpack.c.b16 %v6166, %v6166
        %v6199 = vpack.c.b16 %v6167, %v6167
        %v6200 = vpack.c.b16 %v6168, %v6168
        %v6201 = vpack.c.b16 %v6169, %v6169
        %6234 = vst [vmem:[%s303] sm:$0xf] %v6170
        %6235 = vst [vmem:[%s303 + $0x4] sm:$0xf] %v6171
        %6236 = vst [vmem:[%s303 + $0x8] sm:$0xf] %v6172
        %6237 = vst [vmem:[%s303 + $0xc] sm:$0xf] %v6173
        %6238 = vst [vmem:[%s303 + $0x10] sm:$0xf] %v6174
        %6239 = vst [vmem:[%s303 + $0x14] sm:$0xf] %v6175
        %6240 = vst [vmem:[%s303 + $0x18] sm:$0xf] %v6176
        %6241 = vst [vmem:[%s303 + $0x1c] sm:$0xf] %v6177
        %6242 = vst [vmem:[%s303 + $0x20] sm:$0xf] %v6178
        %6243 = vst [vmem:[%s303 + $0x24] sm:$0xf] %v6179
        %6244 = vst [vmem:[%s303 + $0x28] sm:$0xf] %v6180
        %6245 = vst [vmem:[%s303 + $0x2c] sm:$0xf] %v6181
        %6246 = vst [vmem:[%s303 + $0x30] sm:$0xf] %v6182
        %6247 = vst [vmem:[%s303 + $0x34] sm:$0xf] %v6183
        %6248 = vst [vmem:[%s303 + $0x38] sm:$0xf] %v6184
        %6249 = vst [vmem:[%s303 + $0x3c] sm:$0xf] %v6185
        %6250 = vst [vmem:[%s303 + $0x40] sm:$0xf] %v6186
        %6251 = vst [vmem:[%s303 + $0x44] sm:$0xf] %v6187
        %6252 = vst [vmem:[%s303 + $0x48] sm:$0xf] %v6188
        %6253 = vst [vmem:[%s303 + $0x4c] sm:$0xf] %v6189
        %6254 = vst [vmem:[%s303 + $0x50] sm:$0xf] %v6190
        %6255 = vst [vmem:[%s303 + $0x54] sm:$0xf] %v6191
        %6256 = vst [vmem:[%s303 + $0x58] sm:$0xf] %v6192
        %6257 = vst [vmem:[%s303 + $0x5c] sm:$0xf] %v6193
        %6258 = vst [vmem:[%s303 + $0x60] sm:$0xf] %v6194
        %6259 = vst [vmem:[%s303 + $0x64] sm:$0xf] %v6195
        %6260 = vst [vmem:[%s303 + $0x68] sm:$0xf] %v6196
        %6261 = vst [vmem:[%s303 + $0x6c] sm:$0xf] %v6197
        %6262 = vst [vmem:[%s303 + $0x70] sm:$0xf] %v6198
        %6263 = vst [vmem:[%s303 + $0x74] sm:$0xf] %v6199
        %6264 = vst [vmem:[%s303 + $0x78] sm:$0xf] %v6200
        %6265 = vst [vmem:[%s303 + $0x7c] sm:$0xf] %v6201
        %s6266 = sand.u32 %s161, 1
        %s6267 = scalar_lea.sflag [#allocation4], %s6266
        %s6268 = sand.u32 %s161, 1
        %s6269 = smul.addr %s6268, 128
        %s6270 = scalar_lea.vmem [#allocation3], %s6269
        // Predicated region
        $region37: #{tpu_custom_call.1} parent=35 // pred_check
          %p6271 = pneg %p171
        $region38: #{tpu_custom_call.1} parent=35 // pred_check_branch
          %6273 = sbr.rel (%p6271) target = $region40
        $region39: #{tpu_custom_call.1} parent=35 // pred_region
          %s6274 = smul.u32 16, %s24
          %s6276 = ssub.s32 2048, 2048
          %6277 = vsyncadd %s6267, %s6276
          %s6278 = smul.addr %s6274, 2
          %s6279 = sadd.s32 %s25, %s6278
          %s6280 = smul.addr %s23, 32
          %s6281 = sadd.s32 %s6279, %s6280
          %s6282 = smul.addr %s6281, 64
          %s6283 = scalar_lea.hbm %s4, %s6282
          %s6284 = sshll.u32 %s6270, 4
          %s6285 = int_to_ptr.vmem [resolvable:$true] %s6284
          %6290 = dma.vmem_to_hbm [thread:$0]  %s6285, 2048, %s6283, %s6267, 64, 64, 4
        $region40: #{tpu_custom_call.1} parent=35 // pred_fallthru
          _
      $region36: #{tpu_custom_call.1} parent=5 // pred_fallthru
        _
      %p6291 = scmp.le.s32.totalorder 2, %s13
      // Predicated region
      $region41: #{tpu_custom_call.1} parent=5 // pred_check
        %p6292 = pneg %p6291
      $region42: #{tpu_custom_call.1} parent=5 // pred_check_branch
        %6294 = sbr.rel (%p6292) target = $region44
      $region43: #{tpu_custom_call.1} parent=5 // pred_region
        %s6295 = ssub.s32 %s13, 2
        // Predicated region
        $region45: #{tpu_custom_call.1} parent=43 // pred_check
          %p6296 = pneg %p177
        $region46: #{tpu_custom_call.1} parent=43 // pred_check_branch
          %6298 = sbr.rel (%p6296) target = $region48
        $region47: #{tpu_custom_call.1} parent=43 // pred_region
          %s6299 = sand.u32 %s162, 1
          %s6300 = scalar_lea.sflag [#allocation4], %s6299
          %s6301 = sand.u32 %s162, 1
          %s6302 = smul.addr %s6301, 128
          %s6303 = scalar_lea.vmem [#allocation3], %s6302
          %6304 = dma.done %s6300, 2048
        $region48: #{tpu_custom_call.1} parent=43 // pred_fallthru
          _
      $region44: #{tpu_custom_call.1} parent=5 // pred_fallthru
        _
    $region6: #{tpu_custom_call.1} parent=1 // loop_footer
      %s17 = sadd.s32 1, %s13
    $region7: #{tpu_custom_call.1} parent=1 // loop_footer_branch
      %12 = sbr.rel target = $region3
    $region8: #{tpu_custom_call.1} parent=1 // loop_exit
      _
    %6305 = vsyncpa [#allocation4], 1
    %s6306 = scalar_lea.sflag [#allocation4], 1
    %6307 = vsyncpa %s6306, 1

</llo_original>
